<compile_context>
chip_gen: v7x
topology: tpu7x:2x2x1
jax: 0.10.0
libtpu: 0.0.40
codegen_flags: <defaults>
</compile_context>

<pallas_src>
import functools

import jax
import jax.numpy as jnp
from jax.experimental import pallas as pl
from jax.experimental.pallas import tpu as pltpu


# ---------------------------------------------------------------------------
# VMEM limit (generation aware, with a safe fallback)
# ---------------------------------------------------------------------------

def _pick_vmem_limit():
    try:
        cap = int(pltpu.get_tpu_info().vmem_capacity_bytes)
        return min((cap * 3) // 4, 64 * 1024 * 1024)
    except Exception:
        return 32 * 1024 * 1024


_VMEM_LIMIT = _pick_vmem_limit()


def _pick_co_tile(cout):
    """Largest output-channel tile <= 128 that evenly divides Cout."""
    if cout <= 128:
        return cout
    for cand in (128, 64, 32, 16, 8):
        if cout % cand == 0:
            return cand
    return cout


# ---------------------------------------------------------------------------
# The single generic Pallas kernel
# ---------------------------------------------------------------------------

def _tap_conv_kernel(x_ref, w_ref, b_ref, o_ref, *, taps, n_phase, L, Wg, Wo,
                     n_valid, norm, act, has_bias):
    """Fused (conv as shifted GEMMs) + bias + InstanceNorm + activation.

    x_ref : (1, P, Cin, Lin)        bf16  flattened padded input planes (one sample)
    w_ref : (T, co_tile, Cin)       bf16  per-tap weight matrices (Cout block)
    b_ref : (co_tile, 1)            f32   bias (zeros when the layer has none)
    o_ref : (1, co_tile, n_phase*L) f32   channel-major output.  Lanes with
                                          (lane % Wg) >= Wo are "garbage" columns:
                                          excluded from the IN statistics and
                                          sliced off by the wrapper.
    """
    cout = w_ref.shape[1]
    accs = [jnp.zeros((cout, L), jnp.float32) for _ in range(n_phase)]

    # T small MXU GEMMs over lane-shifted views of the input (im2col fused in).
    for t, (plane, off, phase) in enumerate(taps):
        xs = x_ref[0, plane, :, off:off + L]                  # (Cin, L) bf16
        accs[phase] = accs[phase] + jnp.dot(
            w_ref[t], xs, preferred_element_type=jnp.float32)

    if has_bias:
        accs = [a + b_ref[...] for a in accs]                 # (Cout,1) bcast

    if norm:
        col = jax.lax.broadcasted_iota(jnp.int32, (1, L), 1) % Wg
        valid = col < Wo                                      # (1, L)
        inv_n = 1.0 / float(n_valid)
        s = jnp.zeros((cout, 1), jnp.float32)
        for a in accs:
            s = s + jnp.sum(jnp.where(valid, a, 0.0), axis=1, keepdims=True)
        mean = s * inv_n
        v = jnp.zeros((cout, 1), jnp.float32)
        for a in accs:
            d = a - mean
            v = v + jnp.sum(jnp.where(valid, d * d, 0.0), axis=1, keepdims=True)
        inv_std = jax.lax.rsqrt(v * inv_n + 1e-5)
        accs = [(a - mean) * inv_std for a in accs]

    if act == "relu":
        accs = [jnp.maximum(a, 0.0) for a in accs]
    elif act == "tanh":
        accs = [jnp.tanh(a) for a in accs]

    for ph in range(n_phase):
        o_ref[0, :, ph * L:(ph + 1) * L] = accs[ph]


def _tap_conv(x_flat, w_taps, bias, taps, *, n_phase, L, Wg, Wo, n_valid,
              norm, act, has_bias):
    """x_flat: (N,P,Cin,Lin) bf16, w_taps: (T,Cout,Cin) bf16, bias: (Cout,1) f32."""
    N, P, Cin, Lin = x_flat.shape
    T, Cout, _ = w_taps.shape
    co_tile = _pick_co_tile(Cout)
    n_co = Cout // co_tile

    kernel = functools.partial(
        _tap_conv_kernel, taps=tuple(taps), n_phase=n_phase, L=L, Wg=Wg, Wo=Wo,
        n_valid=n_valid, norm=norm, act=act, has_bias=has_bias)

    cost = pl.CostEstimate(
        flops=2 * N * T * Cout * Cin * L,
        transcendentals=(N * Cout * n_phase * L) if act == "tanh" else 0,
        bytes_accessed=(N * P * Cin * Lin * 2 + N * T * Cout * Cin * 2
                        + N * Cout * n_phase * L * 4),
    )

    return pl.pallas_call(
        kernel,
        out_shape=jax.ShapeDtypeStruct((N, Cout, n_phase * L), jnp.float32),
        grid=(N, n_co),
        in_specs=[
            # Input block index does not depend on `co` (inner axis) -> it is
            # DMA'd once per sample, not once per Cout block.
            pl.BlockSpec((1, P, Cin, Lin), lambda n, co: (n, 0, 0, 0)),
            pl.BlockSpec((T, co_tile, Cin), lambda n, co: (0, co, 0)),
            pl.BlockSpec((co_tile, 1), lambda n, co: (co, 0)),
        ],
        out_specs=pl.BlockSpec((1, co_tile, n_phase * L),
                               lambda n, co: (n, co, 0)),
        compiler_params=pltpu.CompilerParams(
            dimension_semantics=("parallel", "parallel"),
            vmem_limit_bytes=_VMEM_LIMIT),
        cost_estimate=cost,
    )(x_flat, w_taps, bias)


# ---------------------------------------------------------------------------
# Layer wrappers (all HBM-side work is just padding / parity split / slicing)
# ---------------------------------------------------------------------------

def _flatten_planes(planes, need):
    """planes: (N,P,Cin,Hq,Wq) -> (N,P,Cin,max(Hq*Wq,need)) bf16, zero tail."""
    N, P, Cin, Hq, Wq = planes.shape
    flat = planes.reshape(N, P, Cin, Hq * Wq)
    if need > Hq * Wq:
        flat = jnp.pad(flat, ((0, 0), (0, 0), (0, 0), (0, need - Hq * Wq)))
    return flat.astype(jnp.bfloat16)


def conv_in(x, w, bias=None, *, stride=1, padding=0, pad_mode="constant",
            norm=True, act="relu"):
    """Conv2d (w: (Cout,Cin,kh,kw) torch layout) fused with InstanceNorm/act."""
    N, Cin, H, W = x.shape
    Cout, _, kh, kw = w.shape
    Ho = (H + 2 * padding - kh) // stride + 1
    Wo = (W + 2 * padding - kw) // stride + 1

    xp = x
    if padding > 0:
        xp = jnp.pad(x, ((0, 0), (0, 0), (padding, padding), (padding, padding)),
                     mode=pad_mode)

    if stride == 1:
        Wg = xp.shape[3]
        planes = xp[:, None]                                     # (N,1,Cin,Hp,Wp)
        taps = tuple((0, di * Wg + dj, 0)
                     for di in range(kh) for dj in range(kw))
    elif stride == 2:
        hp, wp = xp.shape[2], xp.shape[3]
        xp = jnp.pad(xp, ((0, 0), (0, 0), (0, hp % 2), (0, wp % 2)))  # evenize
        Wg = xp.shape[3] // 2
        planes = jnp.stack([xp[:, :, r::2, c::2]
                            for r in range(2) for c in range(2)], axis=1)
        taps = tuple(((di % 2) * 2 + (dj % 2), (di // 2) * Wg + (dj // 2), 0)
                     for di in range(kh) for dj in range(kw))
    else:
        raise NotImplementedError("stride must be 1 or 2")

    L = Ho * Wg
    need = max(off for _, off, _ in taps) + L
    x_flat = _flatten_planes(planes, need)

    w_taps = jnp.stack([w[:, :, di, dj] for di in range(kh) for dj in range(kw)],
                       axis=0).astype(jnp.bfloat16)               # (T,Cout,Cin)
    has_bias = bias is not None
    b = bias if has_bias else jnp.zeros((Cout,), jnp.float32)
    b = b.reshape(Cout, 1).astype(jnp.float32)

    raw = _tap_conv(x_flat, w_taps, b, taps, n_phase=1, L=L, Wg=Wg, Wo=Wo,
                    n_valid=Ho * Wo, norm=norm, act=act, has_bias=has_bias)
    return raw.reshape(N, Cout, Ho, Wg)[:, :, :, :Wo]


def dconv_in(x, w, *, act="relu"):
    """ConvTranspose2d(Cin,Cout,3,stride=2,padding=1,output_padding=1,bias=False)
    (w: (Cin,Cout,3,3) torch layout), fused with InstanceNorm + activation, via
    the 4 output-parity phase sub-convolutions."""
    N, Cin, H, W = x.shape
    Cout = w.shape[1]
    wf = jnp.flip(w, axis=(2, 3)).transpose(1, 0, 2, 3)           # (Cout,Cin,3,3)

    xp = jnp.pad(x, ((0, 0), (0, 0), (0, 1), (0, 1)))             # zero bot/right
    Wg = W + 1
    # (phase = 2*row_parity + col_parity, lane offset, (a,b) into flipped kernel)
    tap_defs = (
        (0, 0, (1, 1)),
        (1, 0, (1, 0)), (1, 1, (1, 2)),
        (2, 0, (0, 1)), (2, Wg, (2, 1)),
        (3, 0, (0, 0)), (3, 1, (0, 2)), (3, Wg, (2, 0)), (3, Wg + 1, (2, 2)),
    )
    taps = tuple((0, off, ph) for ph, off, _ in tap_defs)
    w_taps = jnp.stack([wf[:, :, a, b] for _, _, (a, b) in tap_defs],
                       axis=0).astype(jnp.bfloat16)

    L = H * Wg
    need = max(off for _, off, _ in taps) + L
    x_flat = _flatten_planes(xp[:, None], need)
    b = jnp.zeros((Cout, 1), jnp.float32)

    raw = _tap_conv(x_flat, w_taps, b, taps, n_phase=4, L=L, Wg=Wg, Wo=W,
                    n_valid=4 * H * W, norm=True, act=act, has_bias=False)
    # phases ordered (row parity, col parity) -> interleave to (N,Cout,2H,2W)
    y = raw.reshape(N, Cout, 2, 2, H, Wg)[..., :W]
    y = y.transpose(0, 1, 4, 2, 5, 3).reshape(N, Cout, 2 * H, 2 * W)
    return y


# ---------------------------------------------------------------------------
# Generator parameters + forward
# ---------------------------------------------------------------------------

def init_params(key, dim):
    def nrm(k, shape, scale=0.05):
        return scale * jax.random.normal(k, shape, dtype=jnp.float32)

    keys = iter(jax.random.split(key, 64))
    p = {
        "c1_w": nrm(next(keys), (dim, 3, 7, 7)),
        "c2_w": nrm(next(keys), (2 * dim, dim, 3, 3)),
        "c3_w": nrm(next(keys), (4 * dim, 2 * dim, 3, 3)),
        "d1_w": nrm(next(keys), (4 * dim, 2 * dim, 3, 3)),   # ConvT: (Cin,Cout,kh,kw)
        "d2_w": nrm(next(keys), (2 * dim, dim, 3, 3)),
        "cl_w": nrm(next(keys), (3, dim, 7, 7)),
        "cl_b": nrm(next(keys), (3,)),
        "res": [],
    }
    for _ in range(9):
        p["res"].append({
            "w1": nrm(next(keys), (4 * dim, 4 * dim, 3, 3)),   # bias=False
            "w2": nrm(next(keys), (4 * dim, 4 * dim, 3, 3)),   # bias=True
            "b2": nrm(next(keys), (4 * dim,)),
        })
    return p


def generator_forward(params, x):
    # ReflectionPad(3) + Conv(3->dim,7,s1,no bias) + IN + ReLU  (fused)
    h = conv_in(x, params["c1_w"], stride=1, padding=3, pad_mode="reflect",
                norm=True, act="relu")
    # Conv(dim->2dim,3,s2,p1) + IN + ReLU  (fused)
    h = conv_in(h, params["c2_w"], stride=2, padding=1, norm=True, act="relu")
    # Conv(2dim->4dim,3,s2,p1) + IN + ReLU  (fused)
    h = conv_in(h, params["c3_w"], stride=2, padding=1, norm=True, act="relu")
    # 9 residual blocks
    for blk in params["res"]:
        r = conv_in(h, blk["w1"], stride=1, padding=1, pad_mode="reflect",
                    norm=True, act="relu")
        r = conv_in(r, blk["w2"], bias=blk["b2"], stride=1, padding=1,
                    pad_mode="reflect", norm=True, act="none")
        h = h + r
    # ConvTranspose(4dim->2dim) + IN + ReLU  (fused, 4-phase)
    h = dconv_in(h, params["d1_w"], act="relu")
    # ConvTranspose(2dim->dim) + IN + ReLU  (fused, 4-phase)
    h = dconv_in(h, params["d2_w"], act="relu")
    # ReflectionPad(3) + Conv(dim->3,7,s1,bias) + Tanh  (fused, no norm)
    h = conv_in(h, params["cl_w"], bias=params["cl_b"], stride=1, padding=3,
                pad_mode="reflect", norm=False, act="tanh")
    return h


# ---------------------------------------------------------------------------
# Pure-JAX reference (same bf16 operand casts) for a numerical self-check
# ---------------------------------------------------------------------------

def _ref_conv(x, w, bias=None, stride=1, padding=0, pad_mode="constant"):
    if padding > 0:
        x = jnp.pad(x, ((0, 0), (0, 0), (padding, padding), (padding, padding)),
                    mode=pad_mode)
    y = jax.lax.conv_general_dilated(
        x.astype(jnp.bfloat16), w.astype(jnp.bfloat16),
        window_strides=(stride, stride), padding="VALID",
        dimension_numbers=("NCHW", "OIHW", "NCHW"),
        preferred_element_type=jnp.float32)
    if bias is not None:
        y = y + bias.reshape(1, -1, 1, 1)
    return y


def _ref_dconv(x, w):
    wf = jnp.flip(w, axis=(2, 3)).transpose(1, 0, 2, 3)
    return jax.lax.conv_general_dilated(
        x.astype(jnp.bfloat16), wf.astype(jnp.bfloat16),
        window_strides=(1, 1), padding=((1, 2), (1, 2)), lhs_dilation=(2, 2),
        dimension_numbers=("NCHW", "OIHW", "NCHW"),
        preferred_element_type=jnp.float32)


def _ref_in(x, act="relu"):
    mean = x.mean(axis=(2, 3), keepdims=True)
    var = ((x - mean) ** 2).mean(axis=(2, 3), keepdims=True)
    y = (x - mean) * jax.lax.rsqrt(var + 1e-5)
    if act == "relu":
        y = jnp.maximum(y, 0.0)
    return y


def reference_forward(params, x):
    h = _ref_in(_ref_conv(x, params["c1_w"], padding=3, pad_mode="reflect"))
    h = _ref_in(_ref_conv(h, params["c2_w"], stride=2, padding=1))
    h = _ref_in(_ref_conv(h, params["c3_w"], stride=2, padding=1))
    for blk in params["res"]:
        r = _ref_in(_ref_conv(h, blk["w1"], padding=1, pad_mode="reflect"))
        r = _ref_in(_ref_conv(r, blk["w2"], bias=blk["b2"], padding=1,
                              pad_mode="reflect"), act="none")
        h = h + r
    h = _ref_in(_ref_dconv(h, params["d1_w"]))
    h = _ref_in(_ref_dconv(h, params["d2_w"]))
    h = jnp.tanh(_ref_conv(h, params["cl_w"], bias=params["cl_b"],
                           padding=3, pad_mode="reflect"))
    return h


# ---------------------------------------------------------------------------
# main
# ---------------------------------------------------------------------------

if __name__ == "__main__":
    dim = 8          # small test width (module default is 64; architecture identical)
    key = jax.random.PRNGKey(0)
    k_par, k_in = jax.random.split(key)
    params = init_params(k_par, dim)
    x = jax.random.normal(k_in, (2, 3, 16, 16), dtype=jnp.float32)

    # --- extra check: exercise the multi-Cout-block (channel-tiled) path ------
    k1, k2 = jax.random.split(jax.random.PRNGKey(1))
    wt = 0.05 * jax.random.normal(k1, (256, 8, 3, 3), dtype=jnp.float32)
    xt = jax.random.normal(k2, (1, 8, 8, 8), dtype=jnp.float32)
    yt = conv_in(xt, wt, stride=1, padding=1, norm=True, act="relu")
    jax.block_until_ready(yt)
    yt_ref = _ref_in(_ref_conv(xt, wt, padding=1))
    err_t = float(jnp.max(jnp.abs(yt - yt_ref)))
    assert yt.shape == (1, 256, 8, 8)
    assert err_t < 3e-2, f"co-split mismatch vs reference: {err_t}"

    # --- full Generator forward ----------------------------------------------
    fwd = jax.jit(generator_forward)
    y = fwd(params, x)
    jax.block_until_ready(y)

    y_ref = jax.jit(reference_forward)(params, x)
    err = float(jnp.max(jnp.abs(y - y_ref)))

    assert y.shape == (2, 3, 16, 16)
    assert bool(jnp.all(jnp.isfinite(y)))
    assert bool(jnp.all(jnp.abs(y) <= 1.0))
    assert err < 3e-2, f"mismatch vs reference: {err}"
    print("KERNEL_OK")
</pallas_src>

<mosaic_0001>
module attributes {stable_mosaic.version = 11 : i64} {
  func.func @_tap_conv_kernel(%arg0: i32, %arg1: i32, %arg2: memref<1x1x8x102xbf16, #tpu.memory_space<vmem>>, %arg3: memref<9x128x8xbf16, #tpu.memory_space<vmem>>, %arg4: memref<128x1xf32, #tpu.memory_space<vmem>>, %arg5: memref<1x128x80xf32, #tpu.memory_space<vmem>>) attributes {dimension_semantics = [#tpu.dimension_semantics<parallel>, #tpu.dimension_semantics<parallel>], iteration_bounds = array<i64: 1, 2>, scalar_prefetch = 0 : i64, scratch_operands = 0 : i64, tpu.core_type = #tpu.core_type<tc>, window_params = [{transform_indices = @transform_0, window_bounds = array<i64: 1, 1, 8, 102>}, {transform_indices = @transform_1, window_bounds = array<i64: 9, 128, 8>}, {transform_indices = @transform_2, window_bounds = array<i64: 128, 1>}, {transform_indices = @transform_3, window_bounds = array<i64: 1, 128, 80>}]} {
    %cst = arith.constant 0.000000e+00 : f32
    %0 = vector.broadcast %cst : f32 to vector<128x80xf32>
    %c0 = arith.constant 0 : index
    %c0_0 = arith.constant 0 : index
    %c0_1 = arith.constant 0 : index
    %c0_2 = arith.constant 0 : index
    %1 = vector.load %arg2[%c0, %c0_0, %c0_1, %c0_2] : memref<1x1x8x102xbf16, #tpu.memory_space<vmem>>, vector<1x1x8x80xbf16>
    %2 = vector.shape_cast %1 : vector<1x1x8x80xbf16> to vector<8x80xbf16>
    %c0_3 = arith.constant 0 : index
    %c0_4 = arith.constant 0 : index
    %c0_5 = arith.constant 0 : index
    %3 = vector.load %arg3[%c0_3, %c0_4, %c0_5] : memref<9x128x8xbf16, #tpu.memory_space<vmem>>, vector<1x128x8xbf16>
    %4 = vector.shape_cast %3 : vector<1x128x8xbf16> to vector<128x8xbf16>
    %cst_6 = arith.constant dense<0.000000e+00> : vector<128x80xf32>
    %5 = tpu.matmul %4, %2, %cst_6 {dimension_numbers = #tpu.dot_dimension_numbers<[1], [0], [0], [1], [0, 0, 1, 1], [], []>} : vector<128x8xbf16>, vector<8x80xbf16>, vector<128x80xf32> -> vector<128x80xf32>
    %6 = arith.addf %0, %5 : vector<128x80xf32>
    %c0_7 = arith.constant 0 : index
    %c0_8 = arith.constant 0 : index
    %c0_9 = arith.constant 0 : index
    %c1 = arith.constant 1 : index
    %7 = vector.load %arg2[%c0_7, %c0_8, %c0_9, %c1] : memref<1x1x8x102xbf16, #tpu.memory_space<vmem>>, vector<1x1x8x80xbf16>
    %8 = vector.shape_cast %7 : vector<1x1x8x80xbf16> to vector<8x80xbf16>
    %c1_10 = arith.constant 1 : index
    %c0_11 = arith.constant 0 : index
    %c0_12 = arith.constant 0 : index
    %9 = vector.load %arg3[%c1_10, %c0_11, %c0_12] : memref<9x128x8xbf16, #tpu.memory_space<vmem>>, vector<1x128x8xbf16>
    %10 = vector.shape_cast %9 : vector<1x128x8xbf16> to vector<128x8xbf16>
    %cst_13 = arith.constant dense<0.000000e+00> : vector<128x80xf32>
    %11 = tpu.matmul %10, %8, %cst_13 {dimension_numbers = #tpu.dot_dimension_numbers<[1], [0], [0], [1], [0, 0, 1, 1], [], []>} : vector<128x8xbf16>, vector<8x80xbf16>, vector<128x80xf32> -> vector<128x80xf32>
    %12 = arith.addf %6, %11 : vector<128x80xf32>
    %c0_14 = arith.constant 0 : index
    %c0_15 = arith.constant 0 : index
    %c0_16 = arith.constant 0 : index
    %c2 = arith.constant 2 : index
    %13 = vector.load %arg2[%c0_14, %c0_15, %c0_16, %c2] : memref<1x1x8x102xbf16, #tpu.memory_space<vmem>>, vector<1x1x8x80xbf16>
    %14 = vector.shape_cast %13 : vector<1x1x8x80xbf16> to vector<8x80xbf16>
    %c2_17 = arith.constant 2 : index
    %c0_18 = arith.constant 0 : index
    %c0_19 = arith.constant 0 : index
    %15 = vector.load %arg3[%c2_17, %c0_18, %c0_19] : memref<9x128x8xbf16, #tpu.memory_space<vmem>>, vector<1x128x8xbf16>
    %16 = vector.shape_cast %15 : vector<1x128x8xbf16> to vector<128x8xbf16>
    %cst_20 = arith.constant dense<0.000000e+00> : vector<128x80xf32>
    %17 = tpu.matmul %16, %14, %cst_20 {dimension_numbers = #tpu.dot_dimension_numbers<[1], [0], [0], [1], [0, 0, 1, 1], [], []>} : vector<128x8xbf16>, vector<8x80xbf16>, vector<128x80xf32> -> vector<128x80xf32>
    %18 = arith.addf %12, %17 : vector<128x80xf32>
    %c0_21 = arith.constant 0 : index
    %c0_22 = arith.constant 0 : index
    %c0_23 = arith.constant 0 : index
    %c10 = arith.constant 10 : index
    %19 = vector.load %arg2[%c0_21, %c0_22, %c0_23, %c10] : memref<1x1x8x102xbf16, #tpu.memory_space<vmem>>, vector<1x1x8x80xbf16>
    %20 = vector.shape_cast %19 : vector<1x1x8x80xbf16> to vector<8x80xbf16>
    %c3 = arith.constant 3 : index
    %c0_24 = arith.constant 0 : index
    %c0_25 = arith.constant 0 : index
    %21 = vector.load %arg3[%c3, %c0_24, %c0_25] : memref<9x128x8xbf16, #tpu.memory_space<vmem>>, vector<1x128x8xbf16>
    %22 = vector.shape_cast %21 : vector<1x128x8xbf16> to vector<128x8xbf16>
    %cst_26 = arith.constant dense<0.000000e+00> : vector<128x80xf32>
    %23 = tpu.matmul %22, %20, %cst_26 {dimension_numbers = #tpu.dot_dimension_numbers<[1], [0], [0], [1], [0, 0, 1, 1], [], []>} : vector<128x8xbf16>, vector<8x80xbf16>, vector<128x80xf32> -> vector<128x80xf32>
    %24 = arith.addf %18, %23 : vector<128x80xf32>
    %c0_27 = arith.constant 0 : index
    %c0_28 = arith.constant 0 : index
    %c0_29 = arith.constant 0 : index
    %c11 = arith.constant 11 : index
    %25 = vector.load %arg2[%c0_27, %c0_28, %c0_29, %c11] : memref<1x1x8x102xbf16, #tpu.memory_space<vmem>>, vector<1x1x8x80xbf16>
    %26 = vector.shape_cast %25 : vector<1x1x8x80xbf16> to vector<8x80xbf16>
    %c4 = arith.constant 4 : index
    %c0_30 = arith.constant 0 : index
    %c0_31 = arith.constant 0 : index
    %27 = vector.load %arg3[%c4, %c0_30, %c0_31] : memref<9x128x8xbf16, #tpu.memory_space<vmem>>, vector<1x128x8xbf16>
    %28 = vector.shape_cast %27 : vector<1x128x8xbf16> to vector<128x8xbf16>
    %cst_32 = arith.constant dense<0.000000e+00> : vector<128x80xf32>
    %29 = tpu.matmul %28, %26, %cst_32 {dimension_numbers = #tpu.dot_dimension_numbers<[1], [0], [0], [1], [0, 0, 1, 1], [], []>} : vector<128x8xbf16>, vector<8x80xbf16>, vector<128x80xf32> -> vector<128x80xf32>
    %30 = arith.addf %24, %29 : vector<128x80xf32>
    %c0_33 = arith.constant 0 : index
    %c0_34 = arith.constant 0 : index
    %c0_35 = arith.constant 0 : index
    %c12 = arith.constant 12 : index
    %31 = vector.load %arg2[%c0_33, %c0_34, %c0_35, %c12] : memref<1x1x8x102xbf16, #tpu.memory_space<vmem>>, vector<1x1x8x80xbf16>
    %32 = vector.shape_cast %31 : vector<1x1x8x80xbf16> to vector<8x80xbf16>
    %c5 = arith.constant 5 : index
    %c0_36 = arith.constant 0 : index
    %c0_37 = arith.constant 0 : index
    %33 = vector.load %arg3[%c5, %c0_36, %c0_37] : memref<9x128x8xbf16, #tpu.memory_space<vmem>>, vector<1x128x8xbf16>
    %34 = vector.shape_cast %33 : vector<1x128x8xbf16> to vector<128x8xbf16>
    %cst_38 = arith.constant dense<0.000000e+00> : vector<128x80xf32>
    %35 = tpu.matmul %34, %32, %cst_38 {dimension_numbers = #tpu.dot_dimension_numbers<[1], [0], [0], [1], [0, 0, 1, 1], [], []>} : vector<128x8xbf16>, vector<8x80xbf16>, vector<128x80xf32> -> vector<128x80xf32>
    %36 = arith.addf %30, %35 : vector<128x80xf32>
    %c0_39 = arith.constant 0 : index
    %c0_40 = arith.constant 0 : index
    %c0_41 = arith.constant 0 : index
    %c20 = arith.constant 20 : index
    %37 = vector.load %arg2[%c0_39, %c0_40, %c0_41, %c20] : memref<1x1x8x102xbf16, #tpu.memory_space<vmem>>, vector<1x1x8x80xbf16>
    %38 = vector.shape_cast %37 : vector<1x1x8x80xbf16> to vector<8x80xbf16>
    %c6 = arith.constant 6 : index
    %c0_42 = arith.constant 0 : index
    %c0_43 = arith.constant 0 : index
    %39 = vector.load %arg3[%c6, %c0_42, %c0_43] : memref<9x128x8xbf16, #tpu.memory_space<vmem>>, vector<1x128x8xbf16>
    %40 = vector.shape_cast %39 : vector<1x128x8xbf16> to vector<128x8xbf16>
    %cst_44 = arith.constant dense<0.000000e+00> : vector<128x80xf32>
    %41 = tpu.matmul %40, %38, %cst_44 {dimension_numbers = #tpu.dot_dimension_numbers<[1], [0], [0], [1], [0, 0, 1, 1], [], []>} : vector<128x8xbf16>, vector<8x80xbf16>, vector<128x80xf32> -> vector<128x80xf32>
    %42 = arith.addf %36, %41 : vector<128x80xf32>
    %c0_45 = arith.constant 0 : index
    %c0_46 = arith.constant 0 : index
    %c0_47 = arith.constant 0 : index
    %c21 = arith.constant 21 : index
    %43 = vector.load %arg2[%c0_45, %c0_46, %c0_47, %c21] : memref<1x1x8x102xbf16, #tpu.memory_space<vmem>>, vector<1x1x8x80xbf16>
    %44 = vector.shape_cast %43 : vector<1x1x8x80xbf16> to vector<8x80xbf16>
    %c7 = arith.constant 7 : index
    %c0_48 = arith.constant 0 : index
    %c0_49 = arith.constant 0 : index
    %45 = vector.load %arg3[%c7, %c0_48, %c0_49] : memref<9x128x8xbf16, #tpu.memory_space<vmem>>, vector<1x128x8xbf16>
    %46 = vector.shape_cast %45 : vector<1x128x8xbf16> to vector<128x8xbf16>
    %cst_50 = arith.constant dense<0.000000e+00> : vector<128x80xf32>
    %47 = tpu.matmul %46, %44, %cst_50 {dimension_numbers = #tpu.dot_dimension_numbers<[1], [0], [0], [1], [0, 0, 1, 1], [], []>} : vector<128x8xbf16>, vector<8x80xbf16>, vector<128x80xf32> -> vector<128x80xf32>
    %48 = arith.addf %42, %47 : vector<128x80xf32>
    %c0_51 = arith.constant 0 : index
    %c0_52 = arith.constant 0 : index
    %c0_53 = arith.constant 0 : index
    %c22 = arith.constant 22 : index
    %49 = vector.load %arg2[%c0_51, %c0_52, %c0_53, %c22] : memref<1x1x8x102xbf16, #tpu.memory_space<vmem>>, vector<1x1x8x80xbf16>
    %50 = vector.shape_cast %49 : vector<1x1x8x80xbf16> to vector<8x80xbf16>
    %c8 = arith.constant 8 : index
    %c0_54 = arith.constant 0 : index
    %c0_55 = arith.constant 0 : index
    %51 = vector.load %arg3[%c8, %c0_54, %c0_55] : memref<9x128x8xbf16, #tpu.memory_space<vmem>>, vector<1x128x8xbf16>
    %52 = vector.shape_cast %51 : vector<1x128x8xbf16> to vector<128x8xbf16>
    %cst_56 = arith.constant dense<0.000000e+00> : vector<128x80xf32>
    %53 = tpu.matmul %52, %50, %cst_56 {dimension_numbers = #tpu.dot_dimension_numbers<[1], [0], [0], [1], [0, 0, 1, 1], [], []>} : vector<128x8xbf16>, vector<8x80xbf16>, vector<128x80xf32> -> vector<128x80xf32>
    %54 = arith.addf %48, %53 : vector<128x80xf32>
    %55 = tpu.iota {dimensions = array<i32: 1>} : vector<1x80xi32>
    %c10_i32 = arith.constant 10 : i32
    %c0_i32 = arith.constant 0 : i32
    %56 = arith.cmpi eq, %c10_i32, %c0_i32 : i32
    %c1_i32 = arith.constant 1 : i32
    %57 = arith.select %56, %c1_i32, %c10_i32 : i32
    %58 = vector.broadcast %57 : i32 to vector<1x80xi32>
    %59 = arith.remsi %55, %58 : vector<1x80xi32>
    %c0_i32_57 = arith.constant 0 : i32
    %60 = vector.broadcast %c0_i32_57 : i32 to vector<1x80xi32>
    %61 = arith.cmpi ne, %59, %60 : vector<1x80xi32>
    %c0_i32_58 = arith.constant 0 : i32
    %62 = vector.broadcast %c0_i32_58 : i32 to vector<1x80xi32>
    %63 = arith.cmpi slt, %59, %62 : vector<1x80xi32>
    %c0_i32_59 = arith.constant 0 : i32
    %64 = arith.cmpi slt, %57, %c0_i32_59 : i32
    %65 = vector.broadcast %64 : i1 to vector<1x80xi1>
    %66 = vector.broadcast %65 : vector<1x80xi1> to vector<1x80xi1>
    %67 = arith.xori %63, %66 : vector<1x80xi1>
    %68 = arith.andi %67, %61 : vector<1x80xi1>
    %69 = vector.broadcast %57 : i32 to vector<1x80xi32>
    %70 = arith.addi %59, %69 : vector<1x80xi32>
    %71 = arith.select %68, %70, %59 : vector<1x80xi1>, vector<1x80xi32>
    %c8_i32 = arith.constant 8 : i32
    %72 = vector.broadcast %c8_i32 : i32 to vector<1x80xi32>
    %73 = arith.cmpi slt, %71, %72 : vector<1x80xi32>
    %cst_60 = arith.constant 0.000000e+00 : f32
    %74 = vector.broadcast %cst_60 : f32 to vector<128x1xf32>
    %cst_61 = arith.constant 0.000000e+00 : f32
    %75 = vector.shape_cast %73 : vector<1x80xi1> to vector<1x80xi1>
    %76 = vector.broadcast %75 : vector<1x80xi1> to vector<128x80xi1>
    %77 = vector.broadcast %cst_61 : f32 to vector<128x80xf32>
    %78 = arith.select %76, %54, %77 : vector<128x80xi1>, vector<128x80xf32>
    %cst_62 = arith.constant dense<0.000000e+00> : vector<128xf32>
    %79 = vector.multi_reduction <add>, %78, %cst_62 [1] : vector<128x80xf32> to vector<128xf32>
    %80 = vector.shape_cast %79 : vector<128xf32> to vector<128x1xf32>
    %81 = arith.addf %74, %80 : vector<128x1xf32>
    %cst_63 = arith.constant 1.562500e-02 : f32
    %82 = vector.broadcast %cst_63 : f32 to vector<128x1xf32>
    %83 = arith.mulf %81, %82 : vector<128x1xf32>
    %cst_64 = arith.constant 0.000000e+00 : f32
    %84 = vector.broadcast %cst_64 : f32 to vector<128x1xf32>
    %85 = vector.broadcast %83 : vector<128x1xf32> to vector<128x80xf32>
    %86 = arith.subf %54, %85 : vector<128x80xf32>
    %87 = arith.mulf %86, %86 : vector<128x80xf32>
    %cst_65 = arith.constant 0.000000e+00 : f32
    %88 = vector.shape_cast %73 : vector<1x80xi1> to vector<1x80xi1>
    %89 = vector.broadcast %88 : vector<1x80xi1> to vector<128x80xi1>
    %90 = vector.broadcast %cst_65 : f32 to vector<128x80xf32>
    %91 = arith.select %89, %87, %90 : vector<128x80xi1>, vector<128x80xf32>
    %cst_66 = arith.constant dense<0.000000e+00> : vector<128xf32>
    %92 = vector.multi_reduction <add>, %91, %cst_66 [1] : vector<128x80xf32> to vector<128xf32>
    %93 = vector.shape_cast %92 : vector<128xf32> to vector<128x1xf32>
    %94 = arith.addf %84, %93 : vector<128x1xf32>
    %cst_67 = arith.constant 1.562500e-02 : f32
    %95 = vector.broadcast %cst_67 : f32 to vector<128x1xf32>
    %96 = arith.mulf %94, %95 : vector<128x1xf32>
    %cst_68 = arith.constant 9.99999974E-6 : f32
    %97 = vector.broadcast %cst_68 : f32 to vector<128x1xf32>
    %98 = arith.addf %96, %97 : vector<128x1xf32>
    %99 = math.rsqrt %98 : vector<128x1xf32>
    %100 = vector.broadcast %83 : vector<128x1xf32> to vector<128x80xf32>
    %101 = arith.subf %54, %100 : vector<128x80xf32>
    %102 = vector.broadcast %99 : vector<128x1xf32> to vector<128x80xf32>
    %103 = arith.mulf %101, %102 : vector<128x80xf32>
    %cst_69 = arith.constant 0.000000e+00 : f32
    %104 = vector.broadcast %cst_69 : f32 to vector<128x80xf32>
    %105 = arith.maximumf %103, %104 : vector<128x80xf32>
    %c0_70 = arith.constant 0 : index
    %c0_71 = arith.constant 0 : index
    %c0_72 = arith.constant 0 : index
    %106 = vector.load %arg5[%c0_70, %c0_71, %c0_72] : memref<1x128x80xf32, #tpu.memory_space<vmem>>, vector<1x128x80xf32>
    %107 = vector.shape_cast %106 : vector<1x128x80xf32> to vector<128x80xf32>
    %108 = vector.shape_cast %105 : vector<128x80xf32> to vector<1x128x80xf32>
    tpu.vector_store %arg5[%c0_70, %c0_71, %c0_72], %108 {strides = array<i32>} : memref<1x128x80xf32, #tpu.memory_space<vmem>>, vector<1x128x80xf32>,
    return
  }
  func.func @transform_0(%arg0: i32, %arg1: i32) -> (i32, i32, i32, i32) {
    %c0_i32 = arith.constant 0 : i32
    %c0_i32_0 = arith.constant 0 : i32
    %c0_i32_1 = arith.constant 0 : i32
    %c0_i32_2 = arith.constant 0 : i32
    return %arg0, %c0_i32, %c0_i32_0, %c0_i32_1 : i32, i32, i32, i32
  }
  func.func @transform_1(%arg0: i32, %arg1: i32) -> (i32, i32, i32) {
    %c0_i32 = arith.constant 0 : i32
    %c0_i32_0 = arith.constant 0 : i32
    %c0_i32_1 = arith.constant 0 : i32
    return %c0_i32, %arg1, %c0_i32_0 : i32, i32, i32
  }
  func.func @transform_2(%arg0: i32, %arg1: i32) -> (i32, i32) {
    %c0_i32 = arith.constant 0 : i32
    %c0_i32_0 = arith.constant 0 : i32
    return %arg1, %c0_i32 : i32, i32
  }
  func.func @transform_3(%arg0: i32, %arg1: i32) -> (i32, i32, i32) {
    %c0_i32 = arith.constant 0 : i32
    %c0_i32_0 = arith.constant 0 : i32
    return %arg0, %arg1, %c0_i32 : i32, i32, i32
  }
}

</mosaic_0001>

<llo_original>
// kernel: tpu_custom_call.1
$region0: #{tpu_custom_call.1}
  #allocation0 [shape = 'u32[]', space=smem, size = 0x4, offset = 0x4, fixed_abs, tag = 'smem constant byte address 0x4 - core index']
  #allocation1 [shape = 'u32[144,128]{1,0:T(1,128)}', space=vmem, size = 0x12000, scoped, tag = 'internal scratch']
  %s0 = inlined_call_operand.vmem [shape: bf16[1,1,8,102], index: 0, kind: input, shape index: {}]
  %s1 = inlined_call_operand.vmem [shape: bf16[9,256,8], index: 1, kind: input, shape index: {}]
  %s2 = inlined_call_operand.vmem [shape: f32[256,1], index: 2, kind: input, shape index: {}]
  %s3 = inlined_call_operand.vmem [shape: f32[1,256,80], index: 3, kind: output, shape index: {}]
  %s4 = sld [smem:[#allocation0]]
  $region86: #{tpu_custom_call.1} parent=0
    _
  %s6 = ssub.s32 1, %s4
  %s7 = scalar_select 0, %s6, %s4
  $region1: #{tpu_custom_call.1} parent=0
    #allocation2 [shape = 'u8[589824]{0}', space=vmem, size = 0x90000, scoped, tag = 'input window, operand 1']
    loop: start=0, step=1, limit=4
    $region2: #{tpu_custom_call.1} parent=1 // loop_pre_header
      _
    $region3: #{tpu_custom_call.1} parent=1 // loop_header
      %s9 = sphi 0, %s13
      %p10 = scmp.ge.s32.totalorder %s9, 4
      %s16 = sphi 0, %s28
      %s17 = sphi 0, %s24
      %s18 = sphi 0, %s16
      %s19 = sphi 0, %s17
      %s20 = sphi 0, %s18
      %s21 = sphi 0, %s19
      %s31 = sphi 0, %s33
      %s34 = sphi 0, %s31
      %s35 = sphi 0, %s34
      %s51 = sphi 0, %s35
      %s57 = sphi 0, %s59
      %s60 = sphi 0, %s57
      %s61 = sphi 0, %s60
      %s77 = sphi 0, %s61
      %s83 = sphi 0, %s85
      %s86 = sphi 0, %s83
      %s87 = sphi 0, %s86
      %s103 = sphi 0, %s87
      %s111 = sphi 0, %s113
      %s114 = sphi 0, %s111
      %s115 = sphi 0, %s114
      %s131 = sphi 0, %s115
    $region4: #{tpu_custom_call.1} parent=1 // loop_header_branch
      %12 = sbr.rel (%p10) target = $region8
    $region5: #{tpu_custom_call.1} parent=1 // loop_body
      %s14 = ssub.s32 %s9, 1
      %s15 = ssub.s32 %s9, 2
      %s22 = sadd.s32 1, %s17
      %p23 = scmp.ge.s32.totalorder %s22, 2
      %s24 = scalar_select %p23, 0, %s22
      %s25 = sadd.s32 1, %s16
      %s26 = scalar_select %p23, %s25, %s16
      %p27 = scmp.ge.s32.totalorder %s26, 1
      %s28 = scalar_select %p27, 0, %s26
      %s29 = ssub.s32 %s16, %s28
      %p30 = scmp.eq.s32.totalorder %s29, 0
      %s32 = sadd.s32 %s31, 1
      %s33 = scalar_select %p30, %s31, %s32
      %p36 = pneg %p30
      %p37 = scmp.eq.s32.totalorder %s9, 1
      %p38 = por %p36, %p37
      %p39 = scmp.ne.s32.totalorder %s31, %s34
      %p40 = scmp.eq.s32.totalorder %s9, 0
      %p41 = por %p39, %p40
      %p42 = scmp.ne.s32.totalorder %s31, %s34
      %p43 = scmp.eq.s32.totalorder %s14, 1
      %p44 = por %p42, %p43
      %p45 = scmp.ne.s32.totalorder %s34, %s35
      %p46 = scmp.eq.s32.totalorder %s14, 0
      %p47 = por %p45, %p46
      %p48 = scmp.ne.s32.totalorder %s34, %s35
      %p49 = scmp.eq.s32.totalorder %s15, 1
      %p50 = por %p48, %p49
      %p52 = scmp.ne.s32.totalorder %s35, %s51
      %p53 = scmp.eq.s32.totalorder %s15, 0
      %p54 = por %p52, %p53
      %s55 = ssub.s32 %s17, %s24
      %p56 = scmp.eq.s32.totalorder %s55, 0
      %s58 = sadd.s32 %s57, 1
      %s59 = scalar_select %p56, %s57, %s58
      %p62 = pneg %p56
      %p63 = scmp.eq.s32.totalorder %s9, 1
      %p64 = por %p62, %p63
      %p65 = scmp.ne.s32.totalorder %s57, %s60
      %p66 = scmp.eq.s32.totalorder %s9, 0
      %p67 = por %p65, %p66
      %p68 = scmp.ne.s32.totalorder %s57, %s60
      %p69 = scmp.eq.s32.totalorder %s14, 1
      %p70 = por %p68, %p69
      %p71 = scmp.ne.s32.totalorder %s60, %s61
      %p72 = scmp.eq.s32.totalorder %s14, 0
      %p73 = por %p71, %p72
      %p74 = scmp.ne.s32.totalorder %s60, %s61
      %p75 = scmp.eq.s32.totalorder %s15, 1
      %p76 = por %p74, %p75
      %p78 = scmp.ne.s32.totalorder %s61, %s77
      %p79 = scmp.eq.s32.totalorder %s15, 0
      %p80 = por %p78, %p79
      %s81 = ssub.s32 %s17, %s24
      %p82 = scmp.eq.s32.totalorder %s81, 0
      %s84 = sadd.s32 %s83, 1
      %s85 = scalar_select %p82, %s83, %s84
      %p88 = pneg %p82
      %p89 = scmp.eq.s32.totalorder %s9, 1
      %p90 = por %p88, %p89
      %p91 = scmp.ne.s32.totalorder %s83, %s86
      %p92 = scmp.eq.s32.totalorder %s9, 0
      %p93 = por %p91, %p92
      %p94 = scmp.ne.s32.totalorder %s83, %s86
      %p95 = scmp.eq.s32.totalorder %s14, 1
      %p96 = por %p94, %p95
      %p97 = scmp.ne.s32.totalorder %s86, %s87
      %p98 = scmp.eq.s32.totalorder %s14, 0
      %p99 = por %p97, %p98
      %p100 = scmp.ne.s32.totalorder %s86, %s87
      %p101 = scmp.eq.s32.totalorder %s15, 1
      %p102 = por %p100, %p101
      %p104 = scmp.ne.s32.totalorder %s87, %s103
      %p105 = scmp.eq.s32.totalorder %s15, 0
      %p106 = por %p104, %p105
      %s107 = ssub.s32 %s16, %s28
      %s108 = ssub.s32 %s17, %s24
      %s109 = sor.u32 %s107, %s108
      %p110 = scmp.eq.s32.totalorder %s109, 0
      %s112 = sadd.s32 %s111, 1
      %s113 = scalar_select %p110, %s111, %s112
      %p116 = pneg %p110
      %p117 = scmp.eq.s32.totalorder %s9, 1
      %p118 = por %p116, %p117
      %p119 = scmp.ne.s32.totalorder %s111, %s114
      %p120 = scmp.eq.s32.totalorder %s9, 0
      %p121 = por %p119, %p120
      %p122 = scmp.ne.s32.totalorder %s111, %s114
      %p123 = scmp.eq.s32.totalorder %s14, 1
      %p124 = por %p122, %p123
      %p125 = scmp.ne.s32.totalorder %s114, %s115
      %p126 = scmp.eq.s32.totalorder %s14, 0
      %p127 = por %p125, %p126
      %p128 = scmp.ne.s32.totalorder %s114, %s115
      %p129 = scmp.eq.s32.totalorder %s15, 1
      %p130 = por %p128, %p129
      %p132 = scmp.ne.s32.totalorder %s115, %s131
      %p133 = scmp.eq.s32.totalorder %s15, 0
      %p134 = por %p132, %p133
      %p135 = scmp.le.s32.totalorder 1, %s9
      %p136 = scmp.lt.s32.totalorder %s9, 3
      %p137 = pnand %p135, %p136
      %p138 = pneg %p137
      // Predicated region
      $region9: #{tpu_custom_call.1} parent=5 // pred_check
        _
      $region10: #{tpu_custom_call.1} parent=5 // pred_check_branch
        %140 = sbr.rel (%p137) target = $region12
      $region11: #{tpu_custom_call.1} parent=5 // pred_region
        %s141 = ssub.s32 %s9, 1
        // Predicated region
        $region13: #{tpu_custom_call.1} parent=11 // pred_check
          %p142 = pneg %p47
        $region14: #{tpu_custom_call.1} parent=11 // pred_check_branch
          %144 = sbr.rel (%p142) target = $region16
        $region15: #{tpu_custom_call.1} parent=11 // pred_region
          %p145 = scmp.lt.s32.totalorder %s18, 0
          %s146 = scalar_select %p145, %s18, 0
          %s147 = smul.addr %s146, 4
          %s148 = scalar_lea.vmem %s0, %s147
        $region16: #{tpu_custom_call.1} parent=11 // pred_fallthru
          _
      $region12: #{tpu_custom_call.1} parent=5 // pred_fallthru
        _
      %p149 = scmp.lt.s32.totalorder %s9, 2
      // Predicated region
      $region17: #{tpu_custom_call.1} parent=5 // pred_check
        %p150 = pneg %p149
      $region18: #{tpu_custom_call.1} parent=5 // pred_check_branch
        %152 = sbr.rel (%p150) target = $region20
      $region19: #{tpu_custom_call.1} parent=5 // pred_region
        // Predicated region
        $region21: #{tpu_custom_call.1} parent=19 // pred_check
          %p153 = pneg %p67
        $region22: #{tpu_custom_call.1} parent=19 // pred_check_branch
          %155 = sbr.rel (%p153) target = $region24
        $region23: #{tpu_custom_call.1} parent=19 // pred_region
          %s156 = sand.u32 %s57, 1
          %s157 = sand.u32 %s57, 1
          %s158 = smul.addr %s157, 576
          %s159 = scalar_lea.vmem [#allocation2], %s158
          %s160 = smul.u32 16, %s17
          %s161 = smul.addr %s160, 4
          %s162 = scalar_lea.vmem %s1, %s161
          // Predicated region
          $region25: #{tpu_custom_call.1} parent=23 // pred_check
            _
          $region26: #{tpu_custom_call.1} parent=23 // pred_check_branch
            %164 = sbr.rel (0) target = $region28
          $region27: #{tpu_custom_call.1} parent=23 // pred_region
            // Predicated region
            $region29: #{tpu_custom_call.1} parent=27 // pred_check
              _
            $region30: #{tpu_custom_call.1} parent=27 // pred_check_branch
              %166 = sbr.rel target = $region32
            $region31: #{tpu_custom_call.1} parent=27 // pred_region
              // Predicated region
              $region44: #{tpu_custom_call.1} parent=31 // pred_check
                _
              $region45: #{tpu_custom_call.1} parent=31 // pred_check_branch
                %467 = sbr.rel (0) target = $region47
              $region46: #{tpu_custom_call.1} parent=31 // pred_region
                loop: start=0, step=1, limit=1
                $region48: #{tpu_custom_call.1} parent=46 // loop_pre_header
                  _
                $region49: #{tpu_custom_call.1} parent=46 // loop_header
                  %s469 = sphi 0, %s473
                  %p470 = scmp.ge.s32.totalorder %s469, 1
                  %s474 = sphi %s162, %s162
                  %s475 = sphi %s159, %s159
                $region50: #{tpu_custom_call.1} parent=46 // loop_header_branch
                  %472 = sbr.rel (%p470) target = $region54
                $region51: #{tpu_custom_call.1} parent=46 // loop_body
                  _
                $region52: #{tpu_custom_call.1} parent=46 // loop_footer
                  %s473 = sadd.s32 1, %s469
                $region53: #{tpu_custom_call.1} parent=46 // loop_footer_branch
                  %468 = sbr.rel target = $region49
                $region54: #{tpu_custom_call.1} parent=46 // loop_exit
                  _
                loop: start=0, step=1, limit=1
                $region55: #{tpu_custom_call.1} parent=46 // loop_pre_header
                  _
                $region56: #{tpu_custom_call.1} parent=46 // loop_header
                  %s478 = sphi 0, %s482
                  %p479 = scmp.ge.s32.totalorder %s478, 1
                  %s483 = sphi %s162, %s162
                  %s484 = sphi %s159, %s159
                $region57: #{tpu_custom_call.1} parent=46 // loop_header_branch
                  %481 = sbr.rel (%p479) target = $region61
                $region58: #{tpu_custom_call.1} parent=46 // loop_body
                  %v485 = vld [vmem:[%s483] sm:$0xf]
                  %486 = vst [vmem:[%s484] sm:$0xf] %v485
                  %v487 = vld [vmem:[%s483 + $0x4] sm:$0xf]
                  %488 = vst [vmem:[%s484 + $0x4] sm:$0xf] %v487
                  %v489 = vld [vmem:[%s483 + $0x8] sm:$0xf]
                  %490 = vst [vmem:[%s484 + $0x8] sm:$0xf] %v489
                  %v491 = vld [vmem:[%s483 + $0xc] sm:$0xf]
                  %492 = vst [vmem:[%s484 + $0xc] sm:$0xf] %v491
                  %v493 = vld [vmem:[%s483 + $0x10] sm:$0xf]
                  %494 = vst [vmem:[%s484 + $0x10] sm:$0xf] %v493
                  %v495 = vld [vmem:[%s483 + $0x14] sm:$0xf]
                  %496 = vst [vmem:[%s484 + $0x14] sm:$0xf] %v495
                  %v497 = vld [vmem:[%s483 + $0x18] sm:$0xf]
                  %498 = vst [vmem:[%s484 + $0x18] sm:$0xf] %v497
                  %v499 = vld [vmem:[%s483 + $0x1c] sm:$0xf]
                  %500 = vst [vmem:[%s484 + $0x1c] sm:$0xf] %v499
                  %v501 = vld [vmem:[%s483 + $0x20] sm:$0xf]
                  %502 = vst [vmem:[%s484 + $0x20] sm:$0xf] %v501
                  %v503 = vld [vmem:[%s483 + $0x24] sm:$0xf]
                  %504 = vst [vmem:[%s484 + $0x24] sm:$0xf] %v503
                  %v505 = vld [vmem:[%s483 + $0x28] sm:$0xf]
                  %506 = vst [vmem:[%s484 + $0x28] sm:$0xf] %v505
                  %v507 = vld [vmem:[%s483 + $0x2c] sm:$0xf]
                  %508 = vst [vmem:[%s484 + $0x2c] sm:$0xf] %v507
                  %v509 = vld [vmem:[%s483 + $0x30] sm:$0xf]
                  %510 = vst [vmem:[%s484 + $0x30] sm:$0xf] %v509
                  %v511 = vld [vmem:[%s483 + $0x34] sm:$0xf]
                  %512 = vst [vmem:[%s484 + $0x34] sm:$0xf] %v511
                  %v513 = vld [vmem:[%s483 + $0x38] sm:$0xf]
                  %514 = vst [vmem:[%s484 + $0x38] sm:$0xf] %v513
                  %v515 = vld [vmem:[%s483 + $0x3c] sm:$0xf]
                  %516 = vst [vmem:[%s484 + $0x3c] sm:$0xf] %v515
                  %v517 = vld [vmem:[%s483 + $0x80] sm:$0xf]
                  %518 = vst [vmem:[%s484 + $0x40] sm:$0xf] %v517
                  %v519 = vld [vmem:[%s483 + $0x84] sm:$0xf]
                  %520 = vst [vmem:[%s484 + $0x44] sm:$0xf] %v519
                  %v521 = vld [vmem:[%s483 + $0x88] sm:$0xf]
                  %522 = vst [vmem:[%s484 + $0x48] sm:$0xf] %v521
                  %v523 = vld [vmem:[%s483 + $0x8c] sm:$0xf]
                  %524 = vst [vmem:[%s484 + $0x4c] sm:$0xf] %v523
                  %v525 = vld [vmem:[%s483 + $0x90] sm:$0xf]
                  %526 = vst [vmem:[%s484 + $0x50] sm:$0xf] %v525
                  %v527 = vld [vmem:[%s483 + $0x94] sm:$0xf]
                  %528 = vst [vmem:[%s484 + $0x54] sm:$0xf] %v527
                  %v529 = vld [vmem:[%s483 + $0x98] sm:$0xf]
                  %530 = vst [vmem:[%s484 + $0x58] sm:$0xf] %v529
                  %v531 = vld [vmem:[%s483 + $0x9c] sm:$0xf]
                  %532 = vst [vmem:[%s484 + $0x5c] sm:$0xf] %v531
                  %v533 = vld [vmem:[%s483 + $0xa0] sm:$0xf]
                  %534 = vst [vmem:[%s484 + $0x60] sm:$0xf] %v533
                  %v535 = vld [vmem:[%s483 + $0xa4] sm:$0xf]
                  %536 = vst [vmem:[%s484 + $0x64] sm:$0xf] %v535
                  %v537 = vld [vmem:[%s483 + $0xa8] sm:$0xf]
                  %538 = vst [vmem:[%s484 + $0x68] sm:$0xf] %v537
                  %v539 = vld [vmem:[%s483 + $0xac] sm:$0xf]
                  %540 = vst [vmem:[%s484 + $0x6c] sm:$0xf] %v539
                  %v541 = vld [vmem:[%s483 + $0xb0] sm:$0xf]
                  %542 = vst [vmem:[%s484 + $0x70] sm:$0xf] %v541
                  %v543 = vld [vmem:[%s483 + $0xb4] sm:$0xf]
                  %544 = vst [vmem:[%s484 + $0x74] sm:$0xf] %v543
                  %v545 = vld [vmem:[%s483 + $0xb8] sm:$0xf]
                  %546 = vst [vmem:[%s484 + $0x78] sm:$0xf] %v545
                  %v547 = vld [vmem:[%s483 + $0xbc] sm:$0xf]
                  %548 = vst [vmem:[%s484 + $0x7c] sm:$0xf] %v547
                  %v549 = vld [vmem:[%s483 + $0x100] sm:$0xf]
                  %550 = vst [vmem:[%s484 + $0x80] sm:$0xf] %v549
                  %v551 = vld [vmem:[%s483 + $0x104] sm:$0xf]
                  %552 = vst [vmem:[%s484 + $0x84] sm:$0xf] %v551
                  %v553 = vld [vmem:[%s483 + $0x108] sm:$0xf]
                  %554 = vst [vmem:[%s484 + $0x88] sm:$0xf] %v553
                  %v555 = vld [vmem:[%s483 + $0x10c] sm:$0xf]
                  %556 = vst [vmem:[%s484 + $0x8c] sm:$0xf] %v555
                  %v557 = vld [vmem:[%s483 + $0x110] sm:$0xf]
                  %558 = vst [vmem:[%s484 + $0x90] sm:$0xf] %v557
                  %v559 = vld [vmem:[%s483 + $0x114] sm:$0xf]
                  %560 = vst [vmem:[%s484 + $0x94] sm:$0xf] %v559
                  %v561 = vld [vmem:[%s483 + $0x118] sm:$0xf]
                  %562 = vst [vmem:[%s484 + $0x98] sm:$0xf] %v561
                  %v563 = vld [vmem:[%s483 + $0x11c] sm:$0xf]
                  %564 = vst [vmem:[%s484 + $0x9c] sm:$0xf] %v563
                  %v565 = vld [vmem:[%s483 + $0x120] sm:$0xf]
                  %566 = vst [vmem:[%s484 + $0xa0] sm:$0xf] %v565
                  %v567 = vld [vmem:[%s483 + $0x124] sm:$0xf]
                  %568 = vst [vmem:[%s484 + $0xa4] sm:$0xf] %v567
                  %v569 = vld [vmem:[%s483 + $0x128] sm:$0xf]
                  %570 = vst [vmem:[%s484 + $0xa8] sm:$0xf] %v569
                  %v571 = vld [vmem:[%s483 + $0x12c] sm:$0xf]
                  %572 = vst [vmem:[%s484 + $0xac] sm:$0xf] %v571
                  %v573 = vld [vmem:[%s483 + $0x130] sm:$0xf]
                  %574 = vst [vmem:[%s484 + $0xb0] sm:$0xf] %v573
                  %v575 = vld [vmem:[%s483 + $0x134] sm:$0xf]
                  %576 = vst [vmem:[%s484 + $0xb4] sm:$0xf] %v575
                  %v577 = vld [vmem:[%s483 + $0x138] sm:$0xf]
                  %578 = vst [vmem:[%s484 + $0xb8] sm:$0xf] %v577
                  %v579 = vld [vmem:[%s483 + $0x13c] sm:$0xf]
                  %580 = vst [vmem:[%s484 + $0xbc] sm:$0xf] %v579
                  %v581 = vld [vmem:[%s483 + $0x180] sm:$0xf]
                  %582 = vst [vmem:[%s484 + $0xc0] sm:$0xf] %v581
                  %v583 = vld [vmem:[%s483 + $0x184] sm:$0xf]
                  %584 = vst [vmem:[%s484 + $0xc4] sm:$0xf] %v583
                  %v585 = vld [vmem:[%s483 + $0x188] sm:$0xf]
                  %586 = vst [vmem:[%s484 + $0xc8] sm:$0xf] %v585
                  %v587 = vld [vmem:[%s483 + $0x18c] sm:$0xf]
                  %588 = vst [vmem:[%s484 + $0xcc] sm:$0xf] %v587
                  %v589 = vld [vmem:[%s483 + $0x190] sm:$0xf]
                  %590 = vst [vmem:[%s484 + $0xd0] sm:$0xf] %v589
                  %v591 = vld [vmem:[%s483 + $0x194] sm:$0xf]
                  %592 = vst [vmem:[%s484 + $0xd4] sm:$0xf] %v591
                  %v593 = vld [vmem:[%s483 + $0x198] sm:$0xf]
                  %594 = vst [vmem:[%s484 + $0xd8] sm:$0xf] %v593
                  %v595 = vld [vmem:[%s483 + $0x19c] sm:$0xf]
                  %596 = vst [vmem:[%s484 + $0xdc] sm:$0xf] %v595
                  %v597 = vld [vmem:[%s483 + $0x1a0] sm:$0xf]
                  %598 = vst [vmem:[%s484 + $0xe0] sm:$0xf] %v597
                  %v599 = vld [vmem:[%s483 + $0x1a4] sm:$0xf]
                  %600 = vst [vmem:[%s484 + $0xe4] sm:$0xf] %v599
                  %v601 = vld [vmem:[%s483 + $0x1a8] sm:$0xf]
                  %602 = vst [vmem:[%s484 + $0xe8] sm:$0xf] %v601
                  %v603 = vld [vmem:[%s483 + $0x1ac] sm:$0xf]
                  %604 = vst [vmem:[%s484 + $0xec] sm:$0xf] %v603
                  %v605 = vld [vmem:[%s483 + $0x1b0] sm:$0xf]
                  %606 = vst [vmem:[%s484 + $0xf0] sm:$0xf] %v605
                  %v607 = vld [vmem:[%s483 + $0x1b4] sm:$0xf]
                  %608 = vst [vmem:[%s484 + $0xf4] sm:$0xf] %v607
                  %v609 = vld [vmem:[%s483 + $0x1b8] sm:$0xf]
                  %610 = vst [vmem:[%s484 + $0xf8] sm:$0xf] %v609
                  %v611 = vld [vmem:[%s483 + $0x1bc] sm:$0xf]
                  %612 = vst [vmem:[%s484 + $0xfc] sm:$0xf] %v611
                  %v613 = vld [vmem:[%s483 + $0x200] sm:$0xf]
                  %614 = vst [vmem:[%s484 + $0x100] sm:$0xf] %v613
                  %v615 = vld [vmem:[%s483 + $0x204] sm:$0xf]
                  %616 = vst [vmem:[%s484 + $0x104] sm:$0xf] %v615
                  %v617 = vld [vmem:[%s483 + $0x208] sm:$0xf]
                  %618 = vst [vmem:[%s484 + $0x108] sm:$0xf] %v617
                  %v619 = vld [vmem:[%s483 + $0x20c] sm:$0xf]
                  %620 = vst [vmem:[%s484 + $0x10c] sm:$0xf] %v619
                  %v621 = vld [vmem:[%s483 + $0x210] sm:$0xf]
                  %622 = vst [vmem:[%s484 + $0x110] sm:$0xf] %v621
                  %v623 = vld [vmem:[%s483 + $0x214] sm:$0xf]
                  %624 = vst [vmem:[%s484 + $0x114] sm:$0xf] %v623
                  %v625 = vld [vmem:[%s483 + $0x218] sm:$0xf]
                  %626 = vst [vmem:[%s484 + $0x118] sm:$0xf] %v625
                  %v627 = vld [vmem:[%s483 + $0x21c] sm:$0xf]
                  %628 = vst [vmem:[%s484 + $0x11c] sm:$0xf] %v627
                  %v629 = vld [vmem:[%s483 + $0x220] sm:$0xf]
                  %630 = vst [vmem:[%s484 + $0x120] sm:$0xf] %v629
                  %v631 = vld [vmem:[%s483 + $0x224] sm:$0xf]
                  %632 = vst [vmem:[%s484 + $0x124] sm:$0xf] %v631
                  %v633 = vld [vmem:[%s483 + $0x228] sm:$0xf]
                  %634 = vst [vmem:[%s484 + $0x128] sm:$0xf] %v633
                  %v635 = vld [vmem:[%s483 + $0x22c] sm:$0xf]
                  %636 = vst [vmem:[%s484 + $0x12c] sm:$0xf] %v635
                  %v637 = vld [vmem:[%s483 + $0x230] sm:$0xf]
                  %638 = vst [vmem:[%s484 + $0x130] sm:$0xf] %v637
                  %v639 = vld [vmem:[%s483 + $0x234] sm:$0xf]
                  %640 = vst [vmem:[%s484 + $0x134] sm:$0xf] %v639
                  %v641 = vld [vmem:[%s483 + $0x238] sm:$0xf]
                  %642 = vst [vmem:[%s484 + $0x138] sm:$0xf] %v641
                  %v643 = vld [vmem:[%s483 + $0x23c] sm:$0xf]
                  %644 = vst [vmem:[%s484 + $0x13c] sm:$0xf] %v643
                  %v645 = vld [vmem:[%s483 + $0x280] sm:$0xf]
                  %646 = vst [vmem:[%s484 + $0x140] sm:$0xf] %v645
                  %v647 = vld [vmem:[%s483 + $0x284] sm:$0xf]
                  %648 = vst [vmem:[%s484 + $0x144] sm:$0xf] %v647
                  %v649 = vld [vmem:[%s483 + $0x288] sm:$0xf]
                  %650 = vst [vmem:[%s484 + $0x148] sm:$0xf] %v649
                  %v651 = vld [vmem:[%s483 + $0x28c] sm:$0xf]
                  %652 = vst [vmem:[%s484 + $0x14c] sm:$0xf] %v651
                  %v653 = vld [vmem:[%s483 + $0x290] sm:$0xf]
                  %654 = vst [vmem:[%s484 + $0x150] sm:$0xf] %v653
                  %v655 = vld [vmem:[%s483 + $0x294] sm:$0xf]
                  %656 = vst [vmem:[%s484 + $0x154] sm:$0xf] %v655
                  %v657 = vld [vmem:[%s483 + $0x298] sm:$0xf]
                  %658 = vst [vmem:[%s484 + $0x158] sm:$0xf] %v657
                  %v659 = vld [vmem:[%s483 + $0x29c] sm:$0xf]
                  %660 = vst [vmem:[%s484 + $0x15c] sm:$0xf] %v659
                  %v661 = vld [vmem:[%s483 + $0x2a0] sm:$0xf]
                  %662 = vst [vmem:[%s484 + $0x160] sm:$0xf] %v661
                  %v663 = vld [vmem:[%s483 + $0x2a4] sm:$0xf]
                  %664 = vst [vmem:[%s484 + $0x164] sm:$0xf] %v663
                  %v665 = vld [vmem:[%s483 + $0x2a8] sm:$0xf]
                  %666 = vst [vmem:[%s484 + $0x168] sm:$0xf] %v665
                  %v667 = vld [vmem:[%s483 + $0x2ac] sm:$0xf]
                  %668 = vst [vmem:[%s484 + $0x16c] sm:$0xf] %v667
                  %v669 = vld [vmem:[%s483 + $0x2b0] sm:$0xf]
                  %670 = vst [vmem:[%s484 + $0x170] sm:$0xf] %v669
                  %v671 = vld [vmem:[%s483 + $0x2b4] sm:$0xf]
                  %672 = vst [vmem:[%s484 + $0x174] sm:$0xf] %v671
                  %v673 = vld [vmem:[%s483 + $0x2b8] sm:$0xf]
                  %674 = vst [vmem:[%s484 + $0x178] sm:$0xf] %v673
                  %v675 = vld [vmem:[%s483 + $0x2bc] sm:$0xf]
                  %676 = vst [vmem:[%s484 + $0x17c] sm:$0xf] %v675
                  %v677 = vld [vmem:[%s483 + $0x300] sm:$0xf]
                  %678 = vst [vmem:[%s484 + $0x180] sm:$0xf] %v677
                  %v679 = vld [vmem:[%s483 + $0x304] sm:$0xf]
                  %680 = vst [vmem:[%s484 + $0x184] sm:$0xf] %v679
                  %v681 = vld [vmem:[%s483 + $0x308] sm:$0xf]
                  %682 = vst [vmem:[%s484 + $0x188] sm:$0xf] %v681
                  %v683 = vld [vmem:[%s483 + $0x30c] sm:$0xf]
                  %684 = vst [vmem:[%s484 + $0x18c] sm:$0xf] %v683
                  %v685 = vld [vmem:[%s483 + $0x310] sm:$0xf]
                  %686 = vst [vmem:[%s484 + $0x190] sm:$0xf] %v685
                  %v687 = vld [vmem:[%s483 + $0x314] sm:$0xf]
                  %688 = vst [vmem:[%s484 + $0x194] sm:$0xf] %v687
                  %v689 = vld [vmem:[%s483 + $0x318] sm:$0xf]
                  %690 = vst [vmem:[%s484 + $0x198] sm:$0xf] %v689
                  %v691 = vld [vmem:[%s483 + $0x31c] sm:$0xf]
                  %692 = vst [vmem:[%s484 + $0x19c] sm:$0xf] %v691
                  %v693 = vld [vmem:[%s483 + $0x320] sm:$0xf]
                  %694 = vst [vmem:[%s484 + $0x1a0] sm:$0xf] %v693
                  %v695 = vld [vmem:[%s483 + $0x324] sm:$0xf]
                  %696 = vst [vmem:[%s484 + $0x1a4] sm:$0xf] %v695
                  %v697 = vld [vmem:[%s483 + $0x328] sm:$0xf]
                  %698 = vst [vmem:[%s484 + $0x1a8] sm:$0xf] %v697
                  %v699 = vld [vmem:[%s483 + $0x32c] sm:$0xf]
                  %700 = vst [vmem:[%s484 + $0x1ac] sm:$0xf] %v699
                  %v701 = vld [vmem:[%s483 + $0x330] sm:$0xf]
                  %702 = vst [vmem:[%s484 + $0x1b0] sm:$0xf] %v701
                  %v703 = vld [vmem:[%s483 + $0x334] sm:$0xf]
                  %704 = vst [vmem:[%s484 + $0x1b4] sm:$0xf] %v703
                  %v705 = vld [vmem:[%s483 + $0x338] sm:$0xf]
                  %706 = vst [vmem:[%s484 + $0x1b8] sm:$0xf] %v705
                  %v707 = vld [vmem:[%s483 + $0x33c] sm:$0xf]
                  %708 = vst [vmem:[%s484 + $0x1bc] sm:$0xf] %v707
                  %v709 = vld [vmem:[%s483 + $0x380] sm:$0xf]
                  %710 = vst [vmem:[%s484 + $0x1c0] sm:$0xf] %v709
                  %v711 = vld [vmem:[%s483 + $0x384] sm:$0xf]
                  %712 = vst [vmem:[%s484 + $0x1c4] sm:$0xf] %v711
                  %v713 = vld [vmem:[%s483 + $0x388] sm:$0xf]
                  %714 = vst [vmem:[%s484 + $0x1c8] sm:$0xf] %v713
                  %v715 = vld [vmem:[%s483 + $0x38c] sm:$0xf]
                  %716 = vst [vmem:[%s484 + $0x1cc] sm:$0xf] %v715
                  %v717 = vld [vmem:[%s483 + $0x390] sm:$0xf]
                  %718 = vst [vmem:[%s484 + $0x1d0] sm:$0xf] %v717
                  %v719 = vld [vmem:[%s483 + $0x394] sm:$0xf]
                  %720 = vst [vmem:[%s484 + $0x1d4] sm:$0xf] %v719
                  %v721 = vld [vmem:[%s483 + $0x398] sm:$0xf]
                  %722 = vst [vmem:[%s484 + $0x1d8] sm:$0xf] %v721
                  %v723 = vld [vmem:[%s483 + $0x39c] sm:$0xf]
                  %724 = vst [vmem:[%s484 + $0x1dc] sm:$0xf] %v723
                  %v725 = vld [vmem:[%s483 + $0x3a0] sm:$0xf]
                  %726 = vst [vmem:[%s484 + $0x1e0] sm:$0xf] %v725
                  %v727 = vld [vmem:[%s483 + $0x3a4] sm:$0xf]
                  %728 = vst [vmem:[%s484 + $0x1e4] sm:$0xf] %v727
                  %v729 = vld [vmem:[%s483 + $0x3a8] sm:$0xf]
                  %730 = vst [vmem:[%s484 + $0x1e8] sm:$0xf] %v729
                  %v731 = vld [vmem:[%s483 + $0x3ac] sm:$0xf]
                  %732 = vst [vmem:[%s484 + $0x1ec] sm:$0xf] %v731
                  %v733 = vld [vmem:[%s483 + $0x3b0] sm:$0xf]
                  %734 = vst [vmem:[%s484 + $0x1f0] sm:$0xf] %v733
                  %v735 = vld [vmem:[%s483 + $0x3b4] sm:$0xf]
                  %736 = vst [vmem:[%s484 + $0x1f4] sm:$0xf] %v735
                  %v737 = vld [vmem:[%s483 + $0x3b8] sm:$0xf]
                  %738 = vst [vmem:[%s484 + $0x1f8] sm:$0xf] %v737
                  %v739 = vld [vmem:[%s483 + $0x3bc] sm:$0xf]
                  %740 = vst [vmem:[%s484 + $0x1fc] sm:$0xf] %v739
                  %v741 = vld [vmem:[%s483 + $0x400] sm:$0xf]
                  %742 = vst [vmem:[%s484 + $0x200] sm:$0xf] %v741
                  %v743 = vld [vmem:[%s483 + $0x404] sm:$0xf]
                  %744 = vst [vmem:[%s484 + $0x204] sm:$0xf] %v743
                  %v745 = vld [vmem:[%s483 + $0x408] sm:$0xf]
                  %746 = vst [vmem:[%s484 + $0x208] sm:$0xf] %v745
                  %v747 = vld [vmem:[%s483 + $0x40c] sm:$0xf]
                  %748 = vst [vmem:[%s484 + $0x20c] sm:$0xf] %v747
                  %v749 = vld [vmem:[%s483 + $0x410] sm:$0xf]
                  %750 = vst [vmem:[%s484 + $0x210] sm:$0xf] %v749
                  %v751 = vld [vmem:[%s483 + $0x414] sm:$0xf]
                  %752 = vst [vmem:[%s484 + $0x214] sm:$0xf] %v751
                  %v753 = vld [vmem:[%s483 + $0x418] sm:$0xf]
                  %754 = vst [vmem:[%s484 + $0x218] sm:$0xf] %v753
                  %v755 = vld [vmem:[%s483 + $0x41c] sm:$0xf]
                  %756 = vst [vmem:[%s484 + $0x21c] sm:$0xf] %v755
                  %v757 = vld [vmem:[%s483 + $0x420] sm:$0xf]
                  %758 = vst [vmem:[%s484 + $0x220] sm:$0xf] %v757
                  %v759 = vld [vmem:[%s483 + $0x424] sm:$0xf]
                  %760 = vst [vmem:[%s484 + $0x224] sm:$0xf] %v759
                  %v761 = vld [vmem:[%s483 + $0x428] sm:$0xf]
                  %762 = vst [vmem:[%s484 + $0x228] sm:$0xf] %v761
                  %v763 = vld [vmem:[%s483 + $0x42c] sm:$0xf]
                  %764 = vst [vmem:[%s484 + $0x22c] sm:$0xf] %v763
                  %v765 = vld [vmem:[%s483 + $0x430] sm:$0xf]
                  %766 = vst [vmem:[%s484 + $0x230] sm:$0xf] %v765
                  %v767 = vld [vmem:[%s483 + $0x434] sm:$0xf]
                  %768 = vst [vmem:[%s484 + $0x234] sm:$0xf] %v767
                  %v769 = vld [vmem:[%s483 + $0x438] sm:$0xf]
                  %770 = vst [vmem:[%s484 + $0x238] sm:$0xf] %v769
                  %v771 = vld [vmem:[%s483 + $0x43c] sm:$0xf]
                  %772 = vst [vmem:[%s484 + $0x23c] sm:$0xf] %v771
                $region59: #{tpu_custom_call.1} parent=46 // loop_footer
                  %s482 = sadd.s32 1, %s478
                $region60: #{tpu_custom_call.1} parent=46 // loop_footer_branch
                  %477 = sbr.rel target = $region56
                $region61: #{tpu_custom_call.1} parent=46 // loop_exit
                  _
              $region47: #{tpu_custom_call.1} parent=31 // pred_fallthru
                _
            $region32: #{tpu_custom_call.1} parent=27 // pred_fallthru
              _
            // Predicated region
            $region33: #{tpu_custom_call.1} parent=27 // pred_check
              _
            $region34: #{tpu_custom_call.1} parent=27 // pred_check_branch
              %168 = sbr.rel (0) target = $region36
            $region35: #{tpu_custom_call.1} parent=27 // pred_region
              loop: start=0, step=1, limit=1
              $region37: #{tpu_custom_call.1} parent=35 // loop_pre_header
                _
              $region38: #{tpu_custom_call.1} parent=35 // loop_header
                %s171 = sphi 0, %s175
                %p172 = scmp.ge.s32.totalorder %s171, 1
                %s176 = sphi %s162, %s162
                %s177 = sphi %s159, %s159
              $region39: #{tpu_custom_call.1} parent=35 // loop_header_branch
                %174 = sbr.rel (%p172) target = $region43
              $region40: #{tpu_custom_call.1} parent=35 // loop_body
                %v178 = vld [vmem:[%s176] sm:$0xf]
                %179 = vst [vmem:[%s177] sm:$0xf] %v178
                %v180 = vld [vmem:[%s176 + $0x4] sm:$0xf]
                %181 = vst [vmem:[%s177 + $0x4] sm:$0xf] %v180
                %v182 = vld [vmem:[%s176 + $0x8] sm:$0xf]
                %183 = vst [vmem:[%s177 + $0x8] sm:$0xf] %v182
                %v184 = vld [vmem:[%s176 + $0xc] sm:$0xf]
                %185 = vst [vmem:[%s177 + $0xc] sm:$0xf] %v184
                %v186 = vld [vmem:[%s176 + $0x10] sm:$0xf]
                %187 = vst [vmem:[%s177 + $0x10] sm:$0xf] %v186
                %v188 = vld [vmem:[%s176 + $0x14] sm:$0xf]
                %189 = vst [vmem:[%s177 + $0x14] sm:$0xf] %v188
                %v190 = vld [vmem:[%s176 + $0x18] sm:$0xf]
                %191 = vst [vmem:[%s177 + $0x18] sm:$0xf] %v190
                %v192 = vld [vmem:[%s176 + $0x1c] sm:$0xf]
                %193 = vst [vmem:[%s177 + $0x1c] sm:$0xf] %v192
                %v194 = vld [vmem:[%s176 + $0x20] sm:$0xf]
                %195 = vst [vmem:[%s177 + $0x20] sm:$0xf] %v194
                %v196 = vld [vmem:[%s176 + $0x24] sm:$0xf]
                %197 = vst [vmem:[%s177 + $0x24] sm:$0xf] %v196
                %v198 = vld [vmem:[%s176 + $0x28] sm:$0xf]
                %199 = vst [vmem:[%s177 + $0x28] sm:$0xf] %v198
                %v200 = vld [vmem:[%s176 + $0x2c] sm:$0xf]
                %201 = vst [vmem:[%s177 + $0x2c] sm:$0xf] %v200
                %v202 = vld [vmem:[%s176 + $0x30] sm:$0xf]
                %203 = vst [vmem:[%s177 + $0x30] sm:$0xf] %v202
                %v204 = vld [vmem:[%s176 + $0x34] sm:$0xf]
                %205 = vst [vmem:[%s177 + $0x34] sm:$0xf] %v204
                %v206 = vld [vmem:[%s176 + $0x38] sm:$0xf]
                %207 = vst [vmem:[%s177 + $0x38] sm:$0xf] %v206
                %v208 = vld [vmem:[%s176 + $0x3c] sm:$0xf]
                %209 = vst [vmem:[%s177 + $0x3c] sm:$0xf] %v208
                %v210 = vld [vmem:[%s176 + $0x80] sm:$0xf]
                %211 = vst [vmem:[%s177 + $0x40] sm:$0xf] %v210
                %v212 = vld [vmem:[%s176 + $0x84] sm:$0xf]
                %213 = vst [vmem:[%s177 + $0x44] sm:$0xf] %v212
                %v214 = vld [vmem:[%s176 + $0x88] sm:$0xf]
                %215 = vst [vmem:[%s177 + $0x48] sm:$0xf] %v214
                %v216 = vld [vmem:[%s176 + $0x8c] sm:$0xf]
                %217 = vst [vmem:[%s177 + $0x4c] sm:$0xf] %v216
                %v218 = vld [vmem:[%s176 + $0x90] sm:$0xf]
                %219 = vst [vmem:[%s177 + $0x50] sm:$0xf] %v218
                %v220 = vld [vmem:[%s176 + $0x94] sm:$0xf]
                %221 = vst [vmem:[%s177 + $0x54] sm:$0xf] %v220
                %v222 = vld [vmem:[%s176 + $0x98] sm:$0xf]
                %223 = vst [vmem:[%s177 + $0x58] sm:$0xf] %v222
                %v224 = vld [vmem:[%s176 + $0x9c] sm:$0xf]
                %225 = vst [vmem:[%s177 + $0x5c] sm:$0xf] %v224
                %v226 = vld [vmem:[%s176 + $0xa0] sm:$0xf]
                %227 = vst [vmem:[%s177 + $0x60] sm:$0xf] %v226
                %v228 = vld [vmem:[%s176 + $0xa4] sm:$0xf]
                %229 = vst [vmem:[%s177 + $0x64] sm:$0xf] %v228
                %v230 = vld [vmem:[%s176 + $0xa8] sm:$0xf]
                %231 = vst [vmem:[%s177 + $0x68] sm:$0xf] %v230
                %v232 = vld [vmem:[%s176 + $0xac] sm:$0xf]
                %233 = vst [vmem:[%s177 + $0x6c] sm:$0xf] %v232
                %v234 = vld [vmem:[%s176 + $0xb0] sm:$0xf]
                %235 = vst [vmem:[%s177 + $0x70] sm:$0xf] %v234
                %v236 = vld [vmem:[%s176 + $0xb4] sm:$0xf]
                %237 = vst [vmem:[%s177 + $0x74] sm:$0xf] %v236
                %v238 = vld [vmem:[%s176 + $0xb8] sm:$0xf]
                %239 = vst [vmem:[%s177 + $0x78] sm:$0xf] %v238
                %v240 = vld [vmem:[%s176 + $0xbc] sm:$0xf]
                %241 = vst [vmem:[%s177 + $0x7c] sm:$0xf] %v240
                %v242 = vld [vmem:[%s176 + $0x100] sm:$0xf]
                %243 = vst [vmem:[%s177 + $0x80] sm:$0xf] %v242
                %v244 = vld [vmem:[%s176 + $0x104] sm:$0xf]
                %245 = vst [vmem:[%s177 + $0x84] sm:$0xf] %v244
                %v246 = vld [vmem:[%s176 + $0x108] sm:$0xf]
                %247 = vst [vmem:[%s177 + $0x88] sm:$0xf] %v246
                %v248 = vld [vmem:[%s176 + $0x10c] sm:$0xf]
                %249 = vst [vmem:[%s177 + $0x8c] sm:$0xf] %v248
                %v250 = vld [vmem:[%s176 + $0x110] sm:$0xf]
                %251 = vst [vmem:[%s177 + $0x90] sm:$0xf] %v250
                %v252 = vld [vmem:[%s176 + $0x114] sm:$0xf]
                %253 = vst [vmem:[%s177 + $0x94] sm:$0xf] %v252
                %v254 = vld [vmem:[%s176 + $0x118] sm:$0xf]
                %255 = vst [vmem:[%s177 + $0x98] sm:$0xf] %v254
                %v256 = vld [vmem:[%s176 + $0x11c] sm:$0xf]
                %257 = vst [vmem:[%s177 + $0x9c] sm:$0xf] %v256
                %v258 = vld [vmem:[%s176 + $0x120] sm:$0xf]
                %259 = vst [vmem:[%s177 + $0xa0] sm:$0xf] %v258
                %v260 = vld [vmem:[%s176 + $0x124] sm:$0xf]
                %261 = vst [vmem:[%s177 + $0xa4] sm:$0xf] %v260
                %v262 = vld [vmem:[%s176 + $0x128] sm:$0xf]
                %263 = vst [vmem:[%s177 + $0xa8] sm:$0xf] %v262
                %v264 = vld [vmem:[%s176 + $0x12c] sm:$0xf]
                %265 = vst [vmem:[%s177 + $0xac] sm:$0xf] %v264
                %v266 = vld [vmem:[%s176 + $0x130] sm:$0xf]
                %267 = vst [vmem:[%s177 + $0xb0] sm:$0xf] %v266
                %v268 = vld [vmem:[%s176 + $0x134] sm:$0xf]
                %269 = vst [vmem:[%s177 + $0xb4] sm:$0xf] %v268
                %v270 = vld [vmem:[%s176 + $0x138] sm:$0xf]
                %271 = vst [vmem:[%s177 + $0xb8] sm:$0xf] %v270
                %v272 = vld [vmem:[%s176 + $0x13c] sm:$0xf]
                %273 = vst [vmem:[%s177 + $0xbc] sm:$0xf] %v272
                %v274 = vld [vmem:[%s176 + $0x180] sm:$0xf]
                %275 = vst [vmem:[%s177 + $0xc0] sm:$0xf] %v274
                %v276 = vld [vmem:[%s176 + $0x184] sm:$0xf]
                %277 = vst [vmem:[%s177 + $0xc4] sm:$0xf] %v276
                %v278 = vld [vmem:[%s176 + $0x188] sm:$0xf]
                %279 = vst [vmem:[%s177 + $0xc8] sm:$0xf] %v278
                %v280 = vld [vmem:[%s176 + $0x18c] sm:$0xf]
                %281 = vst [vmem:[%s177 + $0xcc] sm:$0xf] %v280
                %v282 = vld [vmem:[%s176 + $0x190] sm:$0xf]
                %283 = vst [vmem:[%s177 + $0xd0] sm:$0xf] %v282
                %v284 = vld [vmem:[%s176 + $0x194] sm:$0xf]
                %285 = vst [vmem:[%s177 + $0xd4] sm:$0xf] %v284
                %v286 = vld [vmem:[%s176 + $0x198] sm:$0xf]
                %287 = vst [vmem:[%s177 + $0xd8] sm:$0xf] %v286
                %v288 = vld [vmem:[%s176 + $0x19c] sm:$0xf]
                %289 = vst [vmem:[%s177 + $0xdc] sm:$0xf] %v288
                %v290 = vld [vmem:[%s176 + $0x1a0] sm:$0xf]
                %291 = vst [vmem:[%s177 + $0xe0] sm:$0xf] %v290
                %v292 = vld [vmem:[%s176 + $0x1a4] sm:$0xf]
                %293 = vst [vmem:[%s177 + $0xe4] sm:$0xf] %v292
                %v294 = vld [vmem:[%s176 + $0x1a8] sm:$0xf]
                %295 = vst [vmem:[%s177 + $0xe8] sm:$0xf] %v294
                %v296 = vld [vmem:[%s176 + $0x1ac] sm:$0xf]
                %297 = vst [vmem:[%s177 + $0xec] sm:$0xf] %v296
                %v298 = vld [vmem:[%s176 + $0x1b0] sm:$0xf]
                %299 = vst [vmem:[%s177 + $0xf0] sm:$0xf] %v298
                %v300 = vld [vmem:[%s176 + $0x1b4] sm:$0xf]
                %301 = vst [vmem:[%s177 + $0xf4] sm:$0xf] %v300
                %v302 = vld [vmem:[%s176 + $0x1b8] sm:$0xf]
                %303 = vst [vmem:[%s177 + $0xf8] sm:$0xf] %v302
                %v304 = vld [vmem:[%s176 + $0x1bc] sm:$0xf]
                %305 = vst [vmem:[%s177 + $0xfc] sm:$0xf] %v304
                %v306 = vld [vmem:[%s176 + $0x200] sm:$0xf]
                %307 = vst [vmem:[%s177 + $0x100] sm:$0xf] %v306
                %v308 = vld [vmem:[%s176 + $0x204] sm:$0xf]
                %309 = vst [vmem:[%s177 + $0x104] sm:$0xf] %v308
                %v310 = vld [vmem:[%s176 + $0x208] sm:$0xf]
                %311 = vst [vmem:[%s177 + $0x108] sm:$0xf] %v310
                %v312 = vld [vmem:[%s176 + $0x20c] sm:$0xf]
                %313 = vst [vmem:[%s177 + $0x10c] sm:$0xf] %v312
                %v314 = vld [vmem:[%s176 + $0x210] sm:$0xf]
                %315 = vst [vmem:[%s177 + $0x110] sm:$0xf] %v314
                %v316 = vld [vmem:[%s176 + $0x214] sm:$0xf]
                %317 = vst [vmem:[%s177 + $0x114] sm:$0xf] %v316
                %v318 = vld [vmem:[%s176 + $0x218] sm:$0xf]
                %319 = vst [vmem:[%s177 + $0x118] sm:$0xf] %v318
                %v320 = vld [vmem:[%s176 + $0x21c] sm:$0xf]
                %321 = vst [vmem:[%s177 + $0x11c] sm:$0xf] %v320
                %v322 = vld [vmem:[%s176 + $0x220] sm:$0xf]
                %323 = vst [vmem:[%s177 + $0x120] sm:$0xf] %v322
                %v324 = vld [vmem:[%s176 + $0x224] sm:$0xf]
                %325 = vst [vmem:[%s177 + $0x124] sm:$0xf] %v324
                %v326 = vld [vmem:[%s176 + $0x228] sm:$0xf]
                %327 = vst [vmem:[%s177 + $0x128] sm:$0xf] %v326
                %v328 = vld [vmem:[%s176 + $0x22c] sm:$0xf]
                %329 = vst [vmem:[%s177 + $0x12c] sm:$0xf] %v328
                %v330 = vld [vmem:[%s176 + $0x230] sm:$0xf]
                %331 = vst [vmem:[%s177 + $0x130] sm:$0xf] %v330
                %v332 = vld [vmem:[%s176 + $0x234] sm:$0xf]
                %333 = vst [vmem:[%s177 + $0x134] sm:$0xf] %v332
                %v334 = vld [vmem:[%s176 + $0x238] sm:$0xf]
                %335 = vst [vmem:[%s177 + $0x138] sm:$0xf] %v334
                %v336 = vld [vmem:[%s176 + $0x23c] sm:$0xf]
                %337 = vst [vmem:[%s177 + $0x13c] sm:$0xf] %v336
                %v338 = vld [vmem:[%s176 + $0x280] sm:$0xf]
                %339 = vst [vmem:[%s177 + $0x140] sm:$0xf] %v338
                %v340 = vld [vmem:[%s176 + $0x284] sm:$0xf]
                %341 = vst [vmem:[%s177 + $0x144] sm:$0xf] %v340
                %v342 = vld [vmem:[%s176 + $0x288] sm:$0xf]
                %343 = vst [vmem:[%s177 + $0x148] sm:$0xf] %v342
                %v344 = vld [vmem:[%s176 + $0x28c] sm:$0xf]
                %345 = vst [vmem:[%s177 + $0x14c] sm:$0xf] %v344
                %v346 = vld [vmem:[%s176 + $0x290] sm:$0xf]
                %347 = vst [vmem:[%s177 + $0x150] sm:$0xf] %v346
                %v348 = vld [vmem:[%s176 + $0x294] sm:$0xf]
                %349 = vst [vmem:[%s177 + $0x154] sm:$0xf] %v348
                %v350 = vld [vmem:[%s176 + $0x298] sm:$0xf]
                %351 = vst [vmem:[%s177 + $0x158] sm:$0xf] %v350
                %v352 = vld [vmem:[%s176 + $0x29c] sm:$0xf]
                %353 = vst [vmem:[%s177 + $0x15c] sm:$0xf] %v352
                %v354 = vld [vmem:[%s176 + $0x2a0] sm:$0xf]
                %355 = vst [vmem:[%s177 + $0x160] sm:$0xf] %v354
                %v356 = vld [vmem:[%s176 + $0x2a4] sm:$0xf]
                %357 = vst [vmem:[%s177 + $0x164] sm:$0xf] %v356
                %v358 = vld [vmem:[%s176 + $0x2a8] sm:$0xf]
                %359 = vst [vmem:[%s177 + $0x168] sm:$0xf] %v358
                %v360 = vld [vmem:[%s176 + $0x2ac] sm:$0xf]
                %361 = vst [vmem:[%s177 + $0x16c] sm:$0xf] %v360
                %v362 = vld [vmem:[%s176 + $0x2b0] sm:$0xf]
                %363 = vst [vmem:[%s177 + $0x170] sm:$0xf] %v362
                %v364 = vld [vmem:[%s176 + $0x2b4] sm:$0xf]
                %365 = vst [vmem:[%s177 + $0x174] sm:$0xf] %v364
                %v366 = vld [vmem:[%s176 + $0x2b8] sm:$0xf]
                %367 = vst [vmem:[%s177 + $0x178] sm:$0xf] %v366
                %v368 = vld [vmem:[%s176 + $0x2bc] sm:$0xf]
                %369 = vst [vmem:[%s177 + $0x17c] sm:$0xf] %v368
                %v370 = vld [vmem:[%s176 + $0x300] sm:$0xf]
                %371 = vst [vmem:[%s177 + $0x180] sm:$0xf] %v370
                %v372 = vld [vmem:[%s176 + $0x304] sm:$0xf]
                %373 = vst [vmem:[%s177 + $0x184] sm:$0xf] %v372
                %v374 = vld [vmem:[%s176 + $0x308] sm:$0xf]
                %375 = vst [vmem:[%s177 + $0x188] sm:$0xf] %v374
                %v376 = vld [vmem:[%s176 + $0x30c] sm:$0xf]
                %377 = vst [vmem:[%s177 + $0x18c] sm:$0xf] %v376
                %v378 = vld [vmem:[%s176 + $0x310] sm:$0xf]
                %379 = vst [vmem:[%s177 + $0x190] sm:$0xf] %v378
                %v380 = vld [vmem:[%s176 + $0x314] sm:$0xf]
                %381 = vst [vmem:[%s177 + $0x194] sm:$0xf] %v380
                %v382 = vld [vmem:[%s176 + $0x318] sm:$0xf]
                %383 = vst [vmem:[%s177 + $0x198] sm:$0xf] %v382
                %v384 = vld [vmem:[%s176 + $0x31c] sm:$0xf]
                %385 = vst [vmem:[%s177 + $0x19c] sm:$0xf] %v384
                %v386 = vld [vmem:[%s176 + $0x320] sm:$0xf]
                %387 = vst [vmem:[%s177 + $0x1a0] sm:$0xf] %v386
                %v388 = vld [vmem:[%s176 + $0x324] sm:$0xf]
                %389 = vst [vmem:[%s177 + $0x1a4] sm:$0xf] %v388
                %v390 = vld [vmem:[%s176 + $0x328] sm:$0xf]
                %391 = vst [vmem:[%s177 + $0x1a8] sm:$0xf] %v390
                %v392 = vld [vmem:[%s176 + $0x32c] sm:$0xf]
                %393 = vst [vmem:[%s177 + $0x1ac] sm:$0xf] %v392
                %v394 = vld [vmem:[%s176 + $0x330] sm:$0xf]
                %395 = vst [vmem:[%s177 + $0x1b0] sm:$0xf] %v394
                %v396 = vld [vmem:[%s176 + $0x334] sm:$0xf]
                %397 = vst [vmem:[%s177 + $0x1b4] sm:$0xf] %v396
                %v398 = vld [vmem:[%s176 + $0x338] sm:$0xf]
                %399 = vst [vmem:[%s177 + $0x1b8] sm:$0xf] %v398
                %v400 = vld [vmem:[%s176 + $0x33c] sm:$0xf]
                %401 = vst [vmem:[%s177 + $0x1bc] sm:$0xf] %v400
                %v402 = vld [vmem:[%s176 + $0x380] sm:$0xf]
                %403 = vst [vmem:[%s177 + $0x1c0] sm:$0xf] %v402
                %v404 = vld [vmem:[%s176 + $0x384] sm:$0xf]
                %405 = vst [vmem:[%s177 + $0x1c4] sm:$0xf] %v404
                %v406 = vld [vmem:[%s176 + $0x388] sm:$0xf]
                %407 = vst [vmem:[%s177 + $0x1c8] sm:$0xf] %v406
                %v408 = vld [vmem:[%s176 + $0x38c] sm:$0xf]
                %409 = vst [vmem:[%s177 + $0x1cc] sm:$0xf] %v408
                %v410 = vld [vmem:[%s176 + $0x390] sm:$0xf]
                %411 = vst [vmem:[%s177 + $0x1d0] sm:$0xf] %v410
                %v412 = vld [vmem:[%s176 + $0x394] sm:$0xf]
                %413 = vst [vmem:[%s177 + $0x1d4] sm:$0xf] %v412
                %v414 = vld [vmem:[%s176 + $0x398] sm:$0xf]
                %415 = vst [vmem:[%s177 + $0x1d8] sm:$0xf] %v414
                %v416 = vld [vmem:[%s176 + $0x39c] sm:$0xf]
                %417 = vst [vmem:[%s177 + $0x1dc] sm:$0xf] %v416
                %v418 = vld [vmem:[%s176 + $0x3a0] sm:$0xf]
                %419 = vst [vmem:[%s177 + $0x1e0] sm:$0xf] %v418
                %v420 = vld [vmem:[%s176 + $0x3a4] sm:$0xf]
                %421 = vst [vmem:[%s177 + $0x1e4] sm:$0xf] %v420
                %v422 = vld [vmem:[%s176 + $0x3a8] sm:$0xf]
                %423 = vst [vmem:[%s177 + $0x1e8] sm:$0xf] %v422
                %v424 = vld [vmem:[%s176 + $0x3ac] sm:$0xf]
                %425 = vst [vmem:[%s177 + $0x1ec] sm:$0xf] %v424
                %v426 = vld [vmem:[%s176 + $0x3b0] sm:$0xf]
                %427 = vst [vmem:[%s177 + $0x1f0] sm:$0xf] %v426
                %v428 = vld [vmem:[%s176 + $0x3b4] sm:$0xf]
                %429 = vst [vmem:[%s177 + $0x1f4] sm:$0xf] %v428
                %v430 = vld [vmem:[%s176 + $0x3b8] sm:$0xf]
                %431 = vst [vmem:[%s177 + $0x1f8] sm:$0xf] %v430
                %v432 = vld [vmem:[%s176 + $0x3bc] sm:$0xf]
                %433 = vst [vmem:[%s177 + $0x1fc] sm:$0xf] %v432
                %v434 = vld [vmem:[%s176 + $0x400] sm:$0xf]
                %435 = vst [vmem:[%s177 + $0x200] sm:$0xf] %v434
                %v436 = vld [vmem:[%s176 + $0x404] sm:$0xf]
                %437 = vst [vmem:[%s177 + $0x204] sm:$0xf] %v436
                %v438 = vld [vmem:[%s176 + $0x408] sm:$0xf]
                %439 = vst [vmem:[%s177 + $0x208] sm:$0xf] %v438
                %v440 = vld [vmem:[%s176 + $0x40c] sm:$0xf]
                %441 = vst [vmem:[%s177 + $0x20c] sm:$0xf] %v440
                %v442 = vld [vmem:[%s176 + $0x410] sm:$0xf]
                %443 = vst [vmem:[%s177 + $0x210] sm:$0xf] %v442
                %v444 = vld [vmem:[%s176 + $0x414] sm:$0xf]
                %445 = vst [vmem:[%s177 + $0x214] sm:$0xf] %v444
                %v446 = vld [vmem:[%s176 + $0x418] sm:$0xf]
                %447 = vst [vmem:[%s177 + $0x218] sm:$0xf] %v446
                %v448 = vld [vmem:[%s176 + $0x41c] sm:$0xf]
                %449 = vst [vmem:[%s177 + $0x21c] sm:$0xf] %v448
                %v450 = vld [vmem:[%s176 + $0x420] sm:$0xf]
                %451 = vst [vmem:[%s177 + $0x220] sm:$0xf] %v450
                %v452 = vld [vmem:[%s176 + $0x424] sm:$0xf]
                %453 = vst [vmem:[%s177 + $0x224] sm:$0xf] %v452
                %v454 = vld [vmem:[%s176 + $0x428] sm:$0xf]
                %455 = vst [vmem:[%s177 + $0x228] sm:$0xf] %v454
                %v456 = vld [vmem:[%s176 + $0x42c] sm:$0xf]
                %457 = vst [vmem:[%s177 + $0x22c] sm:$0xf] %v456
                %v458 = vld [vmem:[%s176 + $0x430] sm:$0xf]
                %459 = vst [vmem:[%s177 + $0x230] sm:$0xf] %v458
                %v460 = vld [vmem:[%s176 + $0x434] sm:$0xf]
                %461 = vst [vmem:[%s177 + $0x234] sm:$0xf] %v460
                %v462 = vld [vmem:[%s176 + $0x438] sm:$0xf]
                %463 = vst [vmem:[%s177 + $0x238] sm:$0xf] %v462
                %v464 = vld [vmem:[%s176 + $0x43c] sm:$0xf]
                %465 = vst [vmem:[%s177 + $0x23c] sm:$0xf] %v464
              $region41: #{tpu_custom_call.1} parent=35 // loop_footer
                %s175 = sadd.s32 1, %s171
              $region42: #{tpu_custom_call.1} parent=35 // loop_footer_branch
                %170 = sbr.rel target = $region38
              $region43: #{tpu_custom_call.1} parent=35 // loop_exit
                _
            $region36: #{tpu_custom_call.1} parent=27 // pred_fallthru
              _
          $region28: #{tpu_custom_call.1} parent=23 // pred_fallthru
            _
          %773 = vnop
        $region24: #{tpu_custom_call.1} parent=19 // pred_fallthru
          _
        // Predicated region
        $region62: #{tpu_custom_call.1} parent=19 // pred_check
          %p774 = pneg %p93
        $region63: #{tpu_custom_call.1} parent=19 // pred_check_branch
          %776 = sbr.rel (%p774) target = $region65
        $region64: #{tpu_custom_call.1} parent=19 // pred_region
          %s777 = smul.u32 16, %s17
          %p778 = scmp.lt.s32.totalorder %s777, 31
          %s779 = scalar_select %p778, %s777, 31
          %s780 = smul.addr %s779, 8
          %s781 = scalar_lea.vmem %s2, %s780
          %s782 = smul.u32 16, %s17
        $region65: #{tpu_custom_call.1} parent=19 // pred_fallthru
          _
      $region20: #{tpu_custom_call.1} parent=5 // pred_fallthru
        _
      %p783 = scmp.le.s32.totalorder 1, %s9
      %p784 = scmp.lt.s32.totalorder %s9, 3
      %p785 = pnand %p783, %p784
      %p786 = pneg %p785
      // Predicated region
      $region66: #{tpu_custom_call.1} parent=5 // pred_check
        _
      $region67: #{tpu_custom_call.1} parent=5 // pred_check_branch
        %788 = sbr.rel (%p785) target = $region69
      $region68: #{tpu_custom_call.1} parent=5 // pred_region
        %s789 = ssub.s32 %s9, 1
        %s790 = sand.u32 %s60, 1
        %s791 = sand.u32 %s60, 1
        %s792 = smul.addr %s791, 576
        %s793 = scalar_lea.vmem [#allocation2], %s792
        // Predicated region
        $region70: #{tpu_custom_call.1} parent=68 // pred_check
          %p794 = pneg %p73
        $region71: #{tpu_custom_call.1} parent=68 // pred_check_branch
          %796 = sbr.rel (%p794) target = $region73
        $region72: #{tpu_custom_call.1} parent=68 // pred_region
          _
        $region73: #{tpu_custom_call.1} parent=68 // pred_fallthru
          _
        %p797 = scmp.lt.s32.totalorder %s18, 0
        %s798 = scalar_select %p797, %s18, 0
        %s799 = smul.addr %s798, 4
        %s800 = scalar_lea.vmem %s0, %s799
        %p801 = pneg %p47
        %p802 = pneg %p44
        %s803 = sand.u32 %s60, 1
        %s804 = sand.u32 %s60, 1
        %s805 = smul.addr %s804, 576
        %s806 = scalar_lea.vmem [#allocation2], %s805
        %p807 = pneg %p73
        %p808 = pneg %p70
        %s809 = smul.u32 16, %s19
        %p810 = scmp.lt.s32.totalorder %s809, 31
        %s811 = scalar_select %p810, %s809, 31
        %s812 = smul.addr %s811, 8
        %s813 = scalar_lea.vmem %s2, %s812
        %p814 = pneg %p99
        %p815 = pneg %p96
        %p816 = pneg %p127
        %p817 = pneg %p124
        %s818 = smul.u32 16, %s19
        %p819 = scmp.lt.s32.totalorder %s18, 0
        %s820 = scalar_select %p819, %s18, 0
        %p821 = scmp.lt.s32.totalorder %s818, 31
        %s822 = scalar_select %p821, %s818, 31
        %s823 = smul.addr %s820, 32
        %s824 = sadd.s32 %s822, %s823
        %s825 = smul.addr %s824, 8
        %s826 = scalar_lea.vmem %s3, %s825
        %p827 = scmp.lt.s32.totalorder %s18, 0
        %s828 = scalar_select %p827, %s18, 0
        %s829 = smul.addr %s828, 4
        %s830 = scalar_lea.vmem %s0, %s829
        %s831 = smul.u32 16, %s19
        %s832 = smul.u32 16, %s19
        %p833 = scmp.lt.s32.totalorder %s832, 31
        %s834 = scalar_select %p833, %s832, 31
        %s835 = smul.addr %s834, 8
        %s836 = scalar_lea.vmem %s2, %s835
        %s837 = smul.u32 16, %s19
        %s838 = smul.u32 16, %s19
        %p839 = scmp.lt.s32.totalorder %s18, 0
        %s840 = scalar_select %p839, %s18, 0
        %p841 = scmp.lt.s32.totalorder %s838, 31
        %s842 = scalar_select %p841, %s838, 31
        %s843 = smul.addr %s840, 32
        %s844 = sadd.s32 %s842, %s843
        %s845 = smul.addr %s844, 8
        %s846 = scalar_lea.vmem %s3, %s845
        %s847 = smul.u32 16, %s19
        %v849 = vld [vmem:[%s830] sm:$0xf]
        %v850 = vld [vmem:[%s793] sm:$0xf]
        %v851 = vld [vmem:[%s793 + $0x4] sm:$0xf]
        %v852 = vld [vmem:[%s793 + $0x8] sm:$0xf]
        %v853 = vld [vmem:[%s793 + $0xc] sm:$0xf]
        %v854 = vld [vmem:[%s793 + $0x10] sm:$0xf]
        %v855 = vld [vmem:[%s793 + $0x14] sm:$0xf]
        %v856 = vld [vmem:[%s793 + $0x18] sm:$0xf]
        %v857 = vld [vmem:[%s793 + $0x1c] sm:$0xf]
        %v858 = vld [vmem:[%s793 + $0x20] sm:$0xf]
        %v859 = vld [vmem:[%s793 + $0x24] sm:$0xf]
        %v860 = vld [vmem:[%s793 + $0x28] sm:$0xf]
        %v861 = vld [vmem:[%s793 + $0x2c] sm:$0xf]
        %v862 = vld [vmem:[%s793 + $0x30] sm:$0xf]
        %v863 = vld [vmem:[%s793 + $0x34] sm:$0xf]
        %v864 = vld [vmem:[%s793 + $0x38] sm:$0xf]
        %v865 = vld [vmem:[%s793 + $0x3c] sm:$0xf]
        %s866 = scalar_lea.vmem %s793, 64 [#allocation2]
        %v867 = vld [vmem:[%s866] sm:$0xf]
        %v868 = vld [vmem:[%s866 + $0x4] sm:$0xf]
        %v869 = vld [vmem:[%s866 + $0x8] sm:$0xf]
        %v870 = vld [vmem:[%s866 + $0xc] sm:$0xf]
        %v871 = vld [vmem:[%s866 + $0x10] sm:$0xf]
        %v872 = vld [vmem:[%s866 + $0x14] sm:$0xf]
        %v873 = vld [vmem:[%s866 + $0x18] sm:$0xf]
        %v874 = vld [vmem:[%s866 + $0x1c] sm:$0xf]
        %v875 = vld [vmem:[%s866 + $0x20] sm:$0xf]
        %v876 = vld [vmem:[%s866 + $0x24] sm:$0xf]
        %v877 = vld [vmem:[%s866 + $0x28] sm:$0xf]
        %v878 = vld [vmem:[%s866 + $0x2c] sm:$0xf]
        %v879 = vld [vmem:[%s866 + $0x30] sm:$0xf]
        %v880 = vld [vmem:[%s866 + $0x34] sm:$0xf]
        %v881 = vld [vmem:[%s866 + $0x38] sm:$0xf]
        %v882 = vld [vmem:[%s866 + $0x3c] sm:$0xf]
        %v899 = vunpack.c.l.b16 %v867
        %v900 = vunpack.c.l.b16 %v868
        %v901 = vunpack.c.l.b16 %v869
        %v902 = vunpack.c.l.b16 %v870
        %v903 = vunpack.c.l.b16 %v871
        %v904 = vunpack.c.l.b16 %v872
        %v905 = vunpack.c.l.b16 %v873
        %v906 = vunpack.c.l.b16 %v874
        %v907 = vunpack.c.l.b16 %v875
        %v908 = vunpack.c.l.b16 %v876
        %v909 = vunpack.c.l.b16 %v877
        %v910 = vunpack.c.l.b16 %v878
        %v911 = vunpack.c.l.b16 %v879
        %v912 = vunpack.c.l.b16 %v880
        %v913 = vunpack.c.l.b16 %v881
        %v914 = vunpack.c.l.b16 %v882
        %v915 = vpack.c.b16 %v900, %v899
        %v916 = vpack.c.b16 %v902, %v901
        %v917 = vpack.c.b16 %v904, %v903
        %v918 = vpack.c.b16 %v906, %v905
        %v919 = vpack.c.b16 %v908, %v907
        %v920 = vpack.c.b16 %v910, %v909
        %v921 = vpack.c.b16 %v912, %v911
        %v922 = vpack.c.b16 %v914, %v913
        %v924 = vunpack.c.l.b16 %v849
        %v925 = vpack.c.b16 %v924, %v924
        %926 = vrot.lane.b32.xlu0 %v925, 127
        %v927 = vpop.permute.xlu0 %926
        %vm928 = vcmask 64512
        %v930 = vsel %vm928, %v915, 0
        %v933 = vsel %vm928, %v916, 0
        %v936 = vsel %vm928, %v917, 0
        %v939 = vsel %vm928, %v918, 0
        %v942 = vsel %vm928, %v919, 0
        %v945 = vsel %vm928, %v920, 0
        %v948 = vsel %vm928, %v921, 0
        %v951 = vsel %vm928, %v922, 0
        %vm953 = vcmask 1043456
        %v955 = vsel %vm953, %v927, 0
        %957 = vmatprep.subr.bf16.mxu0 0
        %958 = vmatpush1.bf16.msra.mxu0 %v955
        %959 = vmatprep.subr.bf16.mxu0 0
        %960 = vmatpush1.bf16.msra.mxu0 0
        %961 = vmatprep.subr.bf16.mxu0 0
        %962 = vmatpush1.bf16.msra.mxu0 0
        %963 = vmatprep.subr.bf16.mxu0 0
        %964 = vmatpush1.bf16.msra.mxu0 0
        %965 = vmatprep.subr.bf16.mxu0 0
        %966 = vmatpush1.bf16.msra.mxu0 0
        %967 = vmatprep.subr.bf16.mxu0 0
        %968 = vmatpush1.bf16.msra.mxu0 0
        %969 = vmatprep.subr.bf16.mxu0 0
        %970 = vmatpush1.bf16.msra.mxu0 0
        %971 = vmatprep.subr.bf16.mxu0 0
        %972 = vmatpush1.bf16.msra.mxu0 0
        %973 = vmatprep.subr.bf16.mxu0 0
        %974 = vmatpush1.bf16.msra.mxu0 0
        %975 = vmatprep.subr.bf16.mxu0 0
        %976 = vmatpush1.bf16.msra.mxu0 0
        %977 = vmatprep.subr.bf16.mxu0 0
        %978 = vmatpush1.bf16.msra.mxu0 0
        %979 = vmatprep.subr.bf16.mxu0 0
        %980 = vmatpush1.bf16.msra.mxu0 0
        %981 = vmatprep.subr.bf16.mxu0 0
        %982 = vmatpush1.bf16.msra.mxu0 0
        %983 = vmatprep.subr.bf16.mxu0 0
        %984 = vmatpush1.bf16.msra.mxu0 0
        %985 = vmatprep.subr.bf16.mxu0 0
        %986 = vmatpush1.bf16.msra.mxu0 0
        %987 = vmatprep.subr.bf16.mxu0 0
        %988 = vmatpush1.bf16.msra.mxu0 0
        %989 = vmatprep.mubr.bf16.mxu0 0
        %990 = vmatmul.mubr.bf16.gmra.mrb[0].mxu0 %v930
        %v991 = vpop.f32.mrb[0].mxu0
        %v992 = vadd.f32 0.0, %v991
        %v993 = vpop.f32.mrb[0].mxu0
        %v994 = vpop.f32.mrb[0].mxu0
        %v995 = vadd.f32 0.0, %v994
        %v996 = vpop.f32.mrb[0].mxu0
        %997 = vmatprep.mubr.bf16.mxu0 0
        %998 = vmatmul.mubr.bf16.gmra.mrb[0].mxu0 %v933
        %v999 = vpop.f32.mrb[0].mxu0
        %v1000 = vadd.f32 0.0, %v999
        %v1001 = vpop.f32.mrb[0].mxu0
        %v1002 = vpop.f32.mrb[0].mxu0
        %v1003 = vadd.f32 0.0, %v1002
        %v1004 = vpop.f32.mrb[0].mxu0
        %1005 = vmatprep.mubr.bf16.mxu0 0
        %1006 = vmatmul.mubr.bf16.gmra.mrb[0].mxu0 %v936
        %v1007 = vpop.f32.mrb[0].mxu0
        %v1008 = vadd.f32 0.0, %v1007
        %v1009 = vpop.f32.mrb[0].mxu0
        %v1010 = vpop.f32.mrb[0].mxu0
        %v1011 = vadd.f32 0.0, %v1010
        %v1012 = vpop.f32.mrb[0].mxu0
        %1013 = vmatprep.mubr.bf16.mxu0 0
        %1014 = vmatmul.mubr.bf16.gmra.mrb[0].mxu0 %v939
        %v1015 = vpop.f32.mrb[0].mxu0
        %v1016 = vadd.f32 0.0, %v1015
        %v1017 = vpop.f32.mrb[0].mxu0
        %v1018 = vpop.f32.mrb[0].mxu0
        %v1019 = vadd.f32 0.0, %v1018
        %v1020 = vpop.f32.mrb[0].mxu0
        %1021 = vmatprep.mubr.bf16.mxu0 0
        %1022 = vmatmul.mubr.bf16.gmra.mrb[0].mxu0 %v942
        %v1023 = vpop.f32.mrb[0].mxu0
        %v1024 = vadd.f32 0.0, %v1023
        %v1025 = vpop.f32.mrb[0].mxu0
        %v1026 = vpop.f32.mrb[0].mxu0
        %v1027 = vadd.f32 0.0, %v1026
        %v1028 = vpop.f32.mrb[0].mxu0
        %1029 = vmatprep.mubr.bf16.mxu0 0
        %1030 = vmatmul.mubr.bf16.gmra.mrb[0].mxu0 %v945
        %v1031 = vpop.f32.mrb[0].mxu0
        %v1032 = vadd.f32 0.0, %v1031
        %v1033 = vpop.f32.mrb[0].mxu0
        %v1034 = vpop.f32.mrb[0].mxu0
        %v1035 = vadd.f32 0.0, %v1034
        %v1036 = vpop.f32.mrb[0].mxu0
        %1037 = vmatprep.mubr.bf16.mxu0 0
        %1038 = vmatmul.mubr.bf16.gmra.mrb[0].mxu0 %v948
        %v1039 = vpop.f32.mrb[0].mxu0
        %v1040 = vadd.f32 0.0, %v1039
        %v1041 = vpop.f32.mrb[0].mxu0
        %v1042 = vpop.f32.mrb[0].mxu0
        %v1043 = vadd.f32 0.0, %v1042
        %v1044 = vpop.f32.mrb[0].mxu0
        %1045 = vmatprep.mubr.bf16.mxu0 0
        %1046 = vmatmul.mubr.bf16.gmra.mrb[0].mxu0 %v951
        %v1047 = vpop.f32.mrb[0].mxu0
        %v1048 = vadd.f32 0.0, %v1047
        %v1049 = vpop.f32.mrb[0].mxu0
        %v1050 = vpop.f32.mrb[0].mxu0
        %v1051 = vadd.f32 0.0, %v1050
        %v1052 = vpop.f32.mrb[0].mxu0
        %1053 = vdwg.mxu0
        %v1070 = vunpack.c.l.b16 %v850
        %v1071 = vunpack.c.l.b16 %v851
        %v1072 = vunpack.c.l.b16 %v852
        %v1073 = vunpack.c.l.b16 %v853
        %v1074 = vunpack.c.l.b16 %v854
        %v1075 = vunpack.c.l.b16 %v855
        %v1076 = vunpack.c.l.b16 %v856
        %v1077 = vunpack.c.l.b16 %v857
        %v1078 = vunpack.c.l.b16 %v858
        %v1079 = vunpack.c.l.b16 %v859
        %v1080 = vunpack.c.l.b16 %v860
        %v1081 = vunpack.c.l.b16 %v861
        %v1082 = vunpack.c.l.b16 %v862
        %v1083 = vunpack.c.l.b16 %v863
        %v1084 = vunpack.c.l.b16 %v864
        %v1085 = vunpack.c.l.b16 %v865
        %v1086 = vpack.c.b16 %v1071, %v1070
        %v1087 = vpack.c.b16 %v1073, %v1072
        %v1088 = vpack.c.b16 %v1075, %v1074
        %v1089 = vpack.c.b16 %v1077, %v1076
        %v1090 = vpack.c.b16 %v1079, %v1078
        %v1091 = vpack.c.b16 %v1081, %v1080
        %v1092 = vpack.c.b16 %v1083, %v1082
        %v1093 = vpack.c.b16 %v1085, %v1084
        %v1095 = vsel %vm928, %v1086, 0
        %v1098 = vsel %vm928, %v1087, 0
        %v1101 = vsel %vm928, %v1088, 0
        %v1104 = vsel %vm928, %v1089, 0
        %v1107 = vsel %vm928, %v1090, 0
        %v1110 = vsel %vm928, %v1091, 0
        %v1113 = vsel %vm928, %v1092, 0
        %v1116 = vsel %vm928, %v1093, 0
        %v1119 = vsel %vm953, %v849, 0
        %1121 = vmatprep.subr.bf16.mxu0 0
        %1122 = vmatpush1.bf16.msra.mxu0 %v1119
        %1123 = vmatprep.subr.bf16.mxu0 0
        %1124 = vmatpush1.bf16.msra.mxu0 0
        %1125 = vmatprep.subr.bf16.mxu0 0
        %1126 = vmatpush1.bf16.msra.mxu0 0
        %1127 = vmatprep.subr.bf16.mxu0 0
        %1128 = vmatpush1.bf16.msra.mxu0 0
        %1129 = vmatprep.subr.bf16.mxu0 0
        %1130 = vmatpush1.bf16.msra.mxu0 0
        %1131 = vmatprep.subr.bf16.mxu0 0
        %1132 = vmatpush1.bf16.msra.mxu0 0
        %1133 = vmatprep.subr.bf16.mxu0 0
        %1134 = vmatpush1.bf16.msra.mxu0 0
        %1135 = vmatprep.subr.bf16.mxu0 0
        %1136 = vmatpush1.bf16.msra.mxu0 0
        %1137 = vmatprep.subr.bf16.mxu0 0
        %1138 = vmatpush1.bf16.msra.mxu0 0
        %1139 = vmatprep.subr.bf16.mxu0 0
        %1140 = vmatpush1.bf16.msra.mxu0 0
        %1141 = vmatprep.subr.bf16.mxu0 0
        %1142 = vmatpush1.bf16.msra.mxu0 0
        %1143 = vmatprep.subr.bf16.mxu0 0
        %1144 = vmatpush1.bf16.msra.mxu0 0
        %1145 = vmatprep.subr.bf16.mxu0 0
        %1146 = vmatpush1.bf16.msra.mxu0 0
        %1147 = vmatprep.subr.bf16.mxu0 0
        %1148 = vmatpush1.bf16.msra.mxu0 0
        %1149 = vmatprep.subr.bf16.mxu0 0
        %1150 = vmatpush1.bf16.msra.mxu0 0
        %1151 = vmatprep.subr.bf16.mxu0 0
        %1152 = vmatpush1.bf16.msra.mxu0 0
        %1153 = vmatprep.mubr.bf16.mxu0 0
        %1154 = vmatmul.mubr.bf16.gmra.mrb[0].mxu0 %v1095
        %v1155 = vpop.f32.mrb[0].mxu0
        %v1156 = vadd.f32 %v992, %v1155
        %v1157 = vpop.f32.mrb[0].mxu0
        %v1158 = vpop.f32.mrb[0].mxu0
        %v1159 = vadd.f32 %v995, %v1158
        %v1160 = vpop.f32.mrb[0].mxu0
        %1161 = vmatprep.mubr.bf16.mxu0 0
        %1162 = vmatmul.mubr.bf16.gmra.mrb[0].mxu0 %v1098
        %v1163 = vpop.f32.mrb[0].mxu0
        %v1164 = vadd.f32 %v1000, %v1163
        %v1165 = vpop.f32.mrb[0].mxu0
        %v1166 = vpop.f32.mrb[0].mxu0
        %v1167 = vadd.f32 %v1003, %v1166
        %v1168 = vpop.f32.mrb[0].mxu0
        %1169 = vmatprep.mubr.bf16.mxu0 0
        %1170 = vmatmul.mubr.bf16.gmra.mrb[0].mxu0 %v1101
        %v1171 = vpop.f32.mrb[0].mxu0
        %v1172 = vadd.f32 %v1008, %v1171
        %v1173 = vpop.f32.mrb[0].mxu0
        %v1174 = vpop.f32.mrb[0].mxu0
        %v1175 = vadd.f32 %v1011, %v1174
        %v1176 = vpop.f32.mrb[0].mxu0
        %1177 = vmatprep.mubr.bf16.mxu0 0
        %1178 = vmatmul.mubr.bf16.gmra.mrb[0].mxu0 %v1104
        %v1179 = vpop.f32.mrb[0].mxu0
        %v1180 = vadd.f32 %v1016, %v1179
        %v1181 = vpop.f32.mrb[0].mxu0
        %v1182 = vpop.f32.mrb[0].mxu0
        %v1183 = vadd.f32 %v1019, %v1182
        %v1184 = vpop.f32.mrb[0].mxu0
        %1185 = vmatprep.mubr.bf16.mxu0 0
        %1186 = vmatmul.mubr.bf16.gmra.mrb[0].mxu0 %v1107
        %v1187 = vpop.f32.mrb[0].mxu0
        %v1188 = vadd.f32 %v1024, %v1187
        %v1189 = vpop.f32.mrb[0].mxu0
        %v1190 = vpop.f32.mrb[0].mxu0
        %v1191 = vadd.f32 %v1027, %v1190
        %v1192 = vpop.f32.mrb[0].mxu0
        %1193 = vmatprep.mubr.bf16.mxu0 0
        %1194 = vmatmul.mubr.bf16.gmra.mrb[0].mxu0 %v1110
        %v1195 = vpop.f32.mrb[0].mxu0
        %v1196 = vadd.f32 %v1032, %v1195
        %v1197 = vpop.f32.mrb[0].mxu0
        %v1198 = vpop.f32.mrb[0].mxu0
        %v1199 = vadd.f32 %v1035, %v1198
        %v1200 = vpop.f32.mrb[0].mxu0
        %1201 = vmatprep.mubr.bf16.mxu0 0
        %1202 = vmatmul.mubr.bf16.gmra.mrb[0].mxu0 %v1113
        %v1203 = vpop.f32.mrb[0].mxu0
        %v1204 = vadd.f32 %v1040, %v1203
        %v1205 = vpop.f32.mrb[0].mxu0
        %v1206 = vpop.f32.mrb[0].mxu0
        %v1207 = vadd.f32 %v1043, %v1206
        %v1208 = vpop.f32.mrb[0].mxu0
        %1209 = vmatprep.mubr.bf16.mxu0 0
        %1210 = vmatmul.mubr.bf16.gmra.mrb[0].mxu0 %v1116
        %v1211 = vpop.f32.mrb[0].mxu0
        %v1212 = vadd.f32 %v1048, %v1211
        %v1213 = vpop.f32.mrb[0].mxu0
        %v1214 = vpop.f32.mrb[0].mxu0
        %v1215 = vadd.f32 %v1051, %v1214
        %v1216 = vpop.f32.mrb[0].mxu0
        %1217 = vdwg.mxu0
        %s1218 = scalar_lea.vmem %s793, 128 [#allocation2]
        %v1219 = vld [vmem:[%s1218] sm:$0xf]
        %v1220 = vld [vmem:[%s1218 + $0x4] sm:$0xf]
        %v1221 = vld [vmem:[%s1218 + $0x8] sm:$0xf]
        %v1222 = vld [vmem:[%s1218 + $0xc] sm:$0xf]
        %v1223 = vld [vmem:[%s1218 + $0x10] sm:$0xf]
        %v1224 = vld [vmem:[%s1218 + $0x14] sm:$0xf]
        %v1225 = vld [vmem:[%s1218 + $0x18] sm:$0xf]
        %v1226 = vld [vmem:[%s1218 + $0x1c] sm:$0xf]
        %v1227 = vld [vmem:[%s1218 + $0x20] sm:$0xf]
        %v1228 = vld [vmem:[%s1218 + $0x24] sm:$0xf]
        %v1229 = vld [vmem:[%s1218 + $0x28] sm:$0xf]
        %v1230 = vld [vmem:[%s1218 + $0x2c] sm:$0xf]
        %v1231 = vld [vmem:[%s1218 + $0x30] sm:$0xf]
        %v1232 = vld [vmem:[%s1218 + $0x34] sm:$0xf]
        %v1233 = vld [vmem:[%s1218 + $0x38] sm:$0xf]
        %v1234 = vld [vmem:[%s1218 + $0x3c] sm:$0xf]
        %v1251 = vunpack.c.l.b16 %v1219
        %v1252 = vunpack.c.l.b16 %v1220
        %v1253 = vunpack.c.l.b16 %v1221
        %v1254 = vunpack.c.l.b16 %v1222
        %v1255 = vunpack.c.l.b16 %v1223
        %v1256 = vunpack.c.l.b16 %v1224
        %v1257 = vunpack.c.l.b16 %v1225
        %v1258 = vunpack.c.l.b16 %v1226
        %v1259 = vunpack.c.l.b16 %v1227
        %v1260 = vunpack.c.l.b16 %v1228
        %v1261 = vunpack.c.l.b16 %v1229
        %v1262 = vunpack.c.l.b16 %v1230
        %v1263 = vunpack.c.l.b16 %v1231
        %v1264 = vunpack.c.l.b16 %v1232
        %v1265 = vunpack.c.l.b16 %v1233
        %v1266 = vunpack.c.l.b16 %v1234
        %v1267 = vpack.c.b16 %v1252, %v1251
        %v1268 = vpack.c.b16 %v1254, %v1253
        %v1269 = vpack.c.b16 %v1256, %v1255
        %v1270 = vpack.c.b16 %v1258, %v1257
        %v1271 = vpack.c.b16 %v1260, %v1259
        %v1272 = vpack.c.b16 %v1262, %v1261
        %v1273 = vpack.c.b16 %v1264, %v1263
        %v1274 = vpack.c.b16 %v1266, %v1265
        %1275 = vrot.lane.b32.xlu0 %v925, 126
        %v1276 = vpop.permute.xlu0 %1275
        %v1278 = vsel %vm928, %v1267, 0
        %v1281 = vsel %vm928, %v1268, 0
        %v1284 = vsel %vm928, %v1269, 0
        %v1287 = vsel %vm928, %v1270, 0
        %v1290 = vsel %vm928, %v1271, 0
        %v1293 = vsel %vm928, %v1272, 0
        %v1296 = vsel %vm928, %v1273, 0
        %v1299 = vsel %vm928, %v1274, 0
        %v1302 = vsel %vm953, %v1276, 0
        %1304 = vmatprep.subr.bf16.mxu0 0
        %1305 = vmatpush1.bf16.msra.mxu0 %v1302
        %1306 = vmatprep.subr.bf16.mxu0 0
        %1307 = vmatpush1.bf16.msra.mxu0 0
        %1308 = vmatprep.subr.bf16.mxu0 0
        %1309 = vmatpush1.bf16.msra.mxu0 0
        %1310 = vmatprep.subr.bf16.mxu0 0
        %1311 = vmatpush1.bf16.msra.mxu0 0
        %1312 = vmatprep.subr.bf16.mxu0 0
        %1313 = vmatpush1.bf16.msra.mxu0 0
        %1314 = vmatprep.subr.bf16.mxu0 0
        %1315 = vmatpush1.bf16.msra.mxu0 0
        %1316 = vmatprep.subr.bf16.mxu0 0
        %1317 = vmatpush1.bf16.msra.mxu0 0
        %1318 = vmatprep.subr.bf16.mxu0 0
        %1319 = vmatpush1.bf16.msra.mxu0 0
        %1320 = vmatprep.subr.bf16.mxu0 0
        %1321 = vmatpush1.bf16.msra.mxu0 0
        %1322 = vmatprep.subr.bf16.mxu0 0
        %1323 = vmatpush1.bf16.msra.mxu0 0
        %1324 = vmatprep.subr.bf16.mxu0 0
        %1325 = vmatpush1.bf16.msra.mxu0 0
        %1326 = vmatprep.subr.bf16.mxu0 0
        %1327 = vmatpush1.bf16.msra.mxu0 0
        %1328 = vmatprep.subr.bf16.mxu0 0
        %1329 = vmatpush1.bf16.msra.mxu0 0
        %1330 = vmatprep.subr.bf16.mxu0 0
        %1331 = vmatpush1.bf16.msra.mxu0 0
        %1332 = vmatprep.subr.bf16.mxu0 0
        %1333 = vmatpush1.bf16.msra.mxu0 0
        %1334 = vmatprep.subr.bf16.mxu0 0
        %1335 = vmatpush1.bf16.msra.mxu0 0
        %1336 = vmatprep.mubr.bf16.mxu0 0
        %1337 = vmatmul.mubr.bf16.gmra.mrb[0].mxu0 %v1278
        %v1338 = vpop.f32.mrb[0].mxu0
        %v1339 = vadd.f32 0.0, %v1338
        %v1340 = vpop.f32.mrb[0].mxu0
        %v1341 = vpop.f32.mrb[0].mxu0
        %v1342 = vadd.f32 0.0, %v1341
        %v1343 = vpop.f32.mrb[0].mxu0
        %1344 = vmatprep.mubr.bf16.mxu0 0
        %1345 = vmatmul.mubr.bf16.gmra.mrb[0].mxu0 %v1281
        %v1346 = vpop.f32.mrb[0].mxu0
        %v1347 = vadd.f32 0.0, %v1346
        %v1348 = vpop.f32.mrb[0].mxu0
        %v1349 = vpop.f32.mrb[0].mxu0
        %v1350 = vadd.f32 0.0, %v1349
        %v1351 = vpop.f32.mrb[0].mxu0
        %1352 = vmatprep.mubr.bf16.mxu0 0
        %1353 = vmatmul.mubr.bf16.gmra.mrb[0].mxu0 %v1284
        %v1354 = vpop.f32.mrb[0].mxu0
        %v1355 = vadd.f32 0.0, %v1354
        %v1356 = vpop.f32.mrb[0].mxu0
        %v1357 = vpop.f32.mrb[0].mxu0
        %v1358 = vadd.f32 0.0, %v1357
        %v1359 = vpop.f32.mrb[0].mxu0
        %1360 = vmatprep.mubr.bf16.mxu0 0
        %1361 = vmatmul.mubr.bf16.gmra.mrb[0].mxu0 %v1287
        %v1362 = vpop.f32.mrb[0].mxu0
        %v1363 = vadd.f32 0.0, %v1362
        %v1364 = vpop.f32.mrb[0].mxu0
        %v1365 = vpop.f32.mrb[0].mxu0
        %v1366 = vadd.f32 0.0, %v1365
        %v1367 = vpop.f32.mrb[0].mxu0
        %1368 = vmatprep.mubr.bf16.mxu0 0
        %1369 = vmatmul.mubr.bf16.gmra.mrb[0].mxu0 %v1290
        %v1370 = vpop.f32.mrb[0].mxu0
        %v1371 = vadd.f32 0.0, %v1370
        %v1372 = vpop.f32.mrb[0].mxu0
        %v1373 = vpop.f32.mrb[0].mxu0
        %v1374 = vadd.f32 0.0, %v1373
        %v1375 = vpop.f32.mrb[0].mxu0
        %1376 = vmatprep.mubr.bf16.mxu0 0
        %1377 = vmatmul.mubr.bf16.gmra.mrb[0].mxu0 %v1293
        %v1378 = vpop.f32.mrb[0].mxu0
        %v1379 = vadd.f32 0.0, %v1378
        %v1380 = vpop.f32.mrb[0].mxu0
        %v1381 = vpop.f32.mrb[0].mxu0
        %v1382 = vadd.f32 0.0, %v1381
        %v1383 = vpop.f32.mrb[0].mxu0
        %1384 = vmatprep.mubr.bf16.mxu0 0
        %1385 = vmatmul.mubr.bf16.gmra.mrb[0].mxu0 %v1296
        %v1386 = vpop.f32.mrb[0].mxu0
        %v1387 = vadd.f32 0.0, %v1386
        %v1388 = vpop.f32.mrb[0].mxu0
        %v1389 = vpop.f32.mrb[0].mxu0
        %v1390 = vadd.f32 0.0, %v1389
        %v1391 = vpop.f32.mrb[0].mxu0
        %1392 = vmatprep.mubr.bf16.mxu0 0
        %1393 = vmatmul.mubr.bf16.gmra.mrb[0].mxu0 %v1299
        %v1394 = vpop.f32.mrb[0].mxu0
        %v1395 = vadd.f32 0.0, %v1394
        %v1396 = vpop.f32.mrb[0].mxu0
        %v1397 = vpop.f32.mrb[0].mxu0
        %v1398 = vadd.f32 0.0, %v1397
        %v1399 = vpop.f32.mrb[0].mxu0
        %1400 = vdwg.mxu0
        %v1401 = vadd.f32 %v1156, %v1339
        %v1402 = vadd.f32 %v1159, %v1342
        %v1403 = vadd.f32 %v1164, %v1347
        %v1404 = vadd.f32 %v1167, %v1350
        %v1405 = vadd.f32 %v1172, %v1355
        %v1406 = vadd.f32 %v1175, %v1358
        %v1407 = vadd.f32 %v1180, %v1363
        %v1408 = vadd.f32 %v1183, %v1366
        %v1409 = vadd.f32 %v1188, %v1371
        %v1410 = vadd.f32 %v1191, %v1374
        %v1411 = vadd.f32 %v1196, %v1379
        %v1412 = vadd.f32 %v1199, %v1382
        %v1413 = vadd.f32 %v1204, %v1387
        %v1414 = vadd.f32 %v1207, %v1390
        %v1415 = vadd.f32 %v1212, %v1395
        %v1416 = vadd.f32 %v1215, %v1398
        %s1417 = scalar_lea.vmem %s793, 192 [#allocation2]
        %v1418 = vld [vmem:[%s1417] sm:$0xf]
        %v1419 = vld [vmem:[%s1417 + $0x4] sm:$0xf]
        %v1420 = vld [vmem:[%s1417 + $0x8] sm:$0xf]
        %v1421 = vld [vmem:[%s1417 + $0xc] sm:$0xf]
        %v1422 = vld [vmem:[%s1417 + $0x10] sm:$0xf]
        %v1423 = vld [vmem:[%s1417 + $0x14] sm:$0xf]
        %v1424 = vld [vmem:[%s1417 + $0x18] sm:$0xf]
        %v1425 = vld [vmem:[%s1417 + $0x1c] sm:$0xf]
        %v1426 = vld [vmem:[%s1417 + $0x20] sm:$0xf]
        %v1427 = vld [vmem:[%s1417 + $0x24] sm:$0xf]
        %v1428 = vld [vmem:[%s1417 + $0x28] sm:$0xf]
        %v1429 = vld [vmem:[%s1417 + $0x2c] sm:$0xf]
        %v1430 = vld [vmem:[%s1417 + $0x30] sm:$0xf]
        %v1431 = vld [vmem:[%s1417 + $0x34] sm:$0xf]
        %v1432 = vld [vmem:[%s1417 + $0x38] sm:$0xf]
        %v1433 = vld [vmem:[%s1417 + $0x3c] sm:$0xf]
        %v1450 = vunpack.c.l.b16 %v1418
        %v1451 = vunpack.c.l.b16 %v1419
        %v1452 = vunpack.c.l.b16 %v1420
        %v1453 = vunpack.c.l.b16 %v1421
        %v1454 = vunpack.c.l.b16 %v1422
        %v1455 = vunpack.c.l.b16 %v1423
        %v1456 = vunpack.c.l.b16 %v1424
        %v1457 = vunpack.c.l.b16 %v1425
        %v1458 = vunpack.c.l.b16 %v1426
        %v1459 = vunpack.c.l.b16 %v1427
        %v1460 = vunpack.c.l.b16 %v1428
        %v1461 = vunpack.c.l.b16 %v1429
        %v1462 = vunpack.c.l.b16 %v1430
        %v1463 = vunpack.c.l.b16 %v1431
        %v1464 = vunpack.c.l.b16 %v1432
        %v1465 = vunpack.c.l.b16 %v1433
        %v1466 = vpack.c.b16 %v1451, %v1450
        %v1467 = vpack.c.b16 %v1453, %v1452
        %v1468 = vpack.c.b16 %v1455, %v1454
        %v1469 = vpack.c.b16 %v1457, %v1456
        %v1470 = vpack.c.b16 %v1459, %v1458
        %v1471 = vpack.c.b16 %v1461, %v1460
        %v1472 = vpack.c.b16 %v1463, %v1462
        %v1473 = vpack.c.b16 %v1465, %v1464
        %1474 = vrot.lane.b32.xlu0 %v925, 118
        %v1475 = vpop.permute.xlu0 %1474
        %v1477 = vsel %vm928, %v1466, 0
        %v1480 = vsel %vm928, %v1467, 0
        %v1483 = vsel %vm928, %v1468, 0
        %v1486 = vsel %vm928, %v1469, 0
        %v1489 = vsel %vm928, %v1470, 0
        %v1492 = vsel %vm928, %v1471, 0
        %v1495 = vsel %vm928, %v1472, 0
        %v1498 = vsel %vm928, %v1473, 0
        %v1501 = vsel %vm953, %v1475, 0
        %1503 = vmatprep.subr.bf16.mxu0 0
        %1504 = vmatpush1.bf16.msra.mxu0 %v1501
        %1505 = vmatprep.subr.bf16.mxu0 0
        %1506 = vmatpush1.bf16.msra.mxu0 0
        %1507 = vmatprep.subr.bf16.mxu0 0
        %1508 = vmatpush1.bf16.msra.mxu0 0
        %1509 = vmatprep.subr.bf16.mxu0 0
        %1510 = vmatpush1.bf16.msra.mxu0 0
        %1511 = vmatprep.subr.bf16.mxu0 0
        %1512 = vmatpush1.bf16.msra.mxu0 0
        %1513 = vmatprep.subr.bf16.mxu0 0
        %1514 = vmatpush1.bf16.msra.mxu0 0
        %1515 = vmatprep.subr.bf16.mxu0 0
        %1516 = vmatpush1.bf16.msra.mxu0 0
        %1517 = vmatprep.subr.bf16.mxu0 0
        %1518 = vmatpush1.bf16.msra.mxu0 0
        %1519 = vmatprep.subr.bf16.mxu0 0
        %1520 = vmatpush1.bf16.msra.mxu0 0
        %1521 = vmatprep.subr.bf16.mxu0 0
        %1522 = vmatpush1.bf16.msra.mxu0 0
        %1523 = vmatprep.subr.bf16.mxu0 0
        %1524 = vmatpush1.bf16.msra.mxu0 0
        %1525 = vmatprep.subr.bf16.mxu0 0
        %1526 = vmatpush1.bf16.msra.mxu0 0
        %1527 = vmatprep.subr.bf16.mxu0 0
        %1528 = vmatpush1.bf16.msra.mxu0 0
        %1529 = vmatprep.subr.bf16.mxu0 0
        %1530 = vmatpush1.bf16.msra.mxu0 0
        %1531 = vmatprep.subr.bf16.mxu0 0
        %1532 = vmatpush1.bf16.msra.mxu0 0
        %1533 = vmatprep.subr.bf16.mxu0 0
        %1534 = vmatpush1.bf16.msra.mxu0 0
        %1535 = vmatprep.mubr.bf16.mxu0 0
        %1536 = vmatmul.mubr.bf16.gmra.mrb[0].mxu0 %v1477
        %v1537 = vpop.f32.mrb[0].mxu0
        %v1538 = vadd.f32 0.0, %v1537
        %v1539 = vpop.f32.mrb[0].mxu0
        %v1540 = vpop.f32.mrb[0].mxu0
        %v1541 = vadd.f32 0.0, %v1540
        %v1542 = vpop.f32.mrb[0].mxu0
        %1543 = vmatprep.mubr.bf16.mxu0 0
        %1544 = vmatmul.mubr.bf16.gmra.mrb[0].mxu0 %v1480
        %v1545 = vpop.f32.mrb[0].mxu0
        %v1546 = vadd.f32 0.0, %v1545
        %v1547 = vpop.f32.mrb[0].mxu0
        %v1548 = vpop.f32.mrb[0].mxu0
        %v1549 = vadd.f32 0.0, %v1548
        %v1550 = vpop.f32.mrb[0].mxu0
        %1551 = vmatprep.mubr.bf16.mxu0 0
        %1552 = vmatmul.mubr.bf16.gmra.mrb[0].mxu0 %v1483
        %v1553 = vpop.f32.mrb[0].mxu0
        %v1554 = vadd.f32 0.0, %v1553
        %v1555 = vpop.f32.mrb[0].mxu0
        %v1556 = vpop.f32.mrb[0].mxu0
        %v1557 = vadd.f32 0.0, %v1556
        %v1558 = vpop.f32.mrb[0].mxu0
        %1559 = vmatprep.mubr.bf16.mxu0 0
        %1560 = vmatmul.mubr.bf16.gmra.mrb[0].mxu0 %v1486
        %v1561 = vpop.f32.mrb[0].mxu0
        %v1562 = vadd.f32 0.0, %v1561
        %v1563 = vpop.f32.mrb[0].mxu0
        %v1564 = vpop.f32.mrb[0].mxu0
        %v1565 = vadd.f32 0.0, %v1564
        %v1566 = vpop.f32.mrb[0].mxu0
        %1567 = vmatprep.mubr.bf16.mxu0 0
        %1568 = vmatmul.mubr.bf16.gmra.mrb[0].mxu0 %v1489
        %v1569 = vpop.f32.mrb[0].mxu0
        %v1570 = vadd.f32 0.0, %v1569
        %v1571 = vpop.f32.mrb[0].mxu0
        %v1572 = vpop.f32.mrb[0].mxu0
        %v1573 = vadd.f32 0.0, %v1572
        %v1574 = vpop.f32.mrb[0].mxu0
        %1575 = vmatprep.mubr.bf16.mxu0 0
        %1576 = vmatmul.mubr.bf16.gmra.mrb[0].mxu0 %v1492
        %v1577 = vpop.f32.mrb[0].mxu0
        %v1578 = vadd.f32 0.0, %v1577
        %v1579 = vpop.f32.mrb[0].mxu0
        %v1580 = vpop.f32.mrb[0].mxu0
        %v1581 = vadd.f32 0.0, %v1580
        %v1582 = vpop.f32.mrb[0].mxu0
        %1583 = vmatprep.mubr.bf16.mxu0 0
        %1584 = vmatmul.mubr.bf16.gmra.mrb[0].mxu0 %v1495
        %v1585 = vpop.f32.mrb[0].mxu0
        %v1586 = vadd.f32 0.0, %v1585
        %v1587 = vpop.f32.mrb[0].mxu0
        %v1588 = vpop.f32.mrb[0].mxu0
        %v1589 = vadd.f32 0.0, %v1588
        %v1590 = vpop.f32.mrb[0].mxu0
        %1591 = vmatprep.mubr.bf16.mxu0 0
        %1592 = vmatmul.mubr.bf16.gmra.mrb[0].mxu0 %v1498
        %v1593 = vpop.f32.mrb[0].mxu0
        %v1594 = vadd.f32 0.0, %v1593
        %v1595 = vpop.f32.mrb[0].mxu0
        %v1596 = vpop.f32.mrb[0].mxu0
        %v1597 = vadd.f32 0.0, %v1596
        %v1598 = vpop.f32.mrb[0].mxu0
        %1599 = vdwg.mxu0
        %v1600 = vadd.f32 %v1401, %v1538
        %v1601 = vadd.f32 %v1402, %v1541
        %v1602 = vadd.f32 %v1403, %v1546
        %v1603 = vadd.f32 %v1404, %v1549
        %v1604 = vadd.f32 %v1405, %v1554
        %v1605 = vadd.f32 %v1406, %v1557
        %v1606 = vadd.f32 %v1407, %v1562
        %v1607 = vadd.f32 %v1408, %v1565
        %v1608 = vadd.f32 %v1409, %v1570
        %v1609 = vadd.f32 %v1410, %v1573
        %v1610 = vadd.f32 %v1411, %v1578
        %v1611 = vadd.f32 %v1412, %v1581
        %v1612 = vadd.f32 %v1413, %v1586
        %v1613 = vadd.f32 %v1414, %v1589
        %v1614 = vadd.f32 %v1415, %v1594
        %v1615 = vadd.f32 %v1416, %v1597
        %s1616 = scalar_lea.vmem %s793, 256 [#allocation2]
        %v1617 = vld [vmem:[%s1616] sm:$0xf]
        %v1618 = vld [vmem:[%s1616 + $0x4] sm:$0xf]
        %v1619 = vld [vmem:[%s1616 + $0x8] sm:$0xf]
        %v1620 = vld [vmem:[%s1616 + $0xc] sm:$0xf]
        %v1621 = vld [vmem:[%s1616 + $0x10] sm:$0xf]
        %v1622 = vld [vmem:[%s1616 + $0x14] sm:$0xf]
        %v1623 = vld [vmem:[%s1616 + $0x18] sm:$0xf]
        %v1624 = vld [vmem:[%s1616 + $0x1c] sm:$0xf]
        %v1625 = vld [vmem:[%s1616 + $0x20] sm:$0xf]
        %v1626 = vld [vmem:[%s1616 + $0x24] sm:$0xf]
        %v1627 = vld [vmem:[%s1616 + $0x28] sm:$0xf]
        %v1628 = vld [vmem:[%s1616 + $0x2c] sm:$0xf]
        %v1629 = vld [vmem:[%s1616 + $0x30] sm:$0xf]
        %v1630 = vld [vmem:[%s1616 + $0x34] sm:$0xf]
        %v1631 = vld [vmem:[%s1616 + $0x38] sm:$0xf]
        %v1632 = vld [vmem:[%s1616 + $0x3c] sm:$0xf]
        %v1649 = vunpack.c.l.b16 %v1617
        %v1650 = vunpack.c.l.b16 %v1618
        %v1651 = vunpack.c.l.b16 %v1619
        %v1652 = vunpack.c.l.b16 %v1620
        %v1653 = vunpack.c.l.b16 %v1621
        %v1654 = vunpack.c.l.b16 %v1622
        %v1655 = vunpack.c.l.b16 %v1623
        %v1656 = vunpack.c.l.b16 %v1624
        %v1657 = vunpack.c.l.b16 %v1625
        %v1658 = vunpack.c.l.b16 %v1626
        %v1659 = vunpack.c.l.b16 %v1627
        %v1660 = vunpack.c.l.b16 %v1628
        %v1661 = vunpack.c.l.b16 %v1629
        %v1662 = vunpack.c.l.b16 %v1630
        %v1663 = vunpack.c.l.b16 %v1631
        %v1664 = vunpack.c.l.b16 %v1632
        %v1665 = vpack.c.b16 %v1650, %v1649
        %v1666 = vpack.c.b16 %v1652, %v1651
        %v1667 = vpack.c.b16 %v1654, %v1653
        %v1668 = vpack.c.b16 %v1656, %v1655
        %v1669 = vpack.c.b16 %v1658, %v1657
        %v1670 = vpack.c.b16 %v1660, %v1659
        %v1671 = vpack.c.b16 %v1662, %v1661
        %v1672 = vpack.c.b16 %v1664, %v1663
        %1673 = vrot.lane.b32.xlu0 %v925, 117
        %v1674 = vpop.permute.xlu0 %1673
        %v1676 = vsel %vm928, %v1665, 0
        %v1679 = vsel %vm928, %v1666, 0
        %v1682 = vsel %vm928, %v1667, 0
        %v1685 = vsel %vm928, %v1668, 0
        %v1688 = vsel %vm928, %v1669, 0
        %v1691 = vsel %vm928, %v1670, 0
        %v1694 = vsel %vm928, %v1671, 0
        %v1697 = vsel %vm928, %v1672, 0
        %v1700 = vsel %vm953, %v1674, 0
        %1702 = vmatprep.subr.bf16.mxu0 0
        %1703 = vmatpush1.bf16.msra.mxu0 %v1700
        %1704 = vmatprep.subr.bf16.mxu0 0
        %1705 = vmatpush1.bf16.msra.mxu0 0
        %1706 = vmatprep.subr.bf16.mxu0 0
        %1707 = vmatpush1.bf16.msra.mxu0 0
        %1708 = vmatprep.subr.bf16.mxu0 0
        %1709 = vmatpush1.bf16.msra.mxu0 0
        %1710 = vmatprep.subr.bf16.mxu0 0
        %1711 = vmatpush1.bf16.msra.mxu0 0
        %1712 = vmatprep.subr.bf16.mxu0 0
        %1713 = vmatpush1.bf16.msra.mxu0 0
        %1714 = vmatprep.subr.bf16.mxu0 0
        %1715 = vmatpush1.bf16.msra.mxu0 0
        %1716 = vmatprep.subr.bf16.mxu0 0
        %1717 = vmatpush1.bf16.msra.mxu0 0
        %1718 = vmatprep.subr.bf16.mxu0 0
        %1719 = vmatpush1.bf16.msra.mxu0 0
        %1720 = vmatprep.subr.bf16.mxu0 0
        %1721 = vmatpush1.bf16.msra.mxu0 0
        %1722 = vmatprep.subr.bf16.mxu0 0
        %1723 = vmatpush1.bf16.msra.mxu0 0
        %1724 = vmatprep.subr.bf16.mxu0 0
        %1725 = vmatpush1.bf16.msra.mxu0 0
        %1726 = vmatprep.subr.bf16.mxu0 0
        %1727 = vmatpush1.bf16.msra.mxu0 0
        %1728 = vmatprep.subr.bf16.mxu0 0
        %1729 = vmatpush1.bf16.msra.mxu0 0
        %1730 = vmatprep.subr.bf16.mxu0 0
        %1731 = vmatpush1.bf16.msra.mxu0 0
        %1732 = vmatprep.subr.bf16.mxu0 0
        %1733 = vmatpush1.bf16.msra.mxu0 0
        %1734 = vmatprep.mubr.bf16.mxu0 0
        %1735 = vmatmul.mubr.bf16.gmra.mrb[0].mxu0 %v1676
        %v1736 = vpop.f32.mrb[0].mxu0
        %v1737 = vadd.f32 0.0, %v1736
        %v1738 = vpop.f32.mrb[0].mxu0
        %v1739 = vpop.f32.mrb[0].mxu0
        %v1740 = vadd.f32 0.0, %v1739
        %v1741 = vpop.f32.mrb[0].mxu0
        %1742 = vmatprep.mubr.bf16.mxu0 0
        %1743 = vmatmul.mubr.bf16.gmra.mrb[0].mxu0 %v1679
        %v1744 = vpop.f32.mrb[0].mxu0
        %v1745 = vadd.f32 0.0, %v1744
        %v1746 = vpop.f32.mrb[0].mxu0
        %v1747 = vpop.f32.mrb[0].mxu0
        %v1748 = vadd.f32 0.0, %v1747
        %v1749 = vpop.f32.mrb[0].mxu0
        %1750 = vmatprep.mubr.bf16.mxu0 0
        %1751 = vmatmul.mubr.bf16.gmra.mrb[0].mxu0 %v1682
        %v1752 = vpop.f32.mrb[0].mxu0
        %v1753 = vadd.f32 0.0, %v1752
        %v1754 = vpop.f32.mrb[0].mxu0
        %v1755 = vpop.f32.mrb[0].mxu0
        %v1756 = vadd.f32 0.0, %v1755
        %v1757 = vpop.f32.mrb[0].mxu0
        %1758 = vmatprep.mubr.bf16.mxu0 0
        %1759 = vmatmul.mubr.bf16.gmra.mrb[0].mxu0 %v1685
        %v1760 = vpop.f32.mrb[0].mxu0
        %v1761 = vadd.f32 0.0, %v1760
        %v1762 = vpop.f32.mrb[0].mxu0
        %v1763 = vpop.f32.mrb[0].mxu0
        %v1764 = vadd.f32 0.0, %v1763
        %v1765 = vpop.f32.mrb[0].mxu0
        %1766 = vmatprep.mubr.bf16.mxu0 0
        %1767 = vmatmul.mubr.bf16.gmra.mrb[0].mxu0 %v1688
        %v1768 = vpop.f32.mrb[0].mxu0
        %v1769 = vadd.f32 0.0, %v1768
        %v1770 = vpop.f32.mrb[0].mxu0
        %v1771 = vpop.f32.mrb[0].mxu0
        %v1772 = vadd.f32 0.0, %v1771
        %v1773 = vpop.f32.mrb[0].mxu0
        %1774 = vmatprep.mubr.bf16.mxu0 0
        %1775 = vmatmul.mubr.bf16.gmra.mrb[0].mxu0 %v1691
        %v1776 = vpop.f32.mrb[0].mxu0
        %v1777 = vadd.f32 0.0, %v1776
        %v1778 = vpop.f32.mrb[0].mxu0
        %v1779 = vpop.f32.mrb[0].mxu0
        %v1780 = vadd.f32 0.0, %v1779
        %v1781 = vpop.f32.mrb[0].mxu0
        %1782 = vmatprep.mubr.bf16.mxu0 0
        %1783 = vmatmul.mubr.bf16.gmra.mrb[0].mxu0 %v1694
        %v1784 = vpop.f32.mrb[0].mxu0
        %v1785 = vadd.f32 0.0, %v1784
        %v1786 = vpop.f32.mrb[0].mxu0
        %v1787 = vpop.f32.mrb[0].mxu0
        %v1788 = vadd.f32 0.0, %v1787
        %v1789 = vpop.f32.mrb[0].mxu0
        %1790 = vmatprep.mubr.bf16.mxu0 0
        %1791 = vmatmul.mubr.bf16.gmra.mrb[0].mxu0 %v1697
        %v1792 = vpop.f32.mrb[0].mxu0
        %v1793 = vadd.f32 0.0, %v1792
        %v1794 = vpop.f32.mrb[0].mxu0
        %v1795 = vpop.f32.mrb[0].mxu0
        %v1796 = vadd.f32 0.0, %v1795
        %v1797 = vpop.f32.mrb[0].mxu0
        %1798 = vdwg.mxu0
        %v1799 = vadd.f32 %v1600, %v1737
        %v1800 = vadd.f32 %v1601, %v1740
        %v1801 = vadd.f32 %v1602, %v1745
        %v1802 = vadd.f32 %v1603, %v1748
        %v1803 = vadd.f32 %v1604, %v1753
        %v1804 = vadd.f32 %v1605, %v1756
        %v1805 = vadd.f32 %v1606, %v1761
        %v1806 = vadd.f32 %v1607, %v1764
        %v1807 = vadd.f32 %v1608, %v1769
        %v1808 = vadd.f32 %v1609, %v1772
        %v1809 = vadd.f32 %v1610, %v1777
        %v1810 = vadd.f32 %v1611, %v1780
        %v1811 = vadd.f32 %v1612, %v1785
        %v1812 = vadd.f32 %v1613, %v1788
        %v1813 = vadd.f32 %v1614, %v1793
        %v1814 = vadd.f32 %v1615, %v1796
        %s1815 = scalar_lea.vmem %s793, 320 [#allocation2]
        %v1816 = vld [vmem:[%s1815] sm:$0xf]
        %v1817 = vld [vmem:[%s1815 + $0x4] sm:$0xf]
        %v1818 = vld [vmem:[%s1815 + $0x8] sm:$0xf]
        %v1819 = vld [vmem:[%s1815 + $0xc] sm:$0xf]
        %v1820 = vld [vmem:[%s1815 + $0x10] sm:$0xf]
        %v1821 = vld [vmem:[%s1815 + $0x14] sm:$0xf]
        %v1822 = vld [vmem:[%s1815 + $0x18] sm:$0xf]
        %v1823 = vld [vmem:[%s1815 + $0x1c] sm:$0xf]
        %v1824 = vld [vmem:[%s1815 + $0x20] sm:$0xf]
        %v1825 = vld [vmem:[%s1815 + $0x24] sm:$0xf]
        %v1826 = vld [vmem:[%s1815 + $0x28] sm:$0xf]
        %v1827 = vld [vmem:[%s1815 + $0x2c] sm:$0xf]
        %v1828 = vld [vmem:[%s1815 + $0x30] sm:$0xf]
        %v1829 = vld [vmem:[%s1815 + $0x34] sm:$0xf]
        %v1830 = vld [vmem:[%s1815 + $0x38] sm:$0xf]
        %v1831 = vld [vmem:[%s1815 + $0x3c] sm:$0xf]
        %v1848 = vunpack.c.l.b16 %v1816
        %v1849 = vunpack.c.l.b16 %v1817
        %v1850 = vunpack.c.l.b16 %v1818
        %v1851 = vunpack.c.l.b16 %v1819
        %v1852 = vunpack.c.l.b16 %v1820
        %v1853 = vunpack.c.l.b16 %v1821
        %v1854 = vunpack.c.l.b16 %v1822
        %v1855 = vunpack.c.l.b16 %v1823
        %v1856 = vunpack.c.l.b16 %v1824
        %v1857 = vunpack.c.l.b16 %v1825
        %v1858 = vunpack.c.l.b16 %v1826
        %v1859 = vunpack.c.l.b16 %v1827
        %v1860 = vunpack.c.l.b16 %v1828
        %v1861 = vunpack.c.l.b16 %v1829
        %v1862 = vunpack.c.l.b16 %v1830
        %v1863 = vunpack.c.l.b16 %v1831
        %v1864 = vpack.c.b16 %v1849, %v1848
        %v1865 = vpack.c.b16 %v1851, %v1850
        %v1866 = vpack.c.b16 %v1853, %v1852
        %v1867 = vpack.c.b16 %v1855, %v1854
        %v1868 = vpack.c.b16 %v1857, %v1856
        %v1869 = vpack.c.b16 %v1859, %v1858
        %v1870 = vpack.c.b16 %v1861, %v1860
        %v1871 = vpack.c.b16 %v1863, %v1862
        %1872 = vrot.lane.b32.xlu0 %v925, 116
        %v1873 = vpop.permute.xlu0 %1872
        %v1875 = vsel %vm928, %v1864, 0
        %v1878 = vsel %vm928, %v1865, 0
        %v1881 = vsel %vm928, %v1866, 0
        %v1884 = vsel %vm928, %v1867, 0
        %v1887 = vsel %vm928, %v1868, 0
        %v1890 = vsel %vm928, %v1869, 0
        %v1893 = vsel %vm928, %v1870, 0
        %v1896 = vsel %vm928, %v1871, 0
        %v1899 = vsel %vm953, %v1873, 0
        %1901 = vmatprep.subr.bf16.mxu0 0
        %1902 = vmatpush1.bf16.msra.mxu0 %v1899
        %1903 = vmatprep.subr.bf16.mxu0 0
        %1904 = vmatpush1.bf16.msra.mxu0 0
        %1905 = vmatprep.subr.bf16.mxu0 0
        %1906 = vmatpush1.bf16.msra.mxu0 0
        %1907 = vmatprep.subr.bf16.mxu0 0
        %1908 = vmatpush1.bf16.msra.mxu0 0
        %1909 = vmatprep.subr.bf16.mxu0 0
        %1910 = vmatpush1.bf16.msra.mxu0 0
        %1911 = vmatprep.subr.bf16.mxu0 0
        %1912 = vmatpush1.bf16.msra.mxu0 0
        %1913 = vmatprep.subr.bf16.mxu0 0
        %1914 = vmatpush1.bf16.msra.mxu0 0
        %1915 = vmatprep.subr.bf16.mxu0 0
        %1916 = vmatpush1.bf16.msra.mxu0 0
        %1917 = vmatprep.subr.bf16.mxu0 0
        %1918 = vmatpush1.bf16.msra.mxu0 0
        %1919 = vmatprep.subr.bf16.mxu0 0
        %1920 = vmatpush1.bf16.msra.mxu0 0
        %1921 = vmatprep.subr.bf16.mxu0 0
        %1922 = vmatpush1.bf16.msra.mxu0 0
        %1923 = vmatprep.subr.bf16.mxu0 0
        %1924 = vmatpush1.bf16.msra.mxu0 0
        %1925 = vmatprep.subr.bf16.mxu0 0
        %1926 = vmatpush1.bf16.msra.mxu0 0
        %1927 = vmatprep.subr.bf16.mxu0 0
        %1928 = vmatpush1.bf16.msra.mxu0 0
        %1929 = vmatprep.subr.bf16.mxu0 0
        %1930 = vmatpush1.bf16.msra.mxu0 0
        %1931 = vmatprep.subr.bf16.mxu0 0
        %1932 = vmatpush1.bf16.msra.mxu0 0
        %1933 = vmatprep.mubr.bf16.mxu0 0
        %1934 = vmatmul.mubr.bf16.gmra.mrb[0].mxu0 %v1875
        %v1935 = vpop.f32.mrb[0].mxu0
        %v1936 = vadd.f32 0.0, %v1935
        %v1937 = vpop.f32.mrb[0].mxu0
        %v1938 = vpop.f32.mrb[0].mxu0
        %v1939 = vadd.f32 0.0, %v1938
        %v1940 = vpop.f32.mrb[0].mxu0
        %1941 = vmatprep.mubr.bf16.mxu0 0
        %1942 = vmatmul.mubr.bf16.gmra.mrb[0].mxu0 %v1878
        %v1943 = vpop.f32.mrb[0].mxu0
        %v1944 = vadd.f32 0.0, %v1943
        %v1945 = vpop.f32.mrb[0].mxu0
        %v1946 = vpop.f32.mrb[0].mxu0
        %v1947 = vadd.f32 0.0, %v1946
        %v1948 = vpop.f32.mrb[0].mxu0
        %1949 = vmatprep.mubr.bf16.mxu0 0
        %1950 = vmatmul.mubr.bf16.gmra.mrb[0].mxu0 %v1881
        %v1951 = vpop.f32.mrb[0].mxu0
        %v1952 = vadd.f32 0.0, %v1951
        %v1953 = vpop.f32.mrb[0].mxu0
        %v1954 = vpop.f32.mrb[0].mxu0
        %v1955 = vadd.f32 0.0, %v1954
        %v1956 = vpop.f32.mrb[0].mxu0
        %1957 = vmatprep.mubr.bf16.mxu0 0
        %1958 = vmatmul.mubr.bf16.gmra.mrb[0].mxu0 %v1884
        %v1959 = vpop.f32.mrb[0].mxu0
        %v1960 = vadd.f32 0.0, %v1959
        %v1961 = vpop.f32.mrb[0].mxu0
        %v1962 = vpop.f32.mrb[0].mxu0
        %v1963 = vadd.f32 0.0, %v1962
        %v1964 = vpop.f32.mrb[0].mxu0
        %1965 = vmatprep.mubr.bf16.mxu0 0
        %1966 = vmatmul.mubr.bf16.gmra.mrb[0].mxu0 %v1887
        %v1967 = vpop.f32.mrb[0].mxu0
        %v1968 = vadd.f32 0.0, %v1967
        %v1969 = vpop.f32.mrb[0].mxu0
        %v1970 = vpop.f32.mrb[0].mxu0
        %v1971 = vadd.f32 0.0, %v1970
        %v1972 = vpop.f32.mrb[0].mxu0
        %1973 = vmatprep.mubr.bf16.mxu0 0
        %1974 = vmatmul.mubr.bf16.gmra.mrb[0].mxu0 %v1890
        %v1975 = vpop.f32.mrb[0].mxu0
        %v1976 = vadd.f32 0.0, %v1975
        %v1977 = vpop.f32.mrb[0].mxu0
        %v1978 = vpop.f32.mrb[0].mxu0
        %v1979 = vadd.f32 0.0, %v1978
        %v1980 = vpop.f32.mrb[0].mxu0
        %1981 = vmatprep.mubr.bf16.mxu0 0
        %1982 = vmatmul.mubr.bf16.gmra.mrb[0].mxu0 %v1893
        %v1983 = vpop.f32.mrb[0].mxu0
        %v1984 = vadd.f32 0.0, %v1983
        %v1985 = vpop.f32.mrb[0].mxu0
        %v1986 = vpop.f32.mrb[0].mxu0
        %v1987 = vadd.f32 0.0, %v1986
        %v1988 = vpop.f32.mrb[0].mxu0
        %1989 = vmatprep.mubr.bf16.mxu0 0
        %1990 = vmatmul.mubr.bf16.gmra.mrb[0].mxu0 %v1896
        %v1991 = vpop.f32.mrb[0].mxu0
        %v1992 = vadd.f32 0.0, %v1991
        %v1993 = vpop.f32.mrb[0].mxu0
        %v1994 = vpop.f32.mrb[0].mxu0
        %v1995 = vadd.f32 0.0, %v1994
        %v1996 = vpop.f32.mrb[0].mxu0
        %1997 = vdwg.mxu0
        %v1998 = vadd.f32 %v1799, %v1936
        %v1999 = vadd.f32 %v1800, %v1939
        %v2000 = vadd.f32 %v1801, %v1944
        %v2001 = vadd.f32 %v1802, %v1947
        %v2002 = vadd.f32 %v1803, %v1952
        %v2003 = vadd.f32 %v1804, %v1955
        %v2004 = vadd.f32 %v1805, %v1960
        %v2005 = vadd.f32 %v1806, %v1963
        %v2006 = vadd.f32 %v1807, %v1968
        %v2007 = vadd.f32 %v1808, %v1971
        %v2008 = vadd.f32 %v1809, %v1976
        %v2009 = vadd.f32 %v1810, %v1979
        %v2010 = vadd.f32 %v1811, %v1984
        %v2011 = vadd.f32 %v1812, %v1987
        %v2012 = vadd.f32 %v1813, %v1992
        %v2013 = vadd.f32 %v1814, %v1995
        %s2014 = scalar_lea.vmem %s793, 384 [#allocation2]
        %v2015 = vld [vmem:[%s2014] sm:$0xf]
        %v2016 = vld [vmem:[%s2014 + $0x4] sm:$0xf]
        %v2017 = vld [vmem:[%s2014 + $0x8] sm:$0xf]
        %v2018 = vld [vmem:[%s2014 + $0xc] sm:$0xf]
        %v2019 = vld [vmem:[%s2014 + $0x10] sm:$0xf]
        %v2020 = vld [vmem:[%s2014 + $0x14] sm:$0xf]
        %v2021 = vld [vmem:[%s2014 + $0x18] sm:$0xf]
        %v2022 = vld [vmem:[%s2014 + $0x1c] sm:$0xf]
        %v2023 = vld [vmem:[%s2014 + $0x20] sm:$0xf]
        %v2024 = vld [vmem:[%s2014 + $0x24] sm:$0xf]
        %v2025 = vld [vmem:[%s2014 + $0x28] sm:$0xf]
        %v2026 = vld [vmem:[%s2014 + $0x2c] sm:$0xf]
        %v2027 = vld [vmem:[%s2014 + $0x30] sm:$0xf]
        %v2028 = vld [vmem:[%s2014 + $0x34] sm:$0xf]
        %v2029 = vld [vmem:[%s2014 + $0x38] sm:$0xf]
        %v2030 = vld [vmem:[%s2014 + $0x3c] sm:$0xf]
        %v2047 = vunpack.c.l.b16 %v2015
        %v2048 = vunpack.c.l.b16 %v2016
        %v2049 = vunpack.c.l.b16 %v2017
        %v2050 = vunpack.c.l.b16 %v2018
        %v2051 = vunpack.c.l.b16 %v2019
        %v2052 = vunpack.c.l.b16 %v2020
        %v2053 = vunpack.c.l.b16 %v2021
        %v2054 = vunpack.c.l.b16 %v2022
        %v2055 = vunpack.c.l.b16 %v2023
        %v2056 = vunpack.c.l.b16 %v2024
        %v2057 = vunpack.c.l.b16 %v2025
        %v2058 = vunpack.c.l.b16 %v2026
        %v2059 = vunpack.c.l.b16 %v2027
        %v2060 = vunpack.c.l.b16 %v2028
        %v2061 = vunpack.c.l.b16 %v2029
        %v2062 = vunpack.c.l.b16 %v2030
        %v2063 = vpack.c.b16 %v2048, %v2047
        %v2064 = vpack.c.b16 %v2050, %v2049
        %v2065 = vpack.c.b16 %v2052, %v2051
        %v2066 = vpack.c.b16 %v2054, %v2053
        %v2067 = vpack.c.b16 %v2056, %v2055
        %v2068 = vpack.c.b16 %v2058, %v2057
        %v2069 = vpack.c.b16 %v2060, %v2059
        %v2070 = vpack.c.b16 %v2062, %v2061
        %2071 = vrot.lane.b32.xlu0 %v925, 108
        %v2072 = vpop.permute.xlu0 %2071
        %v2074 = vsel %vm928, %v2063, 0
        %v2077 = vsel %vm928, %v2064, 0
        %v2080 = vsel %vm928, %v2065, 0
        %v2083 = vsel %vm928, %v2066, 0
        %v2086 = vsel %vm928, %v2067, 0
        %v2089 = vsel %vm928, %v2068, 0
        %v2092 = vsel %vm928, %v2069, 0
        %v2095 = vsel %vm928, %v2070, 0
        %v2098 = vsel %vm953, %v2072, 0
        %2100 = vmatprep.subr.bf16.mxu0 0
        %2101 = vmatpush1.bf16.msra.mxu0 %v2098
        %2102 = vmatprep.subr.bf16.mxu0 0
        %2103 = vmatpush1.bf16.msra.mxu0 0
        %2104 = vmatprep.subr.bf16.mxu0 0
        %2105 = vmatpush1.bf16.msra.mxu0 0
        %2106 = vmatprep.subr.bf16.mxu0 0
        %2107 = vmatpush1.bf16.msra.mxu0 0
        %2108 = vmatprep.subr.bf16.mxu0 0
        %2109 = vmatpush1.bf16.msra.mxu0 0
        %2110 = vmatprep.subr.bf16.mxu0 0
        %2111 = vmatpush1.bf16.msra.mxu0 0
        %2112 = vmatprep.subr.bf16.mxu0 0
        %2113 = vmatpush1.bf16.msra.mxu0 0
        %2114 = vmatprep.subr.bf16.mxu0 0
        %2115 = vmatpush1.bf16.msra.mxu0 0
        %2116 = vmatprep.subr.bf16.mxu0 0
        %2117 = vmatpush1.bf16.msra.mxu0 0
        %2118 = vmatprep.subr.bf16.mxu0 0
        %2119 = vmatpush1.bf16.msra.mxu0 0
        %2120 = vmatprep.subr.bf16.mxu0 0
        %2121 = vmatpush1.bf16.msra.mxu0 0
        %2122 = vmatprep.subr.bf16.mxu0 0
        %2123 = vmatpush1.bf16.msra.mxu0 0
        %2124 = vmatprep.subr.bf16.mxu0 0
        %2125 = vmatpush1.bf16.msra.mxu0 0
        %2126 = vmatprep.subr.bf16.mxu0 0
        %2127 = vmatpush1.bf16.msra.mxu0 0
        %2128 = vmatprep.subr.bf16.mxu0 0
        %2129 = vmatpush1.bf16.msra.mxu0 0
        %2130 = vmatprep.subr.bf16.mxu0 0
        %2131 = vmatpush1.bf16.msra.mxu0 0
        %2132 = vmatprep.mubr.bf16.mxu0 0
        %2133 = vmatmul.mubr.bf16.gmra.mrb[0].mxu0 %v2074
        %v2134 = vpop.f32.mrb[0].mxu0
        %v2135 = vadd.f32 0.0, %v2134
        %v2136 = vpop.f32.mrb[0].mxu0
        %v2137 = vpop.f32.mrb[0].mxu0
        %v2138 = vadd.f32 0.0, %v2137
        %v2139 = vpop.f32.mrb[0].mxu0
        %2140 = vmatprep.mubr.bf16.mxu0 0
        %2141 = vmatmul.mubr.bf16.gmra.mrb[0].mxu0 %v2077
        %v2142 = vpop.f32.mrb[0].mxu0
        %v2143 = vadd.f32 0.0, %v2142
        %v2144 = vpop.f32.mrb[0].mxu0
        %v2145 = vpop.f32.mrb[0].mxu0
        %v2146 = vadd.f32 0.0, %v2145
        %v2147 = vpop.f32.mrb[0].mxu0
        %2148 = vmatprep.mubr.bf16.mxu0 0
        %2149 = vmatmul.mubr.bf16.gmra.mrb[0].mxu0 %v2080
        %v2150 = vpop.f32.mrb[0].mxu0
        %v2151 = vadd.f32 0.0, %v2150
        %v2152 = vpop.f32.mrb[0].mxu0
        %v2153 = vpop.f32.mrb[0].mxu0
        %v2154 = vadd.f32 0.0, %v2153
        %v2155 = vpop.f32.mrb[0].mxu0
        %2156 = vmatprep.mubr.bf16.mxu0 0
        %2157 = vmatmul.mubr.bf16.gmra.mrb[0].mxu0 %v2083
        %v2158 = vpop.f32.mrb[0].mxu0
        %v2159 = vadd.f32 0.0, %v2158
        %v2160 = vpop.f32.mrb[0].mxu0
        %v2161 = vpop.f32.mrb[0].mxu0
        %v2162 = vadd.f32 0.0, %v2161
        %v2163 = vpop.f32.mrb[0].mxu0
        %2164 = vmatprep.mubr.bf16.mxu0 0
        %2165 = vmatmul.mubr.bf16.gmra.mrb[0].mxu0 %v2086
        %v2166 = vpop.f32.mrb[0].mxu0
        %v2167 = vadd.f32 0.0, %v2166
        %v2168 = vpop.f32.mrb[0].mxu0
        %v2169 = vpop.f32.mrb[0].mxu0
        %v2170 = vadd.f32 0.0, %v2169
        %v2171 = vpop.f32.mrb[0].mxu0
        %2172 = vmatprep.mubr.bf16.mxu0 0
        %2173 = vmatmul.mubr.bf16.gmra.mrb[0].mxu0 %v2089
        %v2174 = vpop.f32.mrb[0].mxu0
        %v2175 = vadd.f32 0.0, %v2174
        %v2176 = vpop.f32.mrb[0].mxu0
        %v2177 = vpop.f32.mrb[0].mxu0
        %v2178 = vadd.f32 0.0, %v2177
        %v2179 = vpop.f32.mrb[0].mxu0
        %2180 = vmatprep.mubr.bf16.mxu0 0
        %2181 = vmatmul.mubr.bf16.gmra.mrb[0].mxu0 %v2092
        %v2182 = vpop.f32.mrb[0].mxu0
        %v2183 = vadd.f32 0.0, %v2182
        %v2184 = vpop.f32.mrb[0].mxu0
        %v2185 = vpop.f32.mrb[0].mxu0
        %v2186 = vadd.f32 0.0, %v2185
        %v2187 = vpop.f32.mrb[0].mxu0
        %2188 = vmatprep.mubr.bf16.mxu0 0
        %2189 = vmatmul.mubr.bf16.gmra.mrb[0].mxu0 %v2095
        %v2190 = vpop.f32.mrb[0].mxu0
        %v2191 = vadd.f32 0.0, %v2190
        %v2192 = vpop.f32.mrb[0].mxu0
        %v2193 = vpop.f32.mrb[0].mxu0
        %v2194 = vadd.f32 0.0, %v2193
        %v2195 = vpop.f32.mrb[0].mxu0
        %2196 = vdwg.mxu0
        %v2197 = vadd.f32 %v1998, %v2135
        %v2198 = vadd.f32 %v1999, %v2138
        %v2199 = vadd.f32 %v2000, %v2143
        %v2200 = vadd.f32 %v2001, %v2146
        %v2201 = vadd.f32 %v2002, %v2151
        %v2202 = vadd.f32 %v2003, %v2154
        %v2203 = vadd.f32 %v2004, %v2159
        %v2204 = vadd.f32 %v2005, %v2162
        %v2205 = vadd.f32 %v2006, %v2167
        %v2206 = vadd.f32 %v2007, %v2170
        %v2207 = vadd.f32 %v2008, %v2175
        %v2208 = vadd.f32 %v2009, %v2178
        %v2209 = vadd.f32 %v2010, %v2183
        %v2210 = vadd.f32 %v2011, %v2186
        %v2211 = vadd.f32 %v2012, %v2191
        %v2212 = vadd.f32 %v2013, %v2194
        %s2213 = scalar_lea.vmem %s793, 448 [#allocation2]
        %v2214 = vld [vmem:[%s2213] sm:$0xf]
        %v2215 = vld [vmem:[%s2213 + $0x4] sm:$0xf]
        %v2216 = vld [vmem:[%s2213 + $0x8] sm:$0xf]
        %v2217 = vld [vmem:[%s2213 + $0xc] sm:$0xf]
        %v2218 = vld [vmem:[%s2213 + $0x10] sm:$0xf]
        %v2219 = vld [vmem:[%s2213 + $0x14] sm:$0xf]
        %v2220 = vld [vmem:[%s2213 + $0x18] sm:$0xf]
        %v2221 = vld [vmem:[%s2213 + $0x1c] sm:$0xf]
        %v2222 = vld [vmem:[%s2213 + $0x20] sm:$0xf]
        %v2223 = vld [vmem:[%s2213 + $0x24] sm:$0xf]
        %v2224 = vld [vmem:[%s2213 + $0x28] sm:$0xf]
        %v2225 = vld [vmem:[%s2213 + $0x2c] sm:$0xf]
        %v2226 = vld [vmem:[%s2213 + $0x30] sm:$0xf]
        %v2227 = vld [vmem:[%s2213 + $0x34] sm:$0xf]
        %v2228 = vld [vmem:[%s2213 + $0x38] sm:$0xf]
        %v2229 = vld [vmem:[%s2213 + $0x3c] sm:$0xf]
        %v2246 = vunpack.c.l.b16 %v2214
        %v2247 = vunpack.c.l.b16 %v2215
        %v2248 = vunpack.c.l.b16 %v2216
        %v2249 = vunpack.c.l.b16 %v2217
        %v2250 = vunpack.c.l.b16 %v2218
        %v2251 = vunpack.c.l.b16 %v2219
        %v2252 = vunpack.c.l.b16 %v2220
        %v2253 = vunpack.c.l.b16 %v2221
        %v2254 = vunpack.c.l.b16 %v2222
        %v2255 = vunpack.c.l.b16 %v2223
        %v2256 = vunpack.c.l.b16 %v2224
        %v2257 = vunpack.c.l.b16 %v2225
        %v2258 = vunpack.c.l.b16 %v2226
        %v2259 = vunpack.c.l.b16 %v2227
        %v2260 = vunpack.c.l.b16 %v2228
        %v2261 = vunpack.c.l.b16 %v2229
        %v2262 = vpack.c.b16 %v2247, %v2246
        %v2263 = vpack.c.b16 %v2249, %v2248
        %v2264 = vpack.c.b16 %v2251, %v2250
        %v2265 = vpack.c.b16 %v2253, %v2252
        %v2266 = vpack.c.b16 %v2255, %v2254
        %v2267 = vpack.c.b16 %v2257, %v2256
        %v2268 = vpack.c.b16 %v2259, %v2258
        %v2269 = vpack.c.b16 %v2261, %v2260
        %2270 = vrot.lane.b32.xlu0 %v925, 107
        %v2271 = vpop.permute.xlu0 %2270
        %v2273 = vsel %vm928, %v2262, 0
        %v2276 = vsel %vm928, %v2263, 0
        %v2279 = vsel %vm928, %v2264, 0
        %v2282 = vsel %vm928, %v2265, 0
        %v2285 = vsel %vm928, %v2266, 0
        %v2288 = vsel %vm928, %v2267, 0
        %v2291 = vsel %vm928, %v2268, 0
        %v2294 = vsel %vm928, %v2269, 0
        %v2297 = vsel %vm953, %v2271, 0
        %2299 = vmatprep.subr.bf16.mxu0 0
        %2300 = vmatpush1.bf16.msra.mxu0 %v2297
        %2301 = vmatprep.subr.bf16.mxu0 0
        %2302 = vmatpush1.bf16.msra.mxu0 0
        %2303 = vmatprep.subr.bf16.mxu0 0
        %2304 = vmatpush1.bf16.msra.mxu0 0
        %2305 = vmatprep.subr.bf16.mxu0 0
        %2306 = vmatpush1.bf16.msra.mxu0 0
        %2307 = vmatprep.subr.bf16.mxu0 0
        %2308 = vmatpush1.bf16.msra.mxu0 0
        %2309 = vmatprep.subr.bf16.mxu0 0
        %2310 = vmatpush1.bf16.msra.mxu0 0
        %2311 = vmatprep.subr.bf16.mxu0 0
        %2312 = vmatpush1.bf16.msra.mxu0 0
        %2313 = vmatprep.subr.bf16.mxu0 0
        %2314 = vmatpush1.bf16.msra.mxu0 0
        %2315 = vmatprep.subr.bf16.mxu0 0
        %2316 = vmatpush1.bf16.msra.mxu0 0
        %2317 = vmatprep.subr.bf16.mxu0 0
        %2318 = vmatpush1.bf16.msra.mxu0 0
        %2319 = vmatprep.subr.bf16.mxu0 0
        %2320 = vmatpush1.bf16.msra.mxu0 0
        %2321 = vmatprep.subr.bf16.mxu0 0
        %2322 = vmatpush1.bf16.msra.mxu0 0
        %2323 = vmatprep.subr.bf16.mxu0 0
        %2324 = vmatpush1.bf16.msra.mxu0 0
        %2325 = vmatprep.subr.bf16.mxu0 0
        %2326 = vmatpush1.bf16.msra.mxu0 0
        %2327 = vmatprep.subr.bf16.mxu0 0
        %2328 = vmatpush1.bf16.msra.mxu0 0
        %2329 = vmatprep.subr.bf16.mxu0 0
        %2330 = vmatpush1.bf16.msra.mxu0 0
        %2331 = vmatprep.mubr.bf16.mxu0 0
        %2332 = vmatmul.mubr.bf16.gmra.mrb[0].mxu0 %v2273
        %v2333 = vpop.f32.mrb[0].mxu0
        %v2334 = vadd.f32 0.0, %v2333
        %v2335 = vpop.f32.mrb[0].mxu0
        %v2336 = vpop.f32.mrb[0].mxu0
        %v2337 = vadd.f32 0.0, %v2336
        %v2338 = vpop.f32.mrb[0].mxu0
        %2339 = vmatprep.mubr.bf16.mxu0 0
        %2340 = vmatmul.mubr.bf16.gmra.mrb[0].mxu0 %v2276
        %v2341 = vpop.f32.mrb[0].mxu0
        %v2342 = vadd.f32 0.0, %v2341
        %v2343 = vpop.f32.mrb[0].mxu0
        %v2344 = vpop.f32.mrb[0].mxu0
        %v2345 = vadd.f32 0.0, %v2344
        %v2346 = vpop.f32.mrb[0].mxu0
        %2347 = vmatprep.mubr.bf16.mxu0 0
        %2348 = vmatmul.mubr.bf16.gmra.mrb[0].mxu0 %v2279
        %v2349 = vpop.f32.mrb[0].mxu0
        %v2350 = vadd.f32 0.0, %v2349
        %v2351 = vpop.f32.mrb[0].mxu0
        %v2352 = vpop.f32.mrb[0].mxu0
        %v2353 = vadd.f32 0.0, %v2352
        %v2354 = vpop.f32.mrb[0].mxu0
        %2355 = vmatprep.mubr.bf16.mxu0 0
        %2356 = vmatmul.mubr.bf16.gmra.mrb[0].mxu0 %v2282
        %v2357 = vpop.f32.mrb[0].mxu0
        %v2358 = vadd.f32 0.0, %v2357
        %v2359 = vpop.f32.mrb[0].mxu0
        %v2360 = vpop.f32.mrb[0].mxu0
        %v2361 = vadd.f32 0.0, %v2360
        %v2362 = vpop.f32.mrb[0].mxu0
        %2363 = vmatprep.mubr.bf16.mxu0 0
        %2364 = vmatmul.mubr.bf16.gmra.mrb[0].mxu0 %v2285
        %v2365 = vpop.f32.mrb[0].mxu0
        %v2366 = vadd.f32 0.0, %v2365
        %v2367 = vpop.f32.mrb[0].mxu0
        %v2368 = vpop.f32.mrb[0].mxu0
        %v2369 = vadd.f32 0.0, %v2368
        %v2370 = vpop.f32.mrb[0].mxu0
        %2371 = vmatprep.mubr.bf16.mxu0 0
        %2372 = vmatmul.mubr.bf16.gmra.mrb[0].mxu0 %v2288
        %v2373 = vpop.f32.mrb[0].mxu0
        %v2374 = vadd.f32 0.0, %v2373
        %v2375 = vpop.f32.mrb[0].mxu0
        %v2376 = vpop.f32.mrb[0].mxu0
        %v2377 = vadd.f32 0.0, %v2376
        %v2378 = vpop.f32.mrb[0].mxu0
        %2379 = vmatprep.mubr.bf16.mxu0 0
        %2380 = vmatmul.mubr.bf16.gmra.mrb[0].mxu0 %v2291
        %v2381 = vpop.f32.mrb[0].mxu0
        %v2382 = vadd.f32 0.0, %v2381
        %v2383 = vpop.f32.mrb[0].mxu0
        %v2384 = vpop.f32.mrb[0].mxu0
        %v2385 = vadd.f32 0.0, %v2384
        %v2386 = vpop.f32.mrb[0].mxu0
        %2387 = vmatprep.mubr.bf16.mxu0 0
        %2388 = vmatmul.mubr.bf16.gmra.mrb[0].mxu0 %v2294
        %v2389 = vpop.f32.mrb[0].mxu0
        %v2390 = vadd.f32 0.0, %v2389
        %v2391 = vpop.f32.mrb[0].mxu0
        %v2392 = vpop.f32.mrb[0].mxu0
        %v2393 = vadd.f32 0.0, %v2392
        %v2394 = vpop.f32.mrb[0].mxu0
        %2395 = vdwg.mxu0
        %v2396 = vadd.f32 %v2197, %v2334
        %v2397 = vadd.f32 %v2198, %v2337
        %v2398 = vadd.f32 %v2199, %v2342
        %v2399 = vadd.f32 %v2200, %v2345
        %v2400 = vadd.f32 %v2201, %v2350
        %v2401 = vadd.f32 %v2202, %v2353
        %v2402 = vadd.f32 %v2203, %v2358
        %v2403 = vadd.f32 %v2204, %v2361
        %v2404 = vadd.f32 %v2205, %v2366
        %v2405 = vadd.f32 %v2206, %v2369
        %v2406 = vadd.f32 %v2207, %v2374
        %v2407 = vadd.f32 %v2208, %v2377
        %v2408 = vadd.f32 %v2209, %v2382
        %v2409 = vadd.f32 %v2210, %v2385
        %v2410 = vadd.f32 %v2211, %v2390
        %v2411 = vadd.f32 %v2212, %v2393
        %s2412 = scalar_lea.vmem %s793, 512 [#allocation2]
        %v2413 = vld [vmem:[%s2412] sm:$0xf]
        %v2414 = vld [vmem:[%s2412 + $0x4] sm:$0xf]
        %v2415 = vld [vmem:[%s2412 + $0x8] sm:$0xf]
        %v2416 = vld [vmem:[%s2412 + $0xc] sm:$0xf]
        %v2417 = vld [vmem:[%s2412 + $0x10] sm:$0xf]
        %v2418 = vld [vmem:[%s2412 + $0x14] sm:$0xf]
        %v2419 = vld [vmem:[%s2412 + $0x18] sm:$0xf]
        %v2420 = vld [vmem:[%s2412 + $0x1c] sm:$0xf]
        %v2421 = vld [vmem:[%s2412 + $0x20] sm:$0xf]
        %v2422 = vld [vmem:[%s2412 + $0x24] sm:$0xf]
        %v2423 = vld [vmem:[%s2412 + $0x28] sm:$0xf]
        %v2424 = vld [vmem:[%s2412 + $0x2c] sm:$0xf]
        %v2425 = vld [vmem:[%s2412 + $0x30] sm:$0xf]
        %v2426 = vld [vmem:[%s2412 + $0x34] sm:$0xf]
        %v2427 = vld [vmem:[%s2412 + $0x38] sm:$0xf]
        %v2428 = vld [vmem:[%s2412 + $0x3c] sm:$0xf]
        %v2445 = vunpack.c.l.b16 %v2413
        %v2446 = vunpack.c.l.b16 %v2414
        %v2447 = vunpack.c.l.b16 %v2415
        %v2448 = vunpack.c.l.b16 %v2416
        %v2449 = vunpack.c.l.b16 %v2417
        %v2450 = vunpack.c.l.b16 %v2418
        %v2451 = vunpack.c.l.b16 %v2419
        %v2452 = vunpack.c.l.b16 %v2420
        %v2453 = vunpack.c.l.b16 %v2421
        %v2454 = vunpack.c.l.b16 %v2422
        %v2455 = vunpack.c.l.b16 %v2423
        %v2456 = vunpack.c.l.b16 %v2424
        %v2457 = vunpack.c.l.b16 %v2425
        %v2458 = vunpack.c.l.b16 %v2426
        %v2459 = vunpack.c.l.b16 %v2427
        %v2460 = vunpack.c.l.b16 %v2428
        %v2461 = vpack.c.b16 %v2446, %v2445
        %v2462 = vpack.c.b16 %v2448, %v2447
        %v2463 = vpack.c.b16 %v2450, %v2449
        %v2464 = vpack.c.b16 %v2452, %v2451
        %v2465 = vpack.c.b16 %v2454, %v2453
        %v2466 = vpack.c.b16 %v2456, %v2455
        %v2467 = vpack.c.b16 %v2458, %v2457
        %v2468 = vpack.c.b16 %v2460, %v2459
        %2469 = vrot.lane.b32.xlu0 %v925, 106
        %v2470 = vpop.permute.xlu0 %2469
        %v2472 = vsel %vm928, %v2461, 0
        %v2475 = vsel %vm928, %v2462, 0
        %v2478 = vsel %vm928, %v2463, 0
        %v2481 = vsel %vm928, %v2464, 0
        %v2484 = vsel %vm928, %v2465, 0
        %v2487 = vsel %vm928, %v2466, 0
        %v2490 = vsel %vm928, %v2467, 0
        %v2493 = vsel %vm928, %v2468, 0
        %v2496 = vsel %vm953, %v2470, 0
        %2498 = vmatprep.subr.bf16.mxu0 0
        %2499 = vmatpush1.bf16.msra.mxu0 %v2496
        %2500 = vmatprep.subr.bf16.mxu0 0
        %2501 = vmatpush1.bf16.msra.mxu0 0
        %2502 = vmatprep.subr.bf16.mxu0 0
        %2503 = vmatpush1.bf16.msra.mxu0 0
        %2504 = vmatprep.subr.bf16.mxu0 0
        %2505 = vmatpush1.bf16.msra.mxu0 0
        %2506 = vmatprep.subr.bf16.mxu0 0
        %2507 = vmatpush1.bf16.msra.mxu0 0
        %2508 = vmatprep.subr.bf16.mxu0 0
        %2509 = vmatpush1.bf16.msra.mxu0 0
        %2510 = vmatprep.subr.bf16.mxu0 0
        %2511 = vmatpush1.bf16.msra.mxu0 0
        %2512 = vmatprep.subr.bf16.mxu0 0
        %2513 = vmatpush1.bf16.msra.mxu0 0
        %2514 = vmatprep.subr.bf16.mxu0 0
        %2515 = vmatpush1.bf16.msra.mxu0 0
        %2516 = vmatprep.subr.bf16.mxu0 0
        %2517 = vmatpush1.bf16.msra.mxu0 0
        %2518 = vmatprep.subr.bf16.mxu0 0
        %2519 = vmatpush1.bf16.msra.mxu0 0
        %2520 = vmatprep.subr.bf16.mxu0 0
        %2521 = vmatpush1.bf16.msra.mxu0 0
        %2522 = vmatprep.subr.bf16.mxu0 0
        %2523 = vmatpush1.bf16.msra.mxu0 0
        %2524 = vmatprep.subr.bf16.mxu0 0
        %2525 = vmatpush1.bf16.msra.mxu0 0
        %2526 = vmatprep.subr.bf16.mxu0 0
        %2527 = vmatpush1.bf16.msra.mxu0 0
        %2528 = vmatprep.subr.bf16.mxu0 0
        %2529 = vmatpush1.bf16.msra.mxu0 0
        %2530 = vmatprep.mubr.bf16.mxu0 0
        %2531 = vmatmul.mubr.bf16.gmra.mrb[0].mxu0 %v2472
        %v2532 = vpop.f32.mrb[0].mxu0
        %v2533 = vadd.f32 0.0, %v2532
        %v2534 = vpop.f32.mrb[0].mxu0
        %v2535 = vpop.f32.mrb[0].mxu0
        %v2536 = vadd.f32 0.0, %v2535
        %v2537 = vpop.f32.mrb[0].mxu0
        %2538 = vmatprep.mubr.bf16.mxu0 0
        %2539 = vmatmul.mubr.bf16.gmra.mrb[0].mxu0 %v2475
        %v2540 = vpop.f32.mrb[0].mxu0
        %v2541 = vadd.f32 0.0, %v2540
        %v2542 = vpop.f32.mrb[0].mxu0
        %v2543 = vpop.f32.mrb[0].mxu0
        %v2544 = vadd.f32 0.0, %v2543
        %v2545 = vpop.f32.mrb[0].mxu0
        %2546 = vmatprep.mubr.bf16.mxu0 0
        %2547 = vmatmul.mubr.bf16.gmra.mrb[0].mxu0 %v2478
        %v2548 = vpop.f32.mrb[0].mxu0
        %v2549 = vadd.f32 0.0, %v2548
        %v2550 = vpop.f32.mrb[0].mxu0
        %v2551 = vpop.f32.mrb[0].mxu0
        %v2552 = vadd.f32 0.0, %v2551
        %v2553 = vpop.f32.mrb[0].mxu0
        %2554 = vmatprep.mubr.bf16.mxu0 0
        %2555 = vmatmul.mubr.bf16.gmra.mrb[0].mxu0 %v2481
        %v2556 = vpop.f32.mrb[0].mxu0
        %v2557 = vadd.f32 0.0, %v2556
        %v2558 = vpop.f32.mrb[0].mxu0
        %v2559 = vpop.f32.mrb[0].mxu0
        %v2560 = vadd.f32 0.0, %v2559
        %v2561 = vpop.f32.mrb[0].mxu0
        %2562 = vmatprep.mubr.bf16.mxu0 0
        %2563 = vmatmul.mubr.bf16.gmra.mrb[0].mxu0 %v2484
        %v2564 = vpop.f32.mrb[0].mxu0
        %v2565 = vadd.f32 0.0, %v2564
        %v2566 = vpop.f32.mrb[0].mxu0
        %v2567 = vpop.f32.mrb[0].mxu0
        %v2568 = vadd.f32 0.0, %v2567
        %v2569 = vpop.f32.mrb[0].mxu0
        %2570 = vmatprep.mubr.bf16.mxu0 0
        %2571 = vmatmul.mubr.bf16.gmra.mrb[0].mxu0 %v2487
        %v2572 = vpop.f32.mrb[0].mxu0
        %v2573 = vadd.f32 0.0, %v2572
        %v2574 = vpop.f32.mrb[0].mxu0
        %v2575 = vpop.f32.mrb[0].mxu0
        %v2576 = vadd.f32 0.0, %v2575
        %v2577 = vpop.f32.mrb[0].mxu0
        %2578 = vmatprep.mubr.bf16.mxu0 0
        %2579 = vmatmul.mubr.bf16.gmra.mrb[0].mxu0 %v2490
        %v2580 = vpop.f32.mrb[0].mxu0
        %v2581 = vadd.f32 0.0, %v2580
        %v2582 = vpop.f32.mrb[0].mxu0
        %v2583 = vpop.f32.mrb[0].mxu0
        %v2584 = vadd.f32 0.0, %v2583
        %v2585 = vpop.f32.mrb[0].mxu0
        %2586 = vmatprep.mubr.bf16.mxu0 0
        %2587 = vmatmul.mubr.bf16.gmra.mrb[0].mxu0 %v2493
        %v2588 = vpop.f32.mrb[0].mxu0
        %v2589 = vadd.f32 0.0, %v2588
        %v2590 = vpop.f32.mrb[0].mxu0
        %v2591 = vpop.f32.mrb[0].mxu0
        %v2592 = vadd.f32 0.0, %v2591
        %v2593 = vpop.f32.mrb[0].mxu0
        %2594 = vdwg.mxu0
        %v2595 = vadd.f32 %v2396, %v2533
        %v2596 = vadd.f32 %v2397, %v2536
        %v2597 = vadd.f32 %v2398, %v2541
        %v2598 = vadd.f32 %v2399, %v2544
        %v2599 = vadd.f32 %v2400, %v2549
        %v2600 = vadd.f32 %v2401, %v2552
        %v2601 = vadd.f32 %v2402, %v2557
        %v2602 = vadd.f32 %v2403, %v2560
        %v2603 = vadd.f32 %v2404, %v2565
        %v2604 = vadd.f32 %v2405, %v2568
        %v2605 = vadd.f32 %v2406, %v2573
        %v2606 = vadd.f32 %v2407, %v2576
        %v2607 = vadd.f32 %v2408, %v2581
        %v2608 = vadd.f32 %v2409, %v2584
        %v2609 = vadd.f32 %v2410, %v2589
        %v2610 = vadd.f32 %v2411, %v2592
        %v2611 = vlaneseq
        %v2612 = vand.u32 %v2611, 127
        %vm2613 = vcmp.lt.s32.totalorder %v2612, 0
        %v2614 = vsub.s32 0, %v2612
        %v2615 = vsel %vm2613, %v2614, %v2612
        %v2616 = vmul.u32.u64.compose %v2615, 3435973837
        %v2617 = vextract.low.u32 %v2616
        %v2618 = vextract.high.u32 %v2616
        %v2619 = vshrl.u32 %v2618, 3
        %v2620 = vmul.u32 %v2619, 10
        %v2621 = vsub.s32 %v2615, %v2620
        %v2622 = vsub.s32 0, %v2621
        %v2623 = vsel %vm2613, %v2622, %v2621
        %vm2624 = vcmp.ne.s32.totalorder %v2623, 0
        %vm2625 = vcmp.lt.s32.totalorder %v2623, 0
        %vm2626 = vmand %vm2625, %vm2624
        %v2627 = vadd.s32 %v2623, 10
        %v2628 = vsel %vm2626, %v2627, %v2623
        %vm2629 = vcmp.lt.s32.totalorder %v2628, 8
        %v2630 = vsel %vm2629, 1, 0
        %vm2631 = vcmp.eq.s32.totalorder %v2630, 1
        %v2632 = vsel %vm2631, %v2595, 0.0
        %v2633 = vsel %vm2631, %v2596, 0.0
        %v2634 = vsel %vm2631, %v2597, 0.0
        %v2635 = vsel %vm2631, %v2598, 0.0
        %v2636 = vsel %vm2631, %v2599, 0.0
        %v2637 = vsel %vm2631, %v2600, 0.0
        %v2638 = vsel %vm2631, %v2601, 0.0
        %v2639 = vsel %vm2631, %v2602, 0.0
        %v2640 = vsel %vm2631, %v2603, 0.0
        %v2641 = vsel %vm2631, %v2604, 0.0
        %v2642 = vsel %vm2631, %v2605, 0.0
        %v2643 = vsel %vm2631, %v2606, 0.0
        %v2644 = vsel %vm2631, %v2607, 0.0
        %v2645 = vsel %vm2631, %v2608, 0.0
        %v2646 = vsel %vm2631, %v2609, 0.0
        %v2647 = vsel %vm2631, %v2610, 0.0
        %vm2648 = vcmask 654336
        %v2649 = vsel %vm2648, %v2632, 0.0
        %2650 = vadd.xlane.f32.xlu0 %v2649
        %v2651 = vpop.xlane.xlu0 %2650
        %v2652 = vsel %vm2648, %v2633, 0.0
        %2653 = vadd.xlane.f32.xlu0 %v2652
        %v2654 = vpop.xlane.xlu0 %2653
        %v2655 = vsel %vm2648, %v2634, 0.0
        %2656 = vadd.xlane.f32.xlu0 %v2655
        %v2657 = vpop.xlane.xlu0 %2656
        %v2658 = vsel %vm2648, %v2635, 0.0
        %2659 = vadd.xlane.f32.xlu0 %v2658
        %v2660 = vpop.xlane.xlu0 %2659
        %v2661 = vsel %vm2648, %v2636, 0.0
        %2662 = vadd.xlane.f32.xlu0 %v2661
        %v2663 = vpop.xlane.xlu0 %2662
        %v2664 = vsel %vm2648, %v2637, 0.0
        %2665 = vadd.xlane.f32.xlu0 %v2664
        %v2666 = vpop.xlane.xlu0 %2665
        %v2667 = vsel %vm2648, %v2638, 0.0
        %2668 = vadd.xlane.f32.xlu0 %v2667
        %v2669 = vpop.xlane.xlu0 %2668
        %v2670 = vsel %vm2648, %v2639, 0.0
        %2671 = vadd.xlane.f32.xlu0 %v2670
        %v2672 = vpop.xlane.xlu0 %2671
        %v2673 = vsel %vm2648, %v2640, 0.0
        %2674 = vadd.xlane.f32.xlu0 %v2673
        %v2675 = vpop.xlane.xlu0 %2674
        %v2676 = vsel %vm2648, %v2641, 0.0
        %2677 = vadd.xlane.f32.xlu0 %v2676
        %v2678 = vpop.xlane.xlu0 %2677
        %v2679 = vsel %vm2648, %v2642, 0.0
        %2680 = vadd.xlane.f32.xlu0 %v2679
        %v2681 = vpop.xlane.xlu0 %2680
        %v2682 = vsel %vm2648, %v2643, 0.0
        %2683 = vadd.xlane.f32.xlu0 %v2682
        %v2684 = vpop.xlane.xlu0 %2683
        %v2685 = vsel %vm2648, %v2644, 0.0
        %2686 = vadd.xlane.f32.xlu0 %v2685
        %v2687 = vpop.xlane.xlu0 %2686
        %v2688 = vsel %vm2648, %v2645, 0.0
        %2689 = vadd.xlane.f32.xlu0 %v2688
        %v2690 = vpop.xlane.xlu0 %2689
        %v2691 = vsel %vm2648, %v2646, 0.0
        %2692 = vadd.xlane.f32.xlu0 %v2691
        %v2693 = vpop.xlane.xlu0 %2692
        %v2694 = vsel %vm2648, %v2647, 0.0
        %2695 = vadd.xlane.f32.xlu0 %v2694
        %v2696 = vpop.xlane.xlu0 %2695
        %v2697 = vadd.f32 %v2651, 0.0
        %v2698 = vadd.f32 %v2654, 0.0
        %v2699 = vadd.f32 %v2657, 0.0
        %v2700 = vadd.f32 %v2660, 0.0
        %v2701 = vadd.f32 %v2663, 0.0
        %v2702 = vadd.f32 %v2666, 0.0
        %v2703 = vadd.f32 %v2669, 0.0
        %v2704 = vadd.f32 %v2672, 0.0
        %v2705 = vadd.f32 %v2675, 0.0
        %v2706 = vadd.f32 %v2678, 0.0
        %v2707 = vadd.f32 %v2681, 0.0
        %v2708 = vadd.f32 %v2684, 0.0
        %v2709 = vadd.f32 %v2687, 0.0
        %v2710 = vadd.f32 %v2690, 0.0
        %v2711 = vadd.f32 %v2693, 0.0
        %v2712 = vadd.f32 %v2696, 0.0
        %v2713 = vmul.f32 %v2697, 0.015625
        %v2714 = vmul.f32 %v2698, 0.015625
        %v2715 = vmul.f32 %v2699, 0.015625
        %v2716 = vmul.f32 %v2700, 0.015625
        %v2717 = vmul.f32 %v2701, 0.015625
        %v2718 = vmul.f32 %v2702, 0.015625
        %v2719 = vmul.f32 %v2703, 0.015625
        %v2720 = vmul.f32 %v2704, 0.015625
        %v2721 = vmul.f32 %v2705, 0.015625
        %v2722 = vmul.f32 %v2706, 0.015625
        %v2723 = vmul.f32 %v2707, 0.015625
        %v2724 = vmul.f32 %v2708, 0.015625
        %v2725 = vmul.f32 %v2709, 0.015625
        %v2726 = vmul.f32 %v2710, 0.015625
        %v2727 = vmul.f32 %v2711, 0.015625
        %v2728 = vmul.f32 %v2712, 0.015625
        %v2729 = vsub.f32 %v2595, %v2713
        %v2730 = vsub.f32 %v2596, %v2714
        %v2731 = vsub.f32 %v2597, %v2715
        %v2732 = vsub.f32 %v2598, %v2716
        %v2733 = vsub.f32 %v2599, %v2717
        %v2734 = vsub.f32 %v2600, %v2718
        %v2735 = vsub.f32 %v2601, %v2719
        %v2736 = vsub.f32 %v2602, %v2720
        %v2737 = vsub.f32 %v2603, %v2721
        %v2738 = vsub.f32 %v2604, %v2722
        %v2739 = vsub.f32 %v2605, %v2723
        %v2740 = vsub.f32 %v2606, %v2724
        %v2741 = vsub.f32 %v2607, %v2725
        %v2742 = vsub.f32 %v2608, %v2726
        %v2743 = vsub.f32 %v2609, %v2727
        %v2744 = vsub.f32 %v2610, %v2728
        %v2745 = vmul.f32 %v2729, %v2729
        %v2746 = vmul.f32 %v2730, %v2730
        %v2747 = vmul.f32 %v2731, %v2731
        %v2748 = vmul.f32 %v2732, %v2732
        %v2749 = vmul.f32 %v2733, %v2733
        %v2750 = vmul.f32 %v2734, %v2734
        %v2751 = vmul.f32 %v2735, %v2735
        %v2752 = vmul.f32 %v2736, %v2736
        %v2753 = vmul.f32 %v2737, %v2737
        %v2754 = vmul.f32 %v2738, %v2738
        %v2755 = vmul.f32 %v2739, %v2739
        %v2756 = vmul.f32 %v2740, %v2740
        %v2757 = vmul.f32 %v2741, %v2741
        %v2758 = vmul.f32 %v2742, %v2742
        %v2759 = vmul.f32 %v2743, %v2743
        %v2760 = vmul.f32 %v2744, %v2744
        %v2761 = vsel %vm2631, %v2745, 0.0
        %v2762 = vsel %vm2631, %v2746, 0.0
        %v2763 = vsel %vm2631, %v2747, 0.0
        %v2764 = vsel %vm2631, %v2748, 0.0
        %v2765 = vsel %vm2631, %v2749, 0.0
        %v2766 = vsel %vm2631, %v2750, 0.0
        %v2767 = vsel %vm2631, %v2751, 0.0
        %v2768 = vsel %vm2631, %v2752, 0.0
        %v2769 = vsel %vm2631, %v2753, 0.0
        %v2770 = vsel %vm2631, %v2754, 0.0
        %v2771 = vsel %vm2631, %v2755, 0.0
        %v2772 = vsel %vm2631, %v2756, 0.0
        %v2773 = vsel %vm2631, %v2757, 0.0
        %v2774 = vsel %vm2631, %v2758, 0.0
        %v2775 = vsel %vm2631, %v2759, 0.0
        %v2776 = vsel %vm2631, %v2760, 0.0
        %v2777 = vsel %vm2648, %v2761, 0.0
        %2778 = vadd.xlane.f32.xlu0 %v2777
        %v2779 = vpop.xlane.xlu0 %2778
        %v2780 = vsel %vm2648, %v2762, 0.0
        %2781 = vadd.xlane.f32.xlu0 %v2780
        %v2782 = vpop.xlane.xlu0 %2781
        %v2783 = vsel %vm2648, %v2763, 0.0
        %2784 = vadd.xlane.f32.xlu0 %v2783
        %v2785 = vpop.xlane.xlu0 %2784
        %v2786 = vsel %vm2648, %v2764, 0.0
        %2787 = vadd.xlane.f32.xlu0 %v2786
        %v2788 = vpop.xlane.xlu0 %2787
        %v2789 = vsel %vm2648, %v2765, 0.0
        %2790 = vadd.xlane.f32.xlu0 %v2789
        %v2791 = vpop.xlane.xlu0 %2790
        %v2792 = vsel %vm2648, %v2766, 0.0
        %2793 = vadd.xlane.f32.xlu0 %v2792
        %v2794 = vpop.xlane.xlu0 %2793
        %v2795 = vsel %vm2648, %v2767, 0.0
        %2796 = vadd.xlane.f32.xlu0 %v2795
        %v2797 = vpop.xlane.xlu0 %2796
        %v2798 = vsel %vm2648, %v2768, 0.0
        %2799 = vadd.xlane.f32.xlu0 %v2798
        %v2800 = vpop.xlane.xlu0 %2799
        %v2801 = vsel %vm2648, %v2769, 0.0
        %2802 = vadd.xlane.f32.xlu0 %v2801
        %v2803 = vpop.xlane.xlu0 %2802
        %v2804 = vsel %vm2648, %v2770, 0.0
        %2805 = vadd.xlane.f32.xlu0 %v2804
        %v2806 = vpop.xlane.xlu0 %2805
        %v2807 = vsel %vm2648, %v2771, 0.0
        %2808 = vadd.xlane.f32.xlu0 %v2807
        %v2809 = vpop.xlane.xlu0 %2808
        %v2810 = vsel %vm2648, %v2772, 0.0
        %2811 = vadd.xlane.f32.xlu0 %v2810
        %v2812 = vpop.xlane.xlu0 %2811
        %v2813 = vsel %vm2648, %v2773, 0.0
        %2814 = vadd.xlane.f32.xlu0 %v2813
        %v2815 = vpop.xlane.xlu0 %2814
        %v2816 = vsel %vm2648, %v2774, 0.0
        %2817 = vadd.xlane.f32.xlu0 %v2816
        %v2818 = vpop.xlane.xlu0 %2817
        %v2819 = vsel %vm2648, %v2775, 0.0
        %2820 = vadd.xlane.f32.xlu0 %v2819
        %v2821 = vpop.xlane.xlu0 %2820
        %v2822 = vsel %vm2648, %v2776, 0.0
        %2823 = vadd.xlane.f32.xlu0 %v2822
        %v2824 = vpop.xlane.xlu0 %2823
        %v2825 = vadd.f32 %v2779, 0.0
        %v2826 = vadd.f32 %v2782, 0.0
        %v2827 = vadd.f32 %v2785, 0.0
        %v2828 = vadd.f32 %v2788, 0.0
        %v2829 = vadd.f32 %v2791, 0.0
        %v2830 = vadd.f32 %v2794, 0.0
        %v2831 = vadd.f32 %v2797, 0.0
        %v2832 = vadd.f32 %v2800, 0.0
        %v2833 = vadd.f32 %v2803, 0.0
        %v2834 = vadd.f32 %v2806, 0.0
        %v2835 = vadd.f32 %v2809, 0.0
        %v2836 = vadd.f32 %v2812, 0.0
        %v2837 = vadd.f32 %v2815, 0.0
        %v2838 = vadd.f32 %v2818, 0.0
        %v2839 = vadd.f32 %v2821, 0.0
        %v2840 = vadd.f32 %v2824, 0.0
        %v2841 = vmul.f32 %v2825, 0.015625
        %v2842 = vmul.f32 %v2826, 0.015625
        %v2843 = vmul.f32 %v2827, 0.015625
        %v2844 = vmul.f32 %v2828, 0.015625
        %v2845 = vmul.f32 %v2829, 0.015625
        %v2846 = vmul.f32 %v2830, 0.015625
        %v2847 = vmul.f32 %v2831, 0.015625
        %v2848 = vmul.f32 %v2832, 0.015625
        %v2849 = vmul.f32 %v2833, 0.015625
        %v2850 = vmul.f32 %v2834, 0.015625
        %v2851 = vmul.f32 %v2835, 0.015625
        %v2852 = vmul.f32 %v2836, 0.015625
        %v2853 = vmul.f32 %v2837, 0.015625
        %v2854 = vmul.f32 %v2838, 0.015625
        %v2855 = vmul.f32 %v2839, 0.015625
        %v2856 = vmul.f32 %v2840, 0.015625
        %v2857 = vadd.f32 %v2841, 1e-05
        %v2858 = vadd.f32 %v2842, 1e-05
        %v2859 = vadd.f32 %v2843, 1e-05
        %v2860 = vadd.f32 %v2844, 1e-05
        %v2861 = vadd.f32 %v2845, 1e-05
        %v2862 = vadd.f32 %v2846, 1e-05
        %v2863 = vadd.f32 %v2847, 1e-05
        %v2864 = vadd.f32 %v2848, 1e-05
        %v2865 = vadd.f32 %v2849, 1e-05
        %v2866 = vadd.f32 %v2850, 1e-05
        %v2867 = vadd.f32 %v2851, 1e-05
        %v2868 = vadd.f32 %v2852, 1e-05
        %v2869 = vadd.f32 %v2853, 1e-05
        %v2870 = vadd.f32 %v2854, 1e-05
        %v2871 = vadd.f32 %v2855, 1e-05
        %v2872 = vadd.f32 %v2856, 1e-05
        %v2873 = vrsqrt.pop %v2857
        %v2874 = vrsqrt.pop %v2858
        %v2875 = vrsqrt.pop %v2859
        %v2876 = vrsqrt.pop %v2860
        %v2877 = vrsqrt.pop %v2861
        %v2878 = vrsqrt.pop %v2862
        %v2879 = vrsqrt.pop %v2863
        %v2880 = vrsqrt.pop %v2864
        %v2881 = vrsqrt.pop %v2865
        %v2882 = vrsqrt.pop %v2866
        %v2883 = vrsqrt.pop %v2867
        %v2884 = vrsqrt.pop %v2868
        %v2885 = vrsqrt.pop %v2869
        %v2886 = vrsqrt.pop %v2870
        %v2887 = vrsqrt.pop %v2871
        %v2888 = vrsqrt.pop %v2872
        %v2889 = vmul.f32 %v2729, %v2873
        %v2890 = vmul.f32 %v2730, %v2874
        %v2891 = vmul.f32 %v2731, %v2875
        %v2892 = vmul.f32 %v2732, %v2876
        %v2893 = vmul.f32 %v2733, %v2877
        %v2894 = vmul.f32 %v2734, %v2878
        %v2895 = vmul.f32 %v2735, %v2879
        %v2896 = vmul.f32 %v2736, %v2880
        %v2897 = vmul.f32 %v2737, %v2881
        %v2898 = vmul.f32 %v2738, %v2882
        %v2899 = vmul.f32 %v2739, %v2883
        %v2900 = vmul.f32 %v2740, %v2884
        %v2901 = vmul.f32 %v2741, %v2885
        %v2902 = vmul.f32 %v2742, %v2886
        %v2903 = vmul.f32 %v2743, %v2887
        %v2904 = vmul.f32 %v2744, %v2888
        %v2905 = vmax.f32 %v2889, 0.0
        %v2906 = vmax.f32 %v2890, 0.0
        %v2907 = vmax.f32 %v2891, 0.0
        %v2908 = vmax.f32 %v2892, 0.0
        %v2909 = vmax.f32 %v2893, 0.0
        %v2910 = vmax.f32 %v2894, 0.0
        %v2911 = vmax.f32 %v2895, 0.0
        %v2912 = vmax.f32 %v2896, 0.0
        %v2913 = vmax.f32 %v2897, 0.0
        %v2914 = vmax.f32 %v2898, 0.0
        %v2915 = vmax.f32 %v2899, 0.0
        %v2916 = vmax.f32 %v2900, 0.0
        %v2917 = vmax.f32 %v2901, 0.0
        %v2918 = vmax.f32 %v2902, 0.0
        %v2919 = vmax.f32 %v2903, 0.0
        %v2920 = vmax.f32 %v2904, 0.0
        %2921 = vst.msk [vmem:[%s846] sm:$0xff] %vm2648, %v2905
        %2922 = vst.msk [vmem:[%s846 + $0x8] sm:$0xff] %vm2648, %v2906
        %2923 = vst.msk [vmem:[%s846 + $0x10] sm:$0xff] %vm2648, %v2907
        %2924 = vst.msk [vmem:[%s846 + $0x18] sm:$0xff] %vm2648, %v2908
        %2925 = vst.msk [vmem:[%s846 + $0x20] sm:$0xff] %vm2648, %v2909
        %2926 = vst.msk [vmem:[%s846 + $0x28] sm:$0xff] %vm2648, %v2910
        %2927 = vst.msk [vmem:[%s846 + $0x30] sm:$0xff] %vm2648, %v2911
        %2928 = vst.msk [vmem:[%s846 + $0x38] sm:$0xff] %vm2648, %v2912
        %2929 = vst.msk [vmem:[%s846 + $0x40] sm:$0xff] %vm2648, %v2913
        %2930 = vst.msk [vmem:[%s846 + $0x48] sm:$0xff] %vm2648, %v2914
        %2931 = vst.msk [vmem:[%s846 + $0x50] sm:$0xff] %vm2648, %v2915
        %2932 = vst.msk [vmem:[%s846 + $0x58] sm:$0xff] %vm2648, %v2916
        %2933 = vst.msk [vmem:[%s846 + $0x60] sm:$0xff] %vm2648, %v2917
        %2934 = vst.msk [vmem:[%s846 + $0x68] sm:$0xff] %vm2648, %v2918
        %2935 = vst.msk [vmem:[%s846 + $0x70] sm:$0xff] %vm2648, %v2919
        %2936 = vst.msk [vmem:[%s846 + $0x78] sm:$0xff] %vm2648, %v2920
        %s2937 = smul.u32 16, %s19
        %p2938 = scmp.lt.s32.totalorder %s18, 0
        %s2939 = scalar_select %p2938, %s18, 0
        %p2940 = scmp.lt.s32.totalorder %s2937, 31
        %s2941 = scalar_select %p2940, %s2937, 31
        %s2942 = smul.addr %s2939, 32
        %s2943 = sadd.s32 %s2941, %s2942
        %s2944 = smul.addr %s2943, 8
        %s2945 = scalar_lea.vmem %s3, %s2944
        // Predicated region
        $region74: #{tpu_custom_call.1} parent=68 // pred_check
          %p2946 = pneg %p124
        $region75: #{tpu_custom_call.1} parent=68 // pred_check_branch
          %2948 = sbr.rel (%p2946) target = $region77
        $region76: #{tpu_custom_call.1} parent=68 // pred_region
          %s2949 = smul.u32 16, %s19
        $region77: #{tpu_custom_call.1} parent=68 // pred_fallthru
          _
      $region69: #{tpu_custom_call.1} parent=5 // pred_fallthru
        _
      %p2950 = scmp.le.s32.totalorder 2, %s9
      // Predicated region
      $region78: #{tpu_custom_call.1} parent=5 // pred_check
        %p2951 = pneg %p2950
      $region79: #{tpu_custom_call.1} parent=5 // pred_check_branch
        %2953 = sbr.rel (%p2951) target = $region81
      $region80: #{tpu_custom_call.1} parent=5 // pred_region
        %s2954 = ssub.s32 %s9, 2
        // Predicated region
        $region82: #{tpu_custom_call.1} parent=80 // pred_check
          %p2955 = pneg %p130
        $region83: #{tpu_custom_call.1} parent=80 // pred_check_branch
          %2957 = sbr.rel (%p2955) target = $region85
        $region84: #{tpu_custom_call.1} parent=80 // pred_region
          %s2958 = smul.u32 16, %s21
          %p2959 = scmp.lt.s32.totalorder %s20, 0
          %s2960 = scalar_select %p2959, %s20, 0
          %p2961 = scmp.lt.s32.totalorder %s2958, 31
          %s2962 = scalar_select %p2961, %s2958, 31
          %s2963 = smul.addr %s2960, 32
          %s2964 = sadd.s32 %s2962, %s2963
          %s2965 = smul.addr %s2964, 8
          %s2966 = scalar_lea.vmem %s3, %s2965
        $region85: #{tpu_custom_call.1} parent=80 // pred_fallthru
          _
      $region81: #{tpu_custom_call.1} parent=5 // pred_fallthru
        _
    $region6: #{tpu_custom_call.1} parent=1 // loop_footer
      %s13 = sadd.s32 1, %s9
    $region7: #{tpu_custom_call.1} parent=1 // loop_footer_branch
      %8 = sbr.rel target = $region3
    $region8: #{tpu_custom_call.1} parent=1 // loop_exit
      _

</llo_original>
